<compile_context>
chip_gen: v7x
topology: tpu7x:2x2x1
jax: 0.10.0
libtpu: 0.0.40
codegen_flags: <defaults>
</compile_context>

<pallas_src>
import functools

import jax
import jax.numpy as jnp
from jax import lax
from jax.experimental import pallas as pl
from jax.experimental.pallas import tpu as pltpu


# Left zero margin (in the W/sublane dim) of the padded hidden-state scratch.
# 8 keeps the per-step interior store sublane-tile aligned; the 3x3 conv reads
# columns [W_OFF-1, W_OFF+W], which keeps one zero border column on each side.
W_OFF = 8


# ----------------------------------------------------------------------------
# Fused recurrent kernel: grid = (batch_blocks, T), h/c resident in VMEM.
# ----------------------------------------------------------------------------
def _convlstm_step_kernel(xcol_ref, wx_ref, bias_ref, wh_ref, h0_ref, c0_ref,
                          h_out_ref, h_pad_ref, c_ref,
                          *, Bblk, H, W, Cin, Cout, use_bf16):
    """One ConvLSTM step for one batch block per grid iteration (bb, t).

    xcol_ref : (1, Bblk, H*W, 9*Cin)   im2col(x_t) for this batch block
    wx_ref   : (9*Cin, 4*Cout)         input conv weights (tap-major)
    bias_ref : (1, 4*Cout)             conv bias
    wh_ref   : (9*Cout, 4*Cout)        hidden conv weights (tap-major)
    h0_ref   : (Bblk, H, W, Cout)      initial hidden state (trainable param)
    c0_ref   : (Bblk, H*W, Cout)       initial cell state (trainable param)
    h_out_ref: (1, Bblk, H, W*Cout)    lane-dense hidden-state output at step t
    h_pad_ref: (Bblk, H+2, Wpad, Cout) VMEM: zero-bordered hidden state
    c_ref    : (Bblk*H*W, Cout)        VMEM: cell state
    """
    t = pl.program_id(1)
    M = Bblk * H * W
    C4 = 4 * Cout
    dot_dtype = jnp.bfloat16 if use_bf16 else jnp.float32

    # Per-batch-block state initialisation (runs again for every batch block,
    # so megacore sharding of the leading axis is safe).
    @pl.when(t == 0)
    def _init():
        h_pad_ref[...] = jnp.zeros_like(h_pad_ref)
        h_pad_ref[:, 1:H + 1, W_OFF:W_OFF + W, :] = h0_ref[...]
        c_ref[...] = c0_ref[...].reshape(M, Cout)

    # ---- input projection (fused): (M, 9*Cin) @ (9*Cin, 4*Cout) + bias ----
    xcol = xcol_ref[0].reshape(M, 9 * Cin)
    acc = jnp.dot(xcol.astype(dot_dtype), wx_ref[...].astype(dot_dtype),
                  preferred_element_type=jnp.float32) + bias_ref[...]

    # ---- hidden 3x3 conv as 9 accumulated matmuls (no im2col concat) ----
    hp = h_pad_ref[...].astype(dot_dtype)
    whv = wh_ref[...].astype(dot_dtype)
    for dy in range(3):
        for dx in range(3):
            tap = dy * 3 + dx
            x0 = W_OFF - 1 + dx
            a = hp[:, dy:dy + H, x0:x0 + W, :].reshape(M, Cout)
            acc += jnp.dot(a, whv[tap * Cout:(tap + 1) * Cout, :],
                           preferred_element_type=jnp.float32)

    # ---- lane-dense gate activations ----
    # sigmoid(x) = 0.5*(1+tanh(x/2)): a single EUP tanh pass over the full
    # 128-lane accumulator (instead of 3 quarter-lane sigmoids).
    sig = 0.5 * (jnp.tanh(0.5 * acc) + 1.0)
    tng = jnp.tanh(acc)
    i = sig[:, 0 * Cout:1 * Cout]
    f = sig[:, 1 * Cout:2 * Cout]
    o = sig[:, 2 * Cout:3 * Cout]
    g = tng[:, 3 * Cout:4 * Cout]

    c_new = f * c_ref[...] + i * g
    h_new = o * jnp.tanh(c_new)

    c_ref[...] = c_new

    # Next-step hidden state: write into the aligned interior of the padded
    # scratch; the zero border is never touched.
    h4 = h_new.reshape(Bblk, H, W, Cout)          # row-split only (safe)
    h_pad_ref[:, 1:H + 1, W_OFF:W_OFF + W, :] = h4

    # Lane-dense output: fold W into lanes with a lowering-safe slice+concat
    # (last dim W*Cout = 512 -> unmasked stores and a dense writeback DMA).
    h_out_ref[0] = jnp.concatenate([h4[:, :, w, :] for w in range(W)], axis=-1)


# ----------------------------------------------------------------------------
# Parameters + module forward (matches the PyTorch ConvLSTM semantics)
# ----------------------------------------------------------------------------
def init_conv_lstm_params(key, shape_in, n_channels_in, n_channels_out):
    H, W = shape_in
    C = n_channels_in + n_channels_out
    C4 = 4 * n_channels_out
    kw, kb = jax.random.split(key)
    fan_in = C * 9
    bound = 1.0 / jnp.sqrt(fan_in)
    return {
        "w": jax.random.uniform(kw, (3, 3, C, C4), jnp.float32, -bound, bound),
        "b": jax.random.uniform(kb, (1, C4), jnp.float32, -bound, bound),
        # nn.Parameter(torch.zeros(...)) in __init__ -> zeros (the forward
        # below handles arbitrary learned values).
        "hidden_init": jnp.zeros((1, n_channels_out, H, W), jnp.float32),
        "cell_init": jnp.zeros((1, n_channels_out, H, W), jnp.float32),
    }


def _pad_lane(n):
    return ((n + 127) // 128) * 128


def _pad_sub(n):
    return ((n + 7) // 8) * 8


def conv_lstm_forward(params, x, *, use_bf16_matmul=False):
    """x: (B, T, C_in, H, W) NCHW.  Returns (T*B, C_out, H, W)."""
    B, T, Cin, H, W = x.shape
    Cout = params["hidden_init"].shape[1]
    C4 = 4 * Cout

    w = params["w"]                                   # (3,3,Cin+Cout,4*Cout)
    bias = params["b"]                                # (1, 4*Cout)
    wx = w[:, :, :Cin, :].reshape(9 * Cin, C4)        # tap-major (dy,dx,ci)
    wh = w[:, :, Cin:, :].reshape(9 * Cout, C4)

    # --- one-time x preprocessing (hoisted out of the recurrence) ---
    x_nhwc = jnp.transpose(x, (1, 0, 3, 4, 2))        # (T,B,H,W,Cin)
    xp = jnp.pad(x_nhwc, ((0, 0), (0, 0), (1, 1), (1, 1), (0, 0)))
    xcol = jnp.concatenate(
        [xp[:, :, dy:dy + H, dx:dx + W, :]
         for dy in range(3) for dx in range(3)],
        axis=-1,
    ).reshape(T, B, H * W, 9 * Cin)

    # initial states (trainable params), broadcast to batch, NHWC layouts
    h0 = jnp.transpose(jnp.broadcast_to(params["hidden_init"],
                                        (B, Cout, H, W)), (0, 2, 3, 1))
    c0 = jnp.transpose(jnp.broadcast_to(params["cell_init"],
                                        (B, Cout, H, W)), (0, 2, 3, 1)
                       ).reshape(B, H * W, Cout)

    # Batch split: up to 2 blocks on a leading 'parallel' grid axis so v7x's
    # two TensorCores each run an independent recurrence (sequential and
    # near-neutral on v5e/v6e).
    if B % 2 == 0 and B >= 2:
        bblk, nb = B // 2, 2
    else:
        bblk, nb = B, 1

    wpad = W_OFF + W + 8      # padded W extent of the hidden-state scratch

    # VMEM working-set estimate (lane dims rounded to 128, sublanes to 8).
    fp = 4
    working_set = fp * (
        2 * bblk * _pad_sub(H * W) * _pad_lane(9 * Cin)        # xcol blocks
        + 2 * _pad_sub(9 * Cin) * _pad_lane(C4)                # wx
        + 2 * _pad_sub(1) * _pad_lane(C4)                      # bias
        + 2 * _pad_sub(9 * Cout) * _pad_lane(C4)               # wh
        + 2 * bblk * H * _pad_sub(W) * _pad_lane(Cout)         # h0
        + 2 * bblk * _pad_sub(H * W) * _pad_lane(Cout)         # c0
        + 2 * bblk * _pad_sub(H) * _pad_lane(W * Cout)         # out blocks
        + bblk * (H + 2) * wpad * _pad_lane(Cout)              # h_pad scratch
        + bblk * _pad_sub(H * W) * _pad_lane(Cout)             # c scratch
        + 8 * bblk * _pad_sub(H * W) * _pad_lane(C4)           # live temps
    )
    vmem_limit = int(min(48 * 2**20, max(16 * 2**20, 2 * working_set)))

    kernel = functools.partial(
        _convlstm_step_kernel, Bblk=bblk, H=H, W=W, Cin=Cin, Cout=Cout,
        use_bf16=use_bf16_matmul)

    h_seq = pl.pallas_call(
        kernel,
        grid=(nb, T),
        in_specs=[
            pl.BlockSpec((1, bblk, H * W, 9 * Cin), lambda bb, t: (t, bb, 0, 0)),
            pl.BlockSpec((9 * Cin, C4), lambda bb, t: (0, 0)),
            pl.BlockSpec((1, C4), lambda bb, t: (0, 0)),
            pl.BlockSpec((9 * Cout, C4), lambda bb, t: (0, 0)),
            pl.BlockSpec((bblk, H, W, Cout), lambda bb, t: (bb, 0, 0, 0)),
            pl.BlockSpec((bblk, H * W, Cout), lambda bb, t: (bb, 0, 0)),
        ],
        out_specs=pl.BlockSpec((1, bblk, H, W * Cout),
                               lambda bb, t: (t, bb, 0, 0)),
        out_shape=jax.ShapeDtypeStruct((T, B, H, W * Cout), jnp.float32),
        scratch_shapes=[
            pltpu.VMEM((bblk, H + 2, wpad, Cout), jnp.float32),
            pltpu.VMEM((bblk * H * W, Cout), jnp.float32),
        ],
        compiler_params=pltpu.CompilerParams(
            dimension_semantics=("parallel", "arbitrary"),
            vmem_limit_bytes=vmem_limit),
    )(xcol, wx, bias, wh, h0, c0)

    # (T, B, H, W*Cout) -> (T*B, Cout, H, W): matches torch.cat(outputs, dim=0)
    out = h_seq.reshape(T, B, H, W, Cout)
    out = jnp.transpose(out, (0, 1, 4, 2, 3)).reshape(T * B, Cout, H, W)
    return out


# ----------------------------------------------------------------------------
# Pure-JAX reference (correctness check only)
# ----------------------------------------------------------------------------
def _conv_lstm_reference(params, x):
    B, T, Cin, H, W = x.shape
    Cout = params["hidden_init"].shape[1]
    w = params["w"]                                   # HWIO
    b = params["b"].reshape(4 * Cout)
    h = jnp.transpose(jnp.broadcast_to(params["hidden_init"],
                                       (B, Cout, H, W)), (0, 2, 3, 1))
    c = jnp.transpose(jnp.broadcast_to(params["cell_init"],
                                       (B, Cout, H, W)), (0, 2, 3, 1))
    outs = []
    for t in range(T):
        x_t = jnp.transpose(x[:, t], (0, 2, 3, 1))
        comb = jnp.concatenate([x_t, h], axis=-1)
        cc = lax.conv_general_dilated(
            comb, w, window_strides=(1, 1), padding="SAME",
            dimension_numbers=("NHWC", "HWIO", "NHWC")) + b
        i = jax.nn.sigmoid(cc[..., 0 * Cout:1 * Cout])
        f = jax.nn.sigmoid(cc[..., 1 * Cout:2 * Cout])
        o = jax.nn.sigmoid(cc[..., 2 * Cout:3 * Cout])
        g = jnp.tanh(cc[..., 3 * Cout:4 * Cout])
        c = f * c + i * g
        h = o * jnp.tanh(c)
        outs.append(jnp.transpose(h, (0, 3, 1, 2)))
    return jnp.concatenate(outs, axis=0)


# ----------------------------------------------------------------------------
if __name__ == "__main__":
    B, T, Cin, Cout, H, W = 2, 8, 4, 32, 16, 16

    key = jax.random.PRNGKey(0)
    k_params, k_x = jax.random.split(key)
    params = init_conv_lstm_params(k_params, (H, W), Cin, Cout)
    x = jax.random.normal(k_x, (B, T, Cin, H, W), jnp.float32)

    out = jax.jit(conv_lstm_forward)(params, x)
    out = jax.block_until_ready(out)
    assert out.shape == (T * B, Cout, H, W), out.shape

    ref = _conv_lstm_reference(params, x)
    err = float(jnp.max(jnp.abs(out - ref)))
    assert jnp.allclose(out, ref, atol=1e-4, rtol=1e-4), err

    print("KERNEL_OK")
</pallas_src>

<mosaic_0001>
module attributes {stable_mosaic.version = 11 : i64} {
  func.func @_convlstm_step_kernel(%arg0: i32, %arg1: i32, %arg2: memref<1x1x256x36xf32, #tpu.memory_space<vmem>>, %arg3: memref<36x128xf32, #tpu.memory_space<vmem>>, %arg4: memref<1x128xf32, #tpu.memory_space<vmem>>, %arg5: memref<288x128xf32, #tpu.memory_space<vmem>>, %arg6: memref<1x16x16x32xf32, #tpu.memory_space<vmem>>, %arg7: memref<1x256x32xf32, #tpu.memory_space<vmem>>, %arg8: memref<1x1x16x512xf32, #tpu.memory_space<vmem>>, %arg9: memref<1x18x32x32xf32, #tpu.memory_space<vmem>>, %arg10: memref<256x32xf32, #tpu.memory_space<vmem>>) attributes {dimension_semantics = [#tpu.dimension_semantics<parallel>, #tpu.dimension_semantics<arbitrary>], iteration_bounds = array<i64: 2, 8>, scalar_prefetch = 0 : i64, scratch_operands = 2 : i64, tpu.core_type = #tpu.core_type<tc>, window_params = [{transform_indices = @transform_0, window_bounds = array<i64: 1, 1, 256, 36>}, {pipeline_mode = #tpu.pipeline_mode<synchronous>, transform_indices = @transform_1, window_bounds = array<i64: 36, 128>}, {pipeline_mode = #tpu.pipeline_mode<synchronous>, transform_indices = @transform_2, window_bounds = array<i64: 1, 128>}, {pipeline_mode = #tpu.pipeline_mode<synchronous>, transform_indices = @transform_3, window_bounds = array<i64: 288, 128>}, {transform_indices = @transform_4, window_bounds = array<i64: 1, 16, 16, 32>}, {transform_indices = @transform_5, window_bounds = array<i64: 1, 256, 32>}, {transform_indices = @transform_6, window_bounds = array<i64: 1, 1, 16, 512>}]} {
    %c0_i32 = arith.constant 0 : i32
    %0 = arith.cmpi eq, %arg1, %c0_i32 : i32
    %1 = arith.extui %0 : i1 to i32
    %c0_i32_0 = arith.constant 0 : i32
    %2 = arith.cmpi ne, %1, %c0_i32_0 : i32
    scf.if %2 {
      %cst_36 = arith.constant 0.000000e+00 : f32
      %115 = vector.broadcast %cst_36 : f32 to vector<1x18x32x32xf32>
      %c0_37 = arith.constant 0 : index
      %c0_38 = arith.constant 0 : index
      %c0_39 = arith.constant 0 : index
      %c0_40 = arith.constant 0 : index
      %116 = vector.load %arg9[%c0_37, %c0_38, %c0_39, %c0_40] : memref<1x18x32x32xf32, #tpu.memory_space<vmem>>, vector<1x18x32x32xf32>
      tpu.vector_store %arg9[%c0_37, %c0_38, %c0_39, %c0_40], %115 {strides = array<i32>} : memref<1x18x32x32xf32, #tpu.memory_space<vmem>>, vector<1x18x32x32xf32>,
      %c0_41 = arith.constant 0 : index
      %c0_42 = arith.constant 0 : index
      %c0_43 = arith.constant 0 : index
      %c0_44 = arith.constant 0 : index
      %117 = vector.load %arg6[%c0_41, %c0_42, %c0_43, %c0_44] : memref<1x16x16x32xf32, #tpu.memory_space<vmem>>, vector<1x16x16x32xf32>
      %c0_45 = arith.constant 0 : index
      %c1_46 = arith.constant 1 : index
      %c8_47 = arith.constant 8 : index
      %c0_48 = arith.constant 0 : index
      %118 = vector.load %arg9[%c0_45, %c1_46, %c8_47, %c0_48] : memref<1x18x32x32xf32, #tpu.memory_space<vmem>>, vector<1x16x16x32xf32>
      tpu.vector_store %arg9[%c0_45, %c1_46, %c8_47, %c0_48], %117 {strides = array<i32>} : memref<1x18x32x32xf32, #tpu.memory_space<vmem>>, vector<1x16x16x32xf32>,
      %c0_49 = arith.constant 0 : index
      %c0_50 = arith.constant 0 : index
      %c0_51 = arith.constant 0 : index
      %119 = vector.load %arg7[%c0_49, %c0_50, %c0_51] : memref<1x256x32xf32, #tpu.memory_space<vmem>>, vector<1x256x32xf32>
      %120 = vector.shape_cast %119 : vector<1x256x32xf32> to vector<256x32xf32>
      %c0_52 = arith.constant 0 : index
      %c0_53 = arith.constant 0 : index
      %121 = vector.load %arg10[%c0_52, %c0_53] : memref<256x32xf32, #tpu.memory_space<vmem>>, vector<256x32xf32>
      tpu.vector_store %arg10[%c0_52, %c0_53], %120 {strides = array<i32>} : memref<256x32xf32, #tpu.memory_space<vmem>>, vector<256x32xf32>,
    } else {
    }
    %c0 = arith.constant 0 : index
    %c0_1 = arith.constant 0 : index
    %c0_2 = arith.constant 0 : index
    %c0_3 = arith.constant 0 : index
    %3 = vector.load %arg2[%c0, %c0_1, %c0_2, %c0_3] : memref<1x1x256x36xf32, #tpu.memory_space<vmem>>, vector<1x1x256x36xf32>
    %4 = vector.shape_cast %3 : vector<1x1x256x36xf32> to vector<1x256x36xf32>
    %5 = vector.shape_cast %4 : vector<1x256x36xf32> to vector<256x36xf32>
    %c0_4 = arith.constant 0 : index
    %c0_5 = arith.constant 0 : index
    %6 = vector.load %arg3[%c0_4, %c0_5] : memref<36x128xf32, #tpu.memory_space<vmem>>, vector<36x128xf32>
    %cst = arith.constant dense<0.000000e+00> : vector<256x128xf32>
    %7 = tpu.matmul %5, %6, %cst {dimension_numbers = #tpu.dot_dimension_numbers<[1], [0], [0], [1], [0, 0, 1, 1], [], []>} : vector<256x36xf32>, vector<36x128xf32>, vector<256x128xf32> -> vector<256x128xf32>
    %c0_6 = arith.constant 0 : index
    %c0_7 = arith.constant 0 : index
    %8 = vector.load %arg4[%c0_6, %c0_7] : memref<1x128xf32, #tpu.memory_space<vmem>>, vector<1x128xf32>
    %9 = vector.broadcast %8 : vector<1x128xf32> to vector<256x128xf32>
    %10 = arith.addf %7, %9 : vector<256x128xf32>
    %c0_8 = arith.constant 0 : index
    %c0_9 = arith.constant 0 : index
    %c0_10 = arith.constant 0 : index
    %c0_11 = arith.constant 0 : index
    %11 = vector.load %arg9[%c0_8, %c0_9, %c0_10, %c0_11] : memref<1x18x32x32xf32, #tpu.memory_space<vmem>>, vector<1x18x32x32xf32>
    %c0_12 = arith.constant 0 : index
    %c0_13 = arith.constant 0 : index
    %12 = vector.load %arg5[%c0_12, %c0_13] : memref<288x128xf32, #tpu.memory_space<vmem>>, vector<288x128xf32>
    %13 = vector.extract_strided_slice %11 {offsets = [0, 0, 7, 0], sizes = [1, 16, 16, 32], strides = [1, 1, 1, 1]} : vector<1x18x32x32xf32> to vector<1x16x16x32xf32>
    %14 = vector.shape_cast %13 : vector<1x16x16x32xf32> to vector<256x32xf32>
    %15 = vector.extract_strided_slice %12 {offsets = [0, 0], sizes = [32, 128], strides = [1, 1]} : vector<288x128xf32> to vector<32x128xf32>
    %cst_14 = arith.constant dense<0.000000e+00> : vector<256x128xf32>
    %16 = tpu.matmul %14, %15, %cst_14 {dimension_numbers = #tpu.dot_dimension_numbers<[1], [0], [0], [1], [0, 0, 1, 1], [], []>} : vector<256x32xf32>, vector<32x128xf32>, vector<256x128xf32> -> vector<256x128xf32>
    %17 = arith.addf %10, %16 : vector<256x128xf32>
    %18 = vector.extract_strided_slice %11 {offsets = [0, 0, 8, 0], sizes = [1, 16, 16, 32], strides = [1, 1, 1, 1]} : vector<1x18x32x32xf32> to vector<1x16x16x32xf32>
    %19 = vector.shape_cast %18 : vector<1x16x16x32xf32> to vector<256x32xf32>
    %20 = vector.extract_strided_slice %12 {offsets = [32, 0], sizes = [32, 128], strides = [1, 1]} : vector<288x128xf32> to vector<32x128xf32>
    %cst_15 = arith.constant dense<0.000000e+00> : vector<256x128xf32>
    %21 = tpu.matmul %19, %20, %cst_15 {dimension_numbers = #tpu.dot_dimension_numbers<[1], [0], [0], [1], [0, 0, 1, 1], [], []>} : vector<256x32xf32>, vector<32x128xf32>, vector<256x128xf32> -> vector<256x128xf32>
    %22 = arith.addf %17, %21 : vector<256x128xf32>
    %23 = vector.extract_strided_slice %11 {offsets = [0, 0, 9, 0], sizes = [1, 16, 16, 32], strides = [1, 1, 1, 1]} : vector<1x18x32x32xf32> to vector<1x16x16x32xf32>
    %24 = vector.shape_cast %23 : vector<1x16x16x32xf32> to vector<256x32xf32>
    %25 = vector.extract_strided_slice %12 {offsets = [64, 0], sizes = [32, 128], strides = [1, 1]} : vector<288x128xf32> to vector<32x128xf32>
    %cst_16 = arith.constant dense<0.000000e+00> : vector<256x128xf32>
    %26 = tpu.matmul %24, %25, %cst_16 {dimension_numbers = #tpu.dot_dimension_numbers<[1], [0], [0], [1], [0, 0, 1, 1], [], []>} : vector<256x32xf32>, vector<32x128xf32>, vector<256x128xf32> -> vector<256x128xf32>
    %27 = arith.addf %22, %26 : vector<256x128xf32>
    %28 = vector.extract_strided_slice %11 {offsets = [0, 1, 7, 0], sizes = [1, 16, 16, 32], strides = [1, 1, 1, 1]} : vector<1x18x32x32xf32> to vector<1x16x16x32xf32>
    %29 = vector.shape_cast %28 : vector<1x16x16x32xf32> to vector<256x32xf32>
    %30 = vector.extract_strided_slice %12 {offsets = [96, 0], sizes = [32, 128], strides = [1, 1]} : vector<288x128xf32> to vector<32x128xf32>
    %cst_17 = arith.constant dense<0.000000e+00> : vector<256x128xf32>
    %31 = tpu.matmul %29, %30, %cst_17 {dimension_numbers = #tpu.dot_dimension_numbers<[1], [0], [0], [1], [0, 0, 1, 1], [], []>} : vector<256x32xf32>, vector<32x128xf32>, vector<256x128xf32> -> vector<256x128xf32>
    %32 = arith.addf %27, %31 : vector<256x128xf32>
    %33 = vector.extract_strided_slice %11 {offsets = [0, 1, 8, 0], sizes = [1, 16, 16, 32], strides = [1, 1, 1, 1]} : vector<1x18x32x32xf32> to vector<1x16x16x32xf32>
    %34 = vector.shape_cast %33 : vector<1x16x16x32xf32> to vector<256x32xf32>
    %35 = vector.extract_strided_slice %12 {offsets = [128, 0], sizes = [32, 128], strides = [1, 1]} : vector<288x128xf32> to vector<32x128xf32>
    %cst_18 = arith.constant dense<0.000000e+00> : vector<256x128xf32>
    %36 = tpu.matmul %34, %35, %cst_18 {dimension_numbers = #tpu.dot_dimension_numbers<[1], [0], [0], [1], [0, 0, 1, 1], [], []>} : vector<256x32xf32>, vector<32x128xf32>, vector<256x128xf32> -> vector<256x128xf32>
    %37 = arith.addf %32, %36 : vector<256x128xf32>
    %38 = vector.extract_strided_slice %11 {offsets = [0, 1, 9, 0], sizes = [1, 16, 16, 32], strides = [1, 1, 1, 1]} : vector<1x18x32x32xf32> to vector<1x16x16x32xf32>
    %39 = vector.shape_cast %38 : vector<1x16x16x32xf32> to vector<256x32xf32>
    %40 = vector.extract_strided_slice %12 {offsets = [160, 0], sizes = [32, 128], strides = [1, 1]} : vector<288x128xf32> to vector<32x128xf32>
    %cst_19 = arith.constant dense<0.000000e+00> : vector<256x128xf32>
    %41 = tpu.matmul %39, %40, %cst_19 {dimension_numbers = #tpu.dot_dimension_numbers<[1], [0], [0], [1], [0, 0, 1, 1], [], []>} : vector<256x32xf32>, vector<32x128xf32>, vector<256x128xf32> -> vector<256x128xf32>
    %42 = arith.addf %37, %41 : vector<256x128xf32>
    %43 = vector.extract_strided_slice %11 {offsets = [0, 2, 7, 0], sizes = [1, 16, 16, 32], strides = [1, 1, 1, 1]} : vector<1x18x32x32xf32> to vector<1x16x16x32xf32>
    %44 = vector.shape_cast %43 : vector<1x16x16x32xf32> to vector<256x32xf32>
    %45 = vector.extract_strided_slice %12 {offsets = [192, 0], sizes = [32, 128], strides = [1, 1]} : vector<288x128xf32> to vector<32x128xf32>
    %cst_20 = arith.constant dense<0.000000e+00> : vector<256x128xf32>
    %46 = tpu.matmul %44, %45, %cst_20 {dimension_numbers = #tpu.dot_dimension_numbers<[1], [0], [0], [1], [0, 0, 1, 1], [], []>} : vector<256x32xf32>, vector<32x128xf32>, vector<256x128xf32> -> vector<256x128xf32>
    %47 = arith.addf %42, %46 : vector<256x128xf32>
    %48 = vector.extract_strided_slice %11 {offsets = [0, 2, 8, 0], sizes = [1, 16, 16, 32], strides = [1, 1, 1, 1]} : vector<1x18x32x32xf32> to vector<1x16x16x32xf32>
    %49 = vector.shape_cast %48 : vector<1x16x16x32xf32> to vector<256x32xf32>
    %50 = vector.extract_strided_slice %12 {offsets = [224, 0], sizes = [32, 128], strides = [1, 1]} : vector<288x128xf32> to vector<32x128xf32>
    %cst_21 = arith.constant dense<0.000000e+00> : vector<256x128xf32>
    %51 = tpu.matmul %49, %50, %cst_21 {dimension_numbers = #tpu.dot_dimension_numbers<[1], [0], [0], [1], [0, 0, 1, 1], [], []>} : vector<256x32xf32>, vector<32x128xf32>, vector<256x128xf32> -> vector<256x128xf32>
    %52 = arith.addf %47, %51 : vector<256x128xf32>
    %53 = vector.extract_strided_slice %11 {offsets = [0, 2, 9, 0], sizes = [1, 16, 16, 32], strides = [1, 1, 1, 1]} : vector<1x18x32x32xf32> to vector<1x16x16x32xf32>
    %54 = vector.shape_cast %53 : vector<1x16x16x32xf32> to vector<256x32xf32>
    %55 = vector.extract_strided_slice %12 {offsets = [256, 0], sizes = [32, 128], strides = [1, 1]} : vector<288x128xf32> to vector<32x128xf32>
    %cst_22 = arith.constant dense<0.000000e+00> : vector<256x128xf32>
    %56 = tpu.matmul %54, %55, %cst_22 {dimension_numbers = #tpu.dot_dimension_numbers<[1], [0], [0], [1], [0, 0, 1, 1], [], []>} : vector<256x32xf32>, vector<32x128xf32>, vector<256x128xf32> -> vector<256x128xf32>
    %57 = arith.addf %52, %56 : vector<256x128xf32>
    %cst_23 = arith.constant 5.000000e-01 : f32
    %58 = vector.broadcast %cst_23 : f32 to vector<256x128xf32>
    %59 = arith.mulf %58, %57 : vector<256x128xf32>
    %60 = math.tanh %59 : vector<256x128xf32>
    %cst_24 = arith.constant 1.000000e+00 : f32
    %61 = vector.broadcast %cst_24 : f32 to vector<256x128xf32>
    %62 = arith.addf %60, %61 : vector<256x128xf32>
    %cst_25 = arith.constant 5.000000e-01 : f32
    %63 = vector.broadcast %cst_25 : f32 to vector<256x128xf32>
    %64 = arith.mulf %63, %62 : vector<256x128xf32>
    %65 = math.tanh %57 : vector<256x128xf32>
    %66 = vector.extract_strided_slice %64 {offsets = [0, 0], sizes = [256, 32], strides = [1, 1]} : vector<256x128xf32> to vector<256x32xf32>
    %67 = vector.extract_strided_slice %64 {offsets = [0, 32], sizes = [256, 32], strides = [1, 1]} : vector<256x128xf32> to vector<256x32xf32>
    %68 = vector.extract_strided_slice %64 {offsets = [0, 64], sizes = [256, 32], strides = [1, 1]} : vector<256x128xf32> to vector<256x32xf32>
    %69 = vector.extract_strided_slice %65 {offsets = [0, 96], sizes = [256, 32], strides = [1, 1]} : vector<256x128xf32> to vector<256x32xf32>
    %c0_26 = arith.constant 0 : index
    %c0_27 = arith.constant 0 : index
    %70 = vector.load %arg10[%c0_26, %c0_27] : memref<256x32xf32, #tpu.memory_space<vmem>>, vector<256x32xf32>
    %71 = arith.mulf %67, %70 : vector<256x32xf32>
    %72 = arith.mulf %66, %69 : vector<256x32xf32>
    %73 = arith.addf %71, %72 : vector<256x32xf32>
    %74 = math.tanh %73 : vector<256x32xf32>
    %75 = arith.mulf %68, %74 : vector<256x32xf32>
    %c0_28 = arith.constant 0 : index
    %c0_29 = arith.constant 0 : index
    %76 = vector.load %arg10[%c0_28, %c0_29] : memref<256x32xf32, #tpu.memory_space<vmem>>, vector<256x32xf32>
    tpu.vector_store %arg10[%c0_28, %c0_29], %73 {strides = array<i32>} : memref<256x32xf32, #tpu.memory_space<vmem>>, vector<256x32xf32>,
    %77 = vector.shape_cast %75 : vector<256x32xf32> to vector<1x16x16x32xf32>
    %c0_30 = arith.constant 0 : index
    %c1 = arith.constant 1 : index
    %c8 = arith.constant 8 : index
    %c0_31 = arith.constant 0 : index
    %78 = vector.load %arg9[%c0_30, %c1, %c8, %c0_31] : memref<1x18x32x32xf32, #tpu.memory_space<vmem>>, vector<1x16x16x32xf32>
    tpu.vector_store %arg9[%c0_30, %c1, %c8, %c0_31], %77 {strides = array<i32>} : memref<1x18x32x32xf32, #tpu.memory_space<vmem>>, vector<1x16x16x32xf32>,
    %79 = vector.extract_strided_slice %77 {offsets = [0, 0, 0, 0], sizes = [1, 16, 1, 32], strides = [1, 1, 1, 1]} : vector<1x16x16x32xf32> to vector<1x16x1x32xf32>
    %80 = vector.shape_cast %79 : vector<1x16x1x32xf32> to vector<1x16x32xf32>
    %81 = vector.extract_strided_slice %77 {offsets = [0, 0, 1, 0], sizes = [1, 16, 1, 32], strides = [1, 1, 1, 1]} : vector<1x16x16x32xf32> to vector<1x16x1x32xf32>
    %82 = vector.shape_cast %81 : vector<1x16x1x32xf32> to vector<1x16x32xf32>
    %83 = vector.extract_strided_slice %77 {offsets = [0, 0, 2, 0], sizes = [1, 16, 1, 32], strides = [1, 1, 1, 1]} : vector<1x16x16x32xf32> to vector<1x16x1x32xf32>
    %84 = vector.shape_cast %83 : vector<1x16x1x32xf32> to vector<1x16x32xf32>
    %85 = vector.extract_strided_slice %77 {offsets = [0, 0, 3, 0], sizes = [1, 16, 1, 32], strides = [1, 1, 1, 1]} : vector<1x16x16x32xf32> to vector<1x16x1x32xf32>
    %86 = vector.shape_cast %85 : vector<1x16x1x32xf32> to vector<1x16x32xf32>
    %87 = vector.extract_strided_slice %77 {offsets = [0, 0, 4, 0], sizes = [1, 16, 1, 32], strides = [1, 1, 1, 1]} : vector<1x16x16x32xf32> to vector<1x16x1x32xf32>
    %88 = vector.shape_cast %87 : vector<1x16x1x32xf32> to vector<1x16x32xf32>
    %89 = vector.extract_strided_slice %77 {offsets = [0, 0, 5, 0], sizes = [1, 16, 1, 32], strides = [1, 1, 1, 1]} : vector<1x16x16x32xf32> to vector<1x16x1x32xf32>
    %90 = vector.shape_cast %89 : vector<1x16x1x32xf32> to vector<1x16x32xf32>
    %91 = vector.extract_strided_slice %77 {offsets = [0, 0, 6, 0], sizes = [1, 16, 1, 32], strides = [1, 1, 1, 1]} : vector<1x16x16x32xf32> to vector<1x16x1x32xf32>
    %92 = vector.shape_cast %91 : vector<1x16x1x32xf32> to vector<1x16x32xf32>
    %93 = vector.extract_strided_slice %77 {offsets = [0, 0, 7, 0], sizes = [1, 16, 1, 32], strides = [1, 1, 1, 1]} : vector<1x16x16x32xf32> to vector<1x16x1x32xf32>
    %94 = vector.shape_cast %93 : vector<1x16x1x32xf32> to vector<1x16x32xf32>
    %95 = vector.extract_strided_slice %77 {offsets = [0, 0, 8, 0], sizes = [1, 16, 1, 32], strides = [1, 1, 1, 1]} : vector<1x16x16x32xf32> to vector<1x16x1x32xf32>
    %96 = vector.shape_cast %95 : vector<1x16x1x32xf32> to vector<1x16x32xf32>
    %97 = vector.extract_strided_slice %77 {offsets = [0, 0, 9, 0], sizes = [1, 16, 1, 32], strides = [1, 1, 1, 1]} : vector<1x16x16x32xf32> to vector<1x16x1x32xf32>
    %98 = vector.shape_cast %97 : vector<1x16x1x32xf32> to vector<1x16x32xf32>
    %99 = vector.extract_strided_slice %77 {offsets = [0, 0, 10, 0], sizes = [1, 16, 1, 32], strides = [1, 1, 1, 1]} : vector<1x16x16x32xf32> to vector<1x16x1x32xf32>
    %100 = vector.shape_cast %99 : vector<1x16x1x32xf32> to vector<1x16x32xf32>
    %101 = vector.extract_strided_slice %77 {offsets = [0, 0, 11, 0], sizes = [1, 16, 1, 32], strides = [1, 1, 1, 1]} : vector<1x16x16x32xf32> to vector<1x16x1x32xf32>
    %102 = vector.shape_cast %101 : vector<1x16x1x32xf32> to vector<1x16x32xf32>
    %103 = vector.extract_strided_slice %77 {offsets = [0, 0, 12, 0], sizes = [1, 16, 1, 32], strides = [1, 1, 1, 1]} : vector<1x16x16x32xf32> to vector<1x16x1x32xf32>
    %104 = vector.shape_cast %103 : vector<1x16x1x32xf32> to vector<1x16x32xf32>
    %105 = vector.extract_strided_slice %77 {offsets = [0, 0, 13, 0], sizes = [1, 16, 1, 32], strides = [1, 1, 1, 1]} : vector<1x16x16x32xf32> to vector<1x16x1x32xf32>
    %106 = vector.shape_cast %105 : vector<1x16x1x32xf32> to vector<1x16x32xf32>
    %107 = vector.extract_strided_slice %77 {offsets = [0, 0, 14, 0], sizes = [1, 16, 1, 32], strides = [1, 1, 1, 1]} : vector<1x16x16x32xf32> to vector<1x16x1x32xf32>
    %108 = vector.shape_cast %107 : vector<1x16x1x32xf32> to vector<1x16x32xf32>
    %109 = vector.extract_strided_slice %77 {offsets = [0, 0, 15, 0], sizes = [1, 16, 1, 32], strides = [1, 1, 1, 1]} : vector<1x16x16x32xf32> to vector<1x16x1x32xf32>
    %110 = vector.shape_cast %109 : vector<1x16x1x32xf32> to vector<1x16x32xf32>
    %111 = tpu.concatenate %80, %82, %84, %86, %88, %90, %92, %94, %96, %98, %100, %102, %104, %106, %108, %110 in 2 : vector<1x16x32xf32>, vector<1x16x32xf32>, vector<1x16x32xf32>, vector<1x16x32xf32>, vector<1x16x32xf32>, vector<1x16x32xf32>, vector<1x16x32xf32>, vector<1x16x32xf32>, vector<1x16x32xf32>, vector<1x16x32xf32>, vector<1x16x32xf32>, vector<1x16x32xf32>, vector<1x16x32xf32>, vector<1x16x32xf32>, vector<1x16x32xf32>, vector<1x16x32xf32> -> vector<1x16x512xf32>
    %c0_32 = arith.constant 0 : index
    %c0_33 = arith.constant 0 : index
    %c0_34 = arith.constant 0 : index
    %c0_35 = arith.constant 0 : index
    %112 = vector.load %arg8[%c0_32, %c0_33, %c0_34, %c0_35] : memref<1x1x16x512xf32, #tpu.memory_space<vmem>>, vector<1x1x16x512xf32>
    %113 = vector.shape_cast %112 : vector<1x1x16x512xf32> to vector<1x16x512xf32>
    %114 = vector.shape_cast %111 : vector<1x16x512xf32> to vector<1x1x16x512xf32>
    tpu.vector_store %arg8[%c0_32, %c0_33, %c0_34, %c0_35], %114 {strides = array<i32>} : memref<1x1x16x512xf32, #tpu.memory_space<vmem>>, vector<1x1x16x512xf32>,
    return
  }
  func.func @transform_0(%arg0: i32, %arg1: i32) -> (i32, i32, i32, i32) {
    %c0_i32 = arith.constant 0 : i32
    %c0_i32_0 = arith.constant 0 : i32
    %c0_i32_1 = arith.constant 0 : i32
    return %arg1, %arg0, %c0_i32, %c0_i32_0 : i32, i32, i32, i32
  }
  func.func @transform_1(%arg0: i32, %arg1: i32) -> (i32, i32) {
    %c0_i32 = arith.constant 0 : i32
    %c0_i32_0 = arith.constant 0 : i32
    %c0_i32_1 = arith.constant 0 : i32
    return %c0_i32, %c0_i32_0 : i32, i32
  }
  func.func @transform_2(%arg0: i32, %arg1: i32) -> (i32, i32) {
    %c0_i32 = arith.constant 0 : i32
    %c0_i32_0 = arith.constant 0 : i32
    %c0_i32_1 = arith.constant 0 : i32
    return %c0_i32, %c0_i32_0 : i32, i32
  }
  func.func @transform_3(%arg0: i32, %arg1: i32) -> (i32, i32) {
    %c0_i32 = arith.constant 0 : i32
    %c0_i32_0 = arith.constant 0 : i32
    %c0_i32_1 = arith.constant 0 : i32
    return %c0_i32, %c0_i32_0 : i32, i32
  }
  func.func @transform_4(%arg0: i32, %arg1: i32) -> (i32, i32, i32, i32) {
    %c0_i32 = arith.constant 0 : i32
    %c0_i32_0 = arith.constant 0 : i32
    %c0_i32_1 = arith.constant 0 : i32
    %c0_i32_2 = arith.constant 0 : i32
    return %arg0, %c0_i32, %c0_i32_0, %c0_i32_1 : i32, i32, i32, i32
  }
  func.func @transform_5(%arg0: i32, %arg1: i32) -> (i32, i32, i32) {
    %c0_i32 = arith.constant 0 : i32
    %c0_i32_0 = arith.constant 0 : i32
    %c0_i32_1 = arith.constant 0 : i32
    return %arg0, %c0_i32, %c0_i32_0 : i32, i32, i32
  }
  func.func @transform_6(%arg0: i32, %arg1: i32) -> (i32, i32, i32, i32) {
    %c0_i32 = arith.constant 0 : i32
    %c0_i32_0 = arith.constant 0 : i32
    %c0_i32_1 = arith.constant 0 : i32
    return %arg1, %arg0, %c0_i32, %c0_i32_0 : i32, i32, i32, i32
  }
}

</mosaic_0001>

<llo_original>
// kernel: conv_lstm_forward.1
$region0: #{conv_lstm_forward.1}
  #allocation0 [shape = 'u32[]', space=smem, size = 0x4, offset = 0x4, fixed_abs, tag = 'smem constant byte address 0x4 - core index']
  #allocation1 [shape = 'u32[144,128]{1,0:T(1,128)}', space=vmem, size = 0x12000, scoped, tag = 'internal scratch']
  #allocation2 [shape = 'f32[1,18,32,32]{3,2,1,0:T(8,128)}', space=vmem, size = 0x48000, scoped, tag = 'scratch operand']
  #allocation3 [shape = 'f32[256,32]{1,0:T(8,128)}', space=vmem, size = 0x20000, scoped, tag = 'scratch operand']
  %s0 = inlined_call_operand.vmem [shape: f32[8,2,256,36], index: 0, kind: input, shape index: {}]
  %s1 = inlined_call_operand.vmem [shape: f32[36,128], index: 1, kind: input, shape index: {}]
  %s2 = inlined_call_operand.vmem [shape: f32[1,128], index: 2, kind: input, shape index: {}]
  %s3 = inlined_call_operand.vmem [shape: f32[288,128], index: 3, kind: input, shape index: {}]
  %s4 = inlined_call_operand.vmem [shape: f32[2,16,16,32], index: 4, kind: input, shape index: {}]
  %s5 = inlined_call_operand.vmem [shape: f32[2,256,32], index: 5, kind: input, shape index: {}]
  %s6 = inlined_call_operand.vmem [shape: f32[8,2,16,512], index: 6, kind: output, shape index: {}]
  %s7 = sld [smem:[#allocation0]]
  $region61: #{conv_lstm_forward.1} parent=0
    _
  %s9 = ssub.s32 1, %s7
  %s10 = scalar_select 0, %s9, %s7
  loop: start=0, step=1, limit=18
  $region2: #{conv_lstm_forward.1} parent=0 // loop_pre_header
    _
  $region3: #{conv_lstm_forward.1} parent=0 // loop_header
    %s12 = sphi 0, %s16
    %p13 = scmp.ge.s32.totalorder %s12, 18
    %s19 = sphi 0, %s31
    %s20 = sphi 0, %s27
    %s21 = sphi 0, %s19
    %s22 = sphi 0, %s20
    %s23 = sphi 0, %s21
    %s24 = sphi 0, %s22
    %s36 = sphi 0, %s38
    %s39 = sphi 0, %s36
    %s40 = sphi 0, %s39
    %s56 = sphi 0, %s40
    %s60 = sphi 0, %s60
    %s62 = sphi 0, %s60
    %s63 = sphi 0, %s62
    %s77 = sphi 0, %s63
    %s81 = sphi 0, %s81
    %s83 = sphi 0, %s81
    %s84 = sphi 0, %s83
    %s98 = sphi 0, %s84
    %s102 = sphi 0, %s102
    %s104 = sphi 0, %s102
    %s105 = sphi 0, %s104
    %s119 = sphi 0, %s105
    %s125 = sphi 0, %s127
    %s128 = sphi 0, %s125
    %s129 = sphi 0, %s128
    %s145 = sphi 0, %s129
    %s151 = sphi 0, %s153
    %s154 = sphi 0, %s151
    %s155 = sphi 0, %s154
    %s171 = sphi 0, %s155
    %s179 = sphi 0, %s181
    %s182 = sphi 0, %s179
    %s183 = sphi 0, %s182
    %s199 = sphi 0, %s183
  $region4: #{conv_lstm_forward.1} parent=0 // loop_header_branch
    %15 = sbr.rel (%p13) target = $region8
  $region5: #{conv_lstm_forward.1} parent=0 // loop_body
    %s17 = ssub.s32 %s12, 1
    %s18 = ssub.s32 %s12, 2
    %s25 = sadd.s32 1, %s20
    %p26 = scmp.ge.s32.totalorder %s25, 8
    %s27 = scalar_select %p26, 0, %s25
    %s28 = sadd.s32 1, %s19
    %s29 = scalar_select %p26, %s28, %s19
    %p30 = scmp.ge.s32.totalorder %s29, 2
    %s31 = scalar_select %p30, 0, %s29
    %s32 = ssub.s32 %s20, %s27
    %s33 = ssub.s32 %s19, %s31
    %s34 = sor.u32 %s32, %s33
    %p35 = scmp.eq.s32.totalorder %s34, 0
    %s37 = sadd.s32 %s36, 1
    %s38 = scalar_select %p35, %s36, %s37
    %p41 = pneg %p35
    %p42 = scmp.eq.s32.totalorder %s12, 15
    %p43 = por %p41, %p42
    %p44 = scmp.ne.s32.totalorder %s36, %s39
    %p45 = scmp.eq.s32.totalorder %s12, 0
    %p46 = por %p44, %p45
    %p47 = scmp.ne.s32.totalorder %s36, %s39
    %p48 = scmp.eq.s32.totalorder %s17, 15
    %p49 = por %p47, %p48
    %p50 = scmp.ne.s32.totalorder %s39, %s40
    %p51 = scmp.eq.s32.totalorder %s17, 0
    %p52 = por %p50, %p51
    %p53 = scmp.ne.s32.totalorder %s39, %s40
    %p54 = scmp.eq.s32.totalorder %s18, 15
    %p55 = por %p53, %p54
    %p57 = scmp.ne.s32.totalorder %s40, %s56
    %p58 = scmp.eq.s32.totalorder %s18, 0
    %p59 = por %p57, %p58
    %s61 = sadd.s32 %s60, 1
    %p64 = scmp.eq.s32.totalorder %s12, 15
    %p65 = scmp.ne.s32.totalorder %s60, %s62
    %p66 = scmp.eq.s32.totalorder %s12, 0
    %p67 = por %p65, %p66
    %p68 = scmp.ne.s32.totalorder %s60, %s62
    %p69 = scmp.eq.s32.totalorder %s17, 15
    %p70 = por %p68, %p69
    %p71 = scmp.ne.s32.totalorder %s62, %s63
    %p72 = scmp.eq.s32.totalorder %s17, 0
    %p73 = por %p71, %p72
    %p74 = scmp.ne.s32.totalorder %s62, %s63
    %p75 = scmp.eq.s32.totalorder %s18, 15
    %p76 = por %p74, %p75
    %p78 = scmp.ne.s32.totalorder %s63, %s77
    %p79 = scmp.eq.s32.totalorder %s18, 0
    %p80 = por %p78, %p79
    %s82 = sadd.s32 %s81, 1
    %p85 = scmp.eq.s32.totalorder %s12, 15
    %p86 = scmp.ne.s32.totalorder %s81, %s83
    %p87 = scmp.eq.s32.totalorder %s12, 0
    %p88 = por %p86, %p87
    %p89 = scmp.ne.s32.totalorder %s81, %s83
    %p90 = scmp.eq.s32.totalorder %s17, 15
    %p91 = por %p89, %p90
    %p92 = scmp.ne.s32.totalorder %s83, %s84
    %p93 = scmp.eq.s32.totalorder %s17, 0
    %p94 = por %p92, %p93
    %p95 = scmp.ne.s32.totalorder %s83, %s84
    %p96 = scmp.eq.s32.totalorder %s18, 15
    %p97 = por %p95, %p96
    %p99 = scmp.ne.s32.totalorder %s84, %s98
    %p100 = scmp.eq.s32.totalorder %s18, 0
    %p101 = por %p99, %p100
    %s103 = sadd.s32 %s102, 1
    %p106 = scmp.eq.s32.totalorder %s12, 15
    %p107 = scmp.ne.s32.totalorder %s102, %s104
    %p108 = scmp.eq.s32.totalorder %s12, 0
    %p109 = por %p107, %p108
    %p110 = scmp.ne.s32.totalorder %s102, %s104
    %p111 = scmp.eq.s32.totalorder %s17, 15
    %p112 = por %p110, %p111
    %p113 = scmp.ne.s32.totalorder %s104, %s105
    %p114 = scmp.eq.s32.totalorder %s17, 0
    %p115 = por %p113, %p114
    %p116 = scmp.ne.s32.totalorder %s104, %s105
    %p117 = scmp.eq.s32.totalorder %s18, 15
    %p118 = por %p116, %p117
    %p120 = scmp.ne.s32.totalorder %s105, %s119
    %p121 = scmp.eq.s32.totalorder %s18, 0
    %p122 = por %p120, %p121
    %s123 = ssub.s32 %s19, %s31
    %p124 = scmp.eq.s32.totalorder %s123, 0
    %s126 = sadd.s32 %s125, 1
    %s127 = scalar_select %p124, %s125, %s126
    %p130 = pneg %p124
    %p131 = scmp.eq.s32.totalorder %s12, 15
    %p132 = por %p130, %p131
    %p133 = scmp.ne.s32.totalorder %s125, %s128
    %p134 = scmp.eq.s32.totalorder %s12, 0
    %p135 = por %p133, %p134
    %p136 = scmp.ne.s32.totalorder %s125, %s128
    %p137 = scmp.eq.s32.totalorder %s17, 15
    %p138 = por %p136, %p137
    %p139 = scmp.ne.s32.totalorder %s128, %s129
    %p140 = scmp.eq.s32.totalorder %s17, 0
    %p141 = por %p139, %p140
    %p142 = scmp.ne.s32.totalorder %s128, %s129
    %p143 = scmp.eq.s32.totalorder %s18, 15
    %p144 = por %p142, %p143
    %p146 = scmp.ne.s32.totalorder %s129, %s145
    %p147 = scmp.eq.s32.totalorder %s18, 0
    %p148 = por %p146, %p147
    %s149 = ssub.s32 %s19, %s31
    %p150 = scmp.eq.s32.totalorder %s149, 0
    %s152 = sadd.s32 %s151, 1
    %s153 = scalar_select %p150, %s151, %s152
    %p156 = pneg %p150
    %p157 = scmp.eq.s32.totalorder %s12, 15
    %p158 = por %p156, %p157
    %p159 = scmp.ne.s32.totalorder %s151, %s154
    %p160 = scmp.eq.s32.totalorder %s12, 0
    %p161 = por %p159, %p160
    %p162 = scmp.ne.s32.totalorder %s151, %s154
    %p163 = scmp.eq.s32.totalorder %s17, 15
    %p164 = por %p162, %p163
    %p165 = scmp.ne.s32.totalorder %s154, %s155
    %p166 = scmp.eq.s32.totalorder %s17, 0
    %p167 = por %p165, %p166
    %p168 = scmp.ne.s32.totalorder %s154, %s155
    %p169 = scmp.eq.s32.totalorder %s18, 15
    %p170 = por %p168, %p169
    %p172 = scmp.ne.s32.totalorder %s155, %s171
    %p173 = scmp.eq.s32.totalorder %s18, 0
    %p174 = por %p172, %p173
    %s175 = ssub.s32 %s20, %s27
    %s176 = ssub.s32 %s19, %s31
    %s177 = sor.u32 %s175, %s176
    %p178 = scmp.eq.s32.totalorder %s177, 0
    %s180 = sadd.s32 %s179, 1
    %s181 = scalar_select %p178, %s179, %s180
    %p184 = pneg %p178
    %p185 = scmp.eq.s32.totalorder %s12, 15
    %p186 = por %p184, %p185
    %p187 = scmp.ne.s32.totalorder %s179, %s182
    %p188 = scmp.eq.s32.totalorder %s12, 0
    %p189 = por %p187, %p188
    %p190 = scmp.ne.s32.totalorder %s179, %s182
    %p191 = scmp.eq.s32.totalorder %s17, 15
    %p192 = por %p190, %p191
    %p193 = scmp.ne.s32.totalorder %s182, %s183
    %p194 = scmp.eq.s32.totalorder %s17, 0
    %p195 = por %p193, %p194
    %p196 = scmp.ne.s32.totalorder %s182, %s183
    %p197 = scmp.eq.s32.totalorder %s18, 15
    %p198 = por %p196, %p197
    %p200 = scmp.ne.s32.totalorder %s183, %s199
    %p201 = scmp.eq.s32.totalorder %s18, 0
    %p202 = por %p200, %p201
    %p203 = scmp.le.s32.totalorder 1, %s12
    %p204 = scmp.lt.s32.totalorder %s12, 17
    %p205 = pnand %p203, %p204
    %p206 = pneg %p205
    // Predicated region
    $region9: #{conv_lstm_forward.1} parent=5 // pred_check
      _
    $region10: #{conv_lstm_forward.1} parent=5 // pred_check_branch
      %208 = sbr.rel (%p205) target = $region12
    $region11: #{conv_lstm_forward.1} parent=5 // pred_region
      %s209 = ssub.s32 %s12, 1
      // Predicated region
      $region13: #{conv_lstm_forward.1} parent=11 // pred_check
        %p210 = pneg %p73
      $region14: #{conv_lstm_forward.1} parent=11 // pred_check_branch
        %212 = sbr.rel (%p210) target = $region16
      $region15: #{conv_lstm_forward.1} parent=11 // pred_region
        _
      $region16: #{conv_lstm_forward.1} parent=11 // pred_fallthru
        _
      // Predicated region
      $region17: #{conv_lstm_forward.1} parent=11 // pred_check
        %p213 = pneg %p94
      $region18: #{conv_lstm_forward.1} parent=11 // pred_check_branch
        %215 = sbr.rel (%p213) target = $region20
      $region19: #{conv_lstm_forward.1} parent=11 // pred_region
        _
      $region20: #{conv_lstm_forward.1} parent=11 // pred_fallthru
        _
      // Predicated region
      $region21: #{conv_lstm_forward.1} parent=11 // pred_check
        %p216 = pneg %p115
      $region22: #{conv_lstm_forward.1} parent=11 // pred_check_branch
        %218 = sbr.rel (%p216) target = $region24
      $region23: #{conv_lstm_forward.1} parent=11 // pred_region
        _
      $region24: #{conv_lstm_forward.1} parent=11 // pred_fallthru
        _
    $region12: #{conv_lstm_forward.1} parent=5 // pred_fallthru
      _
    %p219 = scmp.lt.s32.totalorder %s12, 16
    // Predicated region
    $region25: #{conv_lstm_forward.1} parent=5 // pred_check
      %p220 = pneg %p219
    $region26: #{conv_lstm_forward.1} parent=5 // pred_check_branch
      %222 = sbr.rel (%p220) target = $region28
    $region27: #{conv_lstm_forward.1} parent=5 // pred_region
      // Predicated region
      $region29: #{conv_lstm_forward.1} parent=27 // pred_check
        %p223 = pneg %p46
      $region30: #{conv_lstm_forward.1} parent=27 // pred_check_branch
        %225 = sbr.rel (%p223) target = $region32
      $region31: #{conv_lstm_forward.1} parent=27 // pred_region
        %p226 = scmp.lt.s32.totalorder %s20, 7
        %s227 = scalar_select %p226, %s20, 7
        %p228 = scmp.lt.s32.totalorder %s19, 1
        %s229 = scalar_select %p228, %s19, 1
        %s230 = smul.addr %s229, 32
        %s231 = smul.addr %s227, 64
        %s232 = sadd.s32 %s230, %s231
        %s233 = smul.addr %s232, 8
        %s234 = scalar_lea.vmem %s0, %s233
      $region32: #{conv_lstm_forward.1} parent=27 // pred_fallthru
        _
      // Predicated region
      $region33: #{conv_lstm_forward.1} parent=27 // pred_check
        %p235 = pneg %p135
      $region34: #{conv_lstm_forward.1} parent=27 // pred_check_branch
        %237 = sbr.rel (%p235) target = $region36
      $region35: #{conv_lstm_forward.1} parent=27 // pred_region
        %p238 = scmp.lt.s32.totalorder %s19, 1
        %s239 = scalar_select %p238, %s19, 1
        %s240 = smul.addr %s239, 32
        %s241 = smul.addr %s240, 8
        %s242 = scalar_lea.vmem %s4, %s241
      $region36: #{conv_lstm_forward.1} parent=27 // pred_fallthru
        _
      // Predicated region
      $region37: #{conv_lstm_forward.1} parent=27 // pred_check
        %p243 = pneg %p161
      $region38: #{conv_lstm_forward.1} parent=27 // pred_check_branch
        %245 = sbr.rel (%p243) target = $region40
      $region39: #{conv_lstm_forward.1} parent=27 // pred_region
        %p246 = scmp.lt.s32.totalorder %s19, 1
        %s247 = scalar_select %p246, %s19, 1
        %s248 = smul.addr %s247, 32
        %s249 = smul.addr %s248, 8
        %s250 = scalar_lea.vmem %s5, %s249
      $region40: #{conv_lstm_forward.1} parent=27 // pred_fallthru
        _
    $region28: #{conv_lstm_forward.1} parent=5 // pred_fallthru
      _
    %p251 = scmp.le.s32.totalorder 1, %s12
    %p252 = scmp.lt.s32.totalorder %s12, 17
    %p253 = pnand %p251, %p252
    %p254 = pneg %p253
    // Predicated region
    $region41: #{conv_lstm_forward.1} parent=5 // pred_check
      _
    $region42: #{conv_lstm_forward.1} parent=5 // pred_check_branch
      %256 = sbr.rel (%p253) target = $region44
    $region43: #{conv_lstm_forward.1} parent=5 // pred_region
      %s257 = ssub.s32 %s12, 1
      %p258 = scmp.lt.s32.totalorder %s22, 7
      %s259 = scalar_select %p258, %s22, 7
      %p260 = scmp.lt.s32.totalorder %s21, 1
      %s261 = scalar_select %p260, %s21, 1
      %s262 = smul.addr %s261, 32
      %s263 = smul.addr %s259, 64
      %s264 = sadd.s32 %s262, %s263
      %s265 = smul.addr %s264, 8
      %s266 = scalar_lea.vmem %s0, %s265
      %p267 = pneg %p52
      %p268 = pneg %p49
      %p269 = pneg %p73
      %p270 = pneg %p70
      %p271 = pneg %p94
      %p272 = pneg %p91
      %p273 = pneg %p115
      %p274 = pneg %p112
      %p275 = scmp.lt.s32.totalorder %s21, 1
      %s276 = scalar_select %p275, %s21, 1
      %s277 = smul.addr %s276, 32
      %s278 = smul.addr %s277, 8
      %s279 = scalar_lea.vmem %s4, %s278
      %p280 = pneg %p141
      %p281 = pneg %p138
      %p282 = scmp.lt.s32.totalorder %s21, 1
      %s283 = scalar_select %p282, %s21, 1
      %s284 = smul.addr %s283, 32
      %s285 = smul.addr %s284, 8
      %s286 = scalar_lea.vmem %s5, %s285
      %p287 = pneg %p167
      %p288 = pneg %p164
      %p289 = pneg %p195
      %p290 = pneg %p192
      %p291 = scmp.lt.s32.totalorder %s22, 7
      %s292 = scalar_select %p291, %s22, 7
      %p293 = scmp.lt.s32.totalorder %s21, 1
      %s294 = scalar_select %p293, %s21, 1
      %s295 = smul.addr %s294, 8
      %s296 = smul.addr %s292, 16
      %s297 = sadd.s32 %s295, %s296
      %s298 = smul.addr %s297, 8
      %s299 = scalar_lea.vmem %s6, %s298
      %p300 = scmp.lt.s32.totalorder %s22, 7
      %s301 = scalar_select %p300, %s22, 7
      %p302 = scmp.lt.s32.totalorder %s21, 1
      %s303 = scalar_select %p302, %s21, 1
      %s304 = smul.addr %s303, 32
      %s305 = smul.addr %s301, 64
      %s306 = sadd.s32 %s304, %s305
      %s307 = smul.addr %s306, 8
      %s308 = scalar_lea.vmem %s0, %s307
      %p309 = scmp.lt.s32.totalorder %s21, 1
      %s310 = scalar_select %p309, %s21, 1
      %s311 = smul.addr %s310, 32
      %s312 = smul.addr %s311, 8
      %s313 = scalar_lea.vmem %s4, %s312
      %p314 = scmp.lt.s32.totalorder %s21, 1
      %s315 = scalar_select %p314, %s21, 1
      %s316 = smul.addr %s315, 32
      %s317 = smul.addr %s316, 8
      %s318 = scalar_lea.vmem %s5, %s317
      %p319 = scmp.lt.s32.totalorder %s22, 7
      %s320 = scalar_select %p319, %s22, 7
      %p321 = scmp.lt.s32.totalorder %s21, 1
      %s322 = scalar_select %p321, %s21, 1
      %s323 = smul.addr %s322, 8
      %s324 = smul.addr %s320, 16
      %s325 = sadd.s32 %s323, %s324
      %s326 = smul.addr %s325, 8
      %s327 = scalar_lea.vmem %s6, %s326
      %p328 = scmp.eq.s32.totalorder %s22, 0
      // Predicated region
      $region45: #{conv_lstm_forward.1} parent=43 // pred_check
        %p329 = pneg %p328
      $region46: #{conv_lstm_forward.1} parent=43 // pred_check_branch
        %331 = sbr.rel (%p329) target = $region48
      $region47: #{conv_lstm_forward.1} parent=43 // pred_region
        %vm332 = vcmask 261120
        %333 = vst.msk [vmem:[#allocation2] sm:$0xff] %vm332, 0.0
        %334 = vst.msk [vmem:[#allocation2 + $0x8] sm:$0xff] %vm332, 0.0
        %335 = vst.msk [vmem:[#allocation2 + $0x10] sm:$0xff] %vm332, 0.0
        %336 = vst.msk [vmem:[#allocation2 + $0x18] sm:$0xff] %vm332, 0.0
        %337 = vst.msk [vmem:[#allocation2 + $0x20] sm:$0xff] %vm332, 0.0
        %338 = vst.msk [vmem:[#allocation2 + $0x28] sm:$0xff] %vm332, 0.0
        %339 = vst.msk [vmem:[#allocation2 + $0x30] sm:$0xff] %vm332, 0.0
        %340 = vst.msk [vmem:[#allocation2 + $0x38] sm:$0xff] %vm332, 0.0
        %341 = vst.msk [vmem:[#allocation2 + $0x40] sm:$0xff] %vm332, 0.0
        %342 = vst.msk [vmem:[#allocation2 + $0x48] sm:$0xff] %vm332, 0.0
        %343 = vst.msk [vmem:[#allocation2 + $0x50] sm:$0xff] %vm332, 0.0
        %344 = vst.msk [vmem:[#allocation2 + $0x58] sm:$0xff] %vm332, 0.0
        %345 = vst.msk [vmem:[#allocation2 + $0x60] sm:$0xff] %vm332, 0.0
        %346 = vst.msk [vmem:[#allocation2 + $0x68] sm:$0xff] %vm332, 0.0
        %347 = vst.msk [vmem:[#allocation2 + $0x70] sm:$0xff] %vm332, 0.0
        %348 = vst.msk [vmem:[#allocation2 + $0x78] sm:$0xff] %vm332, 0.0
        %349 = vst.msk [vmem:[#allocation2 + $0x80] sm:$0xff] %vm332, 0.0
        %350 = vst.msk [vmem:[#allocation2 + $0x88] sm:$0xff] %vm332, 0.0
        %351 = vst.msk [vmem:[#allocation2 + $0x90] sm:$0xff] %vm332, 0.0
        %352 = vst.msk [vmem:[#allocation2 + $0x98] sm:$0xff] %vm332, 0.0
        %353 = vst.msk [vmem:[#allocation2 + $0xa0] sm:$0xff] %vm332, 0.0
        %354 = vst.msk [vmem:[#allocation2 + $0xa8] sm:$0xff] %vm332, 0.0
        %355 = vst.msk [vmem:[#allocation2 + $0xb0] sm:$0xff] %vm332, 0.0
        %356 = vst.msk [vmem:[#allocation2 + $0xb8] sm:$0xff] %vm332, 0.0
        %357 = vst.msk [vmem:[#allocation2 + $0xc0] sm:$0xff] %vm332, 0.0
        %358 = vst.msk [vmem:[#allocation2 + $0xc8] sm:$0xff] %vm332, 0.0
        %359 = vst.msk [vmem:[#allocation2 + $0xd0] sm:$0xff] %vm332, 0.0
        %360 = vst.msk [vmem:[#allocation2 + $0xd8] sm:$0xff] %vm332, 0.0
        %361 = vst.msk [vmem:[#allocation2 + $0xe0] sm:$0xff] %vm332, 0.0
        %362 = vst.msk [vmem:[#allocation2 + $0xe8] sm:$0xff] %vm332, 0.0
        %363 = vst.msk [vmem:[#allocation2 + $0xf0] sm:$0xff] %vm332, 0.0
        %364 = vst.msk [vmem:[#allocation2 + $0xf8] sm:$0xff] %vm332, 0.0
        %365 = vst.msk [vmem:[#allocation2 + $0x100] sm:$0xff] %vm332, 0.0
        %366 = vst.msk [vmem:[#allocation2 + $0x108] sm:$0xff] %vm332, 0.0
        %367 = vst.msk [vmem:[#allocation2 + $0x110] sm:$0xff] %vm332, 0.0
        %368 = vst.msk [vmem:[#allocation2 + $0x118] sm:$0xff] %vm332, 0.0
        %369 = vst.msk [vmem:[#allocation2 + $0x120] sm:$0xff] %vm332, 0.0
        %370 = vst.msk [vmem:[#allocation2 + $0x128] sm:$0xff] %vm332, 0.0
        %371 = vst.msk [vmem:[#allocation2 + $0x130] sm:$0xff] %vm332, 0.0
        %372 = vst.msk [vmem:[#allocation2 + $0x138] sm:$0xff] %vm332, 0.0
        %373 = vst.msk [vmem:[#allocation2 + $0x140] sm:$0xff] %vm332, 0.0
        %374 = vst.msk [vmem:[#allocation2 + $0x148] sm:$0xff] %vm332, 0.0
        %375 = vst.msk [vmem:[#allocation2 + $0x150] sm:$0xff] %vm332, 0.0
        %376 = vst.msk [vmem:[#allocation2 + $0x158] sm:$0xff] %vm332, 0.0
        %377 = vst.msk [vmem:[#allocation2 + $0x160] sm:$0xff] %vm332, 0.0
        %378 = vst.msk [vmem:[#allocation2 + $0x168] sm:$0xff] %vm332, 0.0
        %379 = vst.msk [vmem:[#allocation2 + $0x170] sm:$0xff] %vm332, 0.0
        %380 = vst.msk [vmem:[#allocation2 + $0x178] sm:$0xff] %vm332, 0.0
        %381 = vst.msk [vmem:[#allocation2 + $0x180] sm:$0xff] %vm332, 0.0
        %382 = vst.msk [vmem:[#allocation2 + $0x188] sm:$0xff] %vm332, 0.0
        %383 = vst.msk [vmem:[#allocation2 + $0x190] sm:$0xff] %vm332, 0.0
        %384 = vst.msk [vmem:[#allocation2 + $0x198] sm:$0xff] %vm332, 0.0
        %385 = vst.msk [vmem:[#allocation2 + $0x1a0] sm:$0xff] %vm332, 0.0
        %386 = vst.msk [vmem:[#allocation2 + $0x1a8] sm:$0xff] %vm332, 0.0
        %387 = vst.msk [vmem:[#allocation2 + $0x1b0] sm:$0xff] %vm332, 0.0
        %388 = vst.msk [vmem:[#allocation2 + $0x1b8] sm:$0xff] %vm332, 0.0
        %389 = vst.msk [vmem:[#allocation2 + $0x1c0] sm:$0xff] %vm332, 0.0
        %390 = vst.msk [vmem:[#allocation2 + $0x1c8] sm:$0xff] %vm332, 0.0
        %391 = vst.msk [vmem:[#allocation2 + $0x1d0] sm:$0xff] %vm332, 0.0
        %392 = vst.msk [vmem:[#allocation2 + $0x1d8] sm:$0xff] %vm332, 0.0
        %393 = vst.msk [vmem:[#allocation2 + $0x1e0] sm:$0xff] %vm332, 0.0
        %394 = vst.msk [vmem:[#allocation2 + $0x1e8] sm:$0xff] %vm332, 0.0
        %395 = vst.msk [vmem:[#allocation2 + $0x1f0] sm:$0xff] %vm332, 0.0
        %396 = vst.msk [vmem:[#allocation2 + $0x1f8] sm:$0xff] %vm332, 0.0
        %397 = vst.msk [vmem:[#allocation2 + $0x200] sm:$0xff] %vm332, 0.0
        %398 = vst.msk [vmem:[#allocation2 + $0x208] sm:$0xff] %vm332, 0.0
        %399 = vst.msk [vmem:[#allocation2 + $0x210] sm:$0xff] %vm332, 0.0
        %400 = vst.msk [vmem:[#allocation2 + $0x218] sm:$0xff] %vm332, 0.0
        %401 = vst.msk [vmem:[#allocation2 + $0x220] sm:$0xff] %vm332, 0.0
        %402 = vst.msk [vmem:[#allocation2 + $0x228] sm:$0xff] %vm332, 0.0
        %403 = vst.msk [vmem:[#allocation2 + $0x230] sm:$0xff] %vm332, 0.0
        %404 = vst.msk [vmem:[#allocation2 + $0x238] sm:$0xff] %vm332, 0.0
        %v405 = vld [vmem:[%s313] sm:$0xff]
        %v406 = vld [vmem:[%s313 + $0x8] sm:$0xff]
        %v407 = vld [vmem:[%s313 + $0x10] sm:$0xff]
        %v408 = vld [vmem:[%s313 + $0x18] sm:$0xff]
        %v409 = vld [vmem:[%s313 + $0x20] sm:$0xff]
        %v410 = vld [vmem:[%s313 + $0x28] sm:$0xff]
        %v411 = vld [vmem:[%s313 + $0x30] sm:$0xff]
        %v412 = vld [vmem:[%s313 + $0x38] sm:$0xff]
        %v413 = vld [vmem:[%s313 + $0x40] sm:$0xff]
        %v414 = vld [vmem:[%s313 + $0x48] sm:$0xff]
        %v415 = vld [vmem:[%s313 + $0x50] sm:$0xff]
        %v416 = vld [vmem:[%s313 + $0x58] sm:$0xff]
        %v417 = vld [vmem:[%s313 + $0x60] sm:$0xff]
        %v418 = vld [vmem:[%s313 + $0x68] sm:$0xff]
        %v419 = vld [vmem:[%s313 + $0x70] sm:$0xff]
        %v420 = vld [vmem:[%s313 + $0x78] sm:$0xff]
        %v421 = vld [vmem:[%s313 + $0x80] sm:$0xff]
        %v422 = vld [vmem:[%s313 + $0x88] sm:$0xff]
        %v423 = vld [vmem:[%s313 + $0x90] sm:$0xff]
        %v424 = vld [vmem:[%s313 + $0x98] sm:$0xff]
        %v425 = vld [vmem:[%s313 + $0xa0] sm:$0xff]
        %v426 = vld [vmem:[%s313 + $0xa8] sm:$0xff]
        %v427 = vld [vmem:[%s313 + $0xb0] sm:$0xff]
        %v428 = vld [vmem:[%s313 + $0xb8] sm:$0xff]
        %v429 = vld [vmem:[%s313 + $0xc0] sm:$0xff]
        %v430 = vld [vmem:[%s313 + $0xc8] sm:$0xff]
        %v431 = vld [vmem:[%s313 + $0xd0] sm:$0xff]
        %v432 = vld [vmem:[%s313 + $0xd8] sm:$0xff]
        %v433 = vld [vmem:[%s313 + $0xe0] sm:$0xff]
        %v434 = vld [vmem:[%s313 + $0xe8] sm:$0xff]
        %v435 = vld [vmem:[%s313 + $0xf0] sm:$0xff]
        %v436 = vld [vmem:[%s313 + $0xf8] sm:$0xff]
        %s437 = scalar_lea.vmem [#allocation2], 32
        %438 = vst.msk [vmem:[%s437 + $0x8] sm:$0xff] %vm332, %v405
        %439 = vst.msk [vmem:[%s437 + $0x10] sm:$0xff] %vm332, %v406
        %440 = vst.msk [vmem:[%s437 + $0x28] sm:$0xff] %vm332, %v407
        %441 = vst.msk [vmem:[%s437 + $0x30] sm:$0xff] %vm332, %v408
        %442 = vst.msk [vmem:[%s437 + $0x48] sm:$0xff] %vm332, %v409
        %443 = vst.msk [vmem:[%s437 + $0x50] sm:$0xff] %vm332, %v410
        %444 = vst.msk [vmem:[%s437 + $0x68] sm:$0xff] %vm332, %v411
        %445 = vst.msk [vmem:[%s437 + $0x70] sm:$0xff] %vm332, %v412
        %446 = vst.msk [vmem:[%s437 + $0x88] sm:$0xff] %vm332, %v413
        %447 = vst.msk [vmem:[%s437 + $0x90] sm:$0xff] %vm332, %v414
        %448 = vst.msk [vmem:[%s437 + $0xa8] sm:$0xff] %vm332, %v415
        %449 = vst.msk [vmem:[%s437 + $0xb0] sm:$0xff] %vm332, %v416
        %450 = vst.msk [vmem:[%s437 + $0xc8] sm:$0xff] %vm332, %v417
        %451 = vst.msk [vmem:[%s437 + $0xd0] sm:$0xff] %vm332, %v418
        %452 = vst.msk [vmem:[%s437 + $0xe8] sm:$0xff] %vm332, %v419
        %453 = vst.msk [vmem:[%s437 + $0xf0] sm:$0xff] %vm332, %v420
        %454 = vst.msk [vmem:[%s437 + $0x108] sm:$0xff] %vm332, %v421
        %455 = vst.msk [vmem:[%s437 + $0x110] sm:$0xff] %vm332, %v422
        %456 = vst.msk [vmem:[%s437 + $0x128] sm:$0xff] %vm332, %v423
        %457 = vst.msk [vmem:[%s437 + $0x130] sm:$0xff] %vm332, %v424
        %458 = vst.msk [vmem:[%s437 + $0x148] sm:$0xff] %vm332, %v425
        %459 = vst.msk [vmem:[%s437 + $0x150] sm:$0xff] %vm332, %v426
        %460 = vst.msk [vmem:[%s437 + $0x168] sm:$0xff] %vm332, %v427
        %461 = vst.msk [vmem:[%s437 + $0x170] sm:$0xff] %vm332, %v428
        %462 = vst.msk [vmem:[%s437 + $0x188] sm:$0xff] %vm332, %v429
        %463 = vst.msk [vmem:[%s437 + $0x190] sm:$0xff] %vm332, %v430
        %464 = vst.msk [vmem:[%s437 + $0x1a8] sm:$0xff] %vm332, %v431
        %465 = vst.msk [vmem:[%s437 + $0x1b0] sm:$0xff] %vm332, %v432
        %466 = vst.msk [vmem:[%s437 + $0x1c8] sm:$0xff] %vm332, %v433
        %467 = vst.msk [vmem:[%s437 + $0x1d0] sm:$0xff] %vm332, %v434
        %468 = vst.msk [vmem:[%s437 + $0x1e8] sm:$0xff] %vm332, %v435
        %469 = vst.msk [vmem:[%s437 + $0x1f0] sm:$0xff] %vm332, %v436
        %v470 = vld [vmem:[%s318] sm:$0xff]
        %v471 = vld [vmem:[%s318 + $0x8] sm:$0xff]
        %v472 = vld [vmem:[%s318 + $0x10] sm:$0xff]
        %v473 = vld [vmem:[%s318 + $0x18] sm:$0xff]
        %v474 = vld [vmem:[%s318 + $0x20] sm:$0xff]
        %v475 = vld [vmem:[%s318 + $0x28] sm:$0xff]
        %v476 = vld [vmem:[%s318 + $0x30] sm:$0xff]
        %v477 = vld [vmem:[%s318 + $0x38] sm:$0xff]
        %v478 = vld [vmem:[%s318 + $0x40] sm:$0xff]
        %v479 = vld [vmem:[%s318 + $0x48] sm:$0xff]
        %v480 = vld [vmem:[%s318 + $0x50] sm:$0xff]
        %v481 = vld [vmem:[%s318 + $0x58] sm:$0xff]
        %v482 = vld [vmem:[%s318 + $0x60] sm:$0xff]
        %v483 = vld [vmem:[%s318 + $0x68] sm:$0xff]
        %v484 = vld [vmem:[%s318 + $0x70] sm:$0xff]
        %v485 = vld [vmem:[%s318 + $0x78] sm:$0xff]
        %v486 = vld [vmem:[%s318 + $0x80] sm:$0xff]
        %v487 = vld [vmem:[%s318 + $0x88] sm:$0xff]
        %v488 = vld [vmem:[%s318 + $0x90] sm:$0xff]
        %v489 = vld [vmem:[%s318 + $0x98] sm:$0xff]
        %v490 = vld [vmem:[%s318 + $0xa0] sm:$0xff]
        %v491 = vld [vmem:[%s318 + $0xa8] sm:$0xff]
        %v492 = vld [vmem:[%s318 + $0xb0] sm:$0xff]
        %v493 = vld [vmem:[%s318 + $0xb8] sm:$0xff]
        %v494 = vld [vmem:[%s318 + $0xc0] sm:$0xff]
        %v495 = vld [vmem:[%s318 + $0xc8] sm:$0xff]
        %v496 = vld [vmem:[%s318 + $0xd0] sm:$0xff]
        %v497 = vld [vmem:[%s318 + $0xd8] sm:$0xff]
        %v498 = vld [vmem:[%s318 + $0xe0] sm:$0xff]
        %v499 = vld [vmem:[%s318 + $0xe8] sm:$0xff]
        %v500 = vld [vmem:[%s318 + $0xf0] sm:$0xff]
        %v501 = vld [vmem:[%s318 + $0xf8] sm:$0xff]
        %502 = vst.msk [vmem:[#allocation3] sm:$0xff] %vm332, %v470
        %503 = vst.msk [vmem:[#allocation3 + $0x8] sm:$0xff] %vm332, %v471
        %504 = vst.msk [vmem:[#allocation3 + $0x10] sm:$0xff] %vm332, %v472
        %505 = vst.msk [vmem:[#allocation3 + $0x18] sm:$0xff] %vm332, %v473
        %506 = vst.msk [vmem:[#allocation3 + $0x20] sm:$0xff] %vm332, %v474
        %507 = vst.msk [vmem:[#allocation3 + $0x28] sm:$0xff] %vm332, %v475
        %508 = vst.msk [vmem:[#allocation3 + $0x30] sm:$0xff] %vm332, %v476
        %509 = vst.msk [vmem:[#allocation3 + $0x38] sm:$0xff] %vm332, %v477
        %510 = vst.msk [vmem:[#allocation3 + $0x40] sm:$0xff] %vm332, %v478
        %511 = vst.msk [vmem:[#allocation3 + $0x48] sm:$0xff] %vm332, %v479
        %512 = vst.msk [vmem:[#allocation3 + $0x50] sm:$0xff] %vm332, %v480
        %513 = vst.msk [vmem:[#allocation3 + $0x58] sm:$0xff] %vm332, %v481
        %514 = vst.msk [vmem:[#allocation3 + $0x60] sm:$0xff] %vm332, %v482
        %515 = vst.msk [vmem:[#allocation3 + $0x68] sm:$0xff] %vm332, %v483
        %516 = vst.msk [vmem:[#allocation3 + $0x70] sm:$0xff] %vm332, %v484
        %517 = vst.msk [vmem:[#allocation3 + $0x78] sm:$0xff] %vm332, %v485
        %518 = vst.msk [vmem:[#allocation3 + $0x80] sm:$0xff] %vm332, %v486
        %519 = vst.msk [vmem:[#allocation3 + $0x88] sm:$0xff] %vm332, %v487
        %520 = vst.msk [vmem:[#allocation3 + $0x90] sm:$0xff] %vm332, %v488
        %521 = vst.msk [vmem:[#allocation3 + $0x98] sm:$0xff] %vm332, %v489
        %522 = vst.msk [vmem:[#allocation3 + $0xa0] sm:$0xff] %vm332, %v490
        %523 = vst.msk [vmem:[#allocation3 + $0xa8] sm:$0xff] %vm332, %v491
        %524 = vst.msk [vmem:[#allocation3 + $0xb0] sm:$0xff] %vm332, %v492
        %525 = vst.msk [vmem:[#allocation3 + $0xb8] sm:$0xff] %vm332, %v493
        %526 = vst.msk [vmem:[#allocation3 + $0xc0] sm:$0xff] %vm332, %v494
        %527 = vst.msk [vmem:[#allocation3 + $0xc8] sm:$0xff] %vm332, %v495
        %528 = vst.msk [vmem:[#allocation3 + $0xd0] sm:$0xff] %vm332, %v496
        %529 = vst.msk [vmem:[#allocation3 + $0xd8] sm:$0xff] %vm332, %v497
        %530 = vst.msk [vmem:[#allocation3 + $0xe0] sm:$0xff] %vm332, %v498
        %531 = vst.msk [vmem:[#allocation3 + $0xe8] sm:$0xff] %vm332, %v499
        %532 = vst.msk [vmem:[#allocation3 + $0xf0] sm:$0xff] %vm332, %v500
        %533 = vst.msk [vmem:[#allocation3 + $0xf8] sm:$0xff] %vm332, %v501
      $region48: #{conv_lstm_forward.1} parent=43 // pred_fallthru
        _
      %v534 = vld [vmem:[%s308] sm:$0xff]
      %v535 = vld [vmem:[%s308 + $0x8] sm:$0xff]
      %v536 = vld [vmem:[%s308 + $0x10] sm:$0xff]
      %v537 = vld [vmem:[%s308 + $0x18] sm:$0xff]
      %v538 = vld [vmem:[%s308 + $0x20] sm:$0xff]
      %v539 = vld [vmem:[%s308 + $0x28] sm:$0xff]
      %v540 = vld [vmem:[%s308 + $0x30] sm:$0xff]
      %v541 = vld [vmem:[%s308 + $0x38] sm:$0xff]
      %v542 = vld [vmem:[%s308 + $0x40] sm:$0xff]
      %v543 = vld [vmem:[%s308 + $0x48] sm:$0xff]
      %v544 = vld [vmem:[%s308 + $0x50] sm:$0xff]
      %v545 = vld [vmem:[%s308 + $0x58] sm:$0xff]
      %v546 = vld [vmem:[%s308 + $0x60] sm:$0xff]
      %v547 = vld [vmem:[%s308 + $0x68] sm:$0xff]
      %v548 = vld [vmem:[%s308 + $0x70] sm:$0xff]
      %v549 = vld [vmem:[%s308 + $0x78] sm:$0xff]
      %v550 = vld [vmem:[%s308 + $0x80] sm:$0xff]
      %v551 = vld [vmem:[%s308 + $0x88] sm:$0xff]
      %v552 = vld [vmem:[%s308 + $0x90] sm:$0xff]
      %v553 = vld [vmem:[%s308 + $0x98] sm:$0xff]
      %v554 = vld [vmem:[%s308 + $0xa0] sm:$0xff]
      %v555 = vld [vmem:[%s308 + $0xa8] sm:$0xff]
      %v556 = vld [vmem:[%s308 + $0xb0] sm:$0xff]
      %v557 = vld [vmem:[%s308 + $0xb8] sm:$0xff]
      %v558 = vld [vmem:[%s308 + $0xc0] sm:$0xff]
      %v559 = vld [vmem:[%s308 + $0xc8] sm:$0xff]
      %v560 = vld [vmem:[%s308 + $0xd0] sm:$0xff]
      %v561 = vld [vmem:[%s308 + $0xd8] sm:$0xff]
      %v562 = vld [vmem:[%s308 + $0xe0] sm:$0xff]
      %v563 = vld [vmem:[%s308 + $0xe8] sm:$0xff]
      %v564 = vld [vmem:[%s308 + $0xf0] sm:$0xff]
      %v565 = vld [vmem:[%s308 + $0xf8] sm:$0xff]
      %v566 = vld [vmem:[%s1] sm:$0xff]
      %v567 = vld [vmem:[%s1 + $0x8] sm:$0xff]
      %v568 = vld [vmem:[%s1 + $0x10] sm:$0xff]
      %v569 = vld [vmem:[%s1 + $0x18] sm:$0xff]
      %v570 = vld [vmem:[%s1 + $0x20] sm:$0xf]
      %v571 = vld [vmem:[%s2] sm:$0x1]
      %v573 = vlaneseq
      %v574 = vshrl.u32 %v573, 7
      %v575 = vsub.s32 0, %v574
      %v576 = vrot.slane %v571, %v575
      %vm578 = vcmask 293888
      %v580 = vsel %vm578, %v534, 0
      %v583 = vsel %vm578, %v535, 0
      %v586 = vsel %vm578, %v536, 0
      %v589 = vsel %vm578, %v537, 0
      %v592 = vsel %vm578, %v538, 0
      %v595 = vsel %vm578, %v539, 0
      %v598 = vsel %vm578, %v540, 0
      %v601 = vsel %vm578, %v541, 0
      %v604 = vsel %vm578, %v542, 0
      %v607 = vsel %vm578, %v543, 0
      %v610 = vsel %vm578, %v544, 0
      %v613 = vsel %vm578, %v545, 0
      %v616 = vsel %vm578, %v546, 0
      %v619 = vsel %vm578, %v547, 0
      %v622 = vsel %vm578, %v548, 0
      %v625 = vsel %vm578, %v549, 0
      %v628 = vsel %vm578, %v550, 0
      %v631 = vsel %vm578, %v551, 0
      %v634 = vsel %vm578, %v552, 0
      %v637 = vsel %vm578, %v553, 0
      %v640 = vsel %vm578, %v554, 0
      %v643 = vsel %vm578, %v555, 0
      %v646 = vsel %vm578, %v556, 0
      %v649 = vsel %vm578, %v557, 0
      %v652 = vsel %vm578, %v558, 0
      %v655 = vsel %vm578, %v559, 0
      %v658 = vsel %vm578, %v560, 0
      %v661 = vsel %vm578, %v561, 0
      %v664 = vsel %vm578, %v562, 0
      %v667 = vsel %vm578, %v563, 0
      %v670 = vsel %vm578, %v564, 0
      %v673 = vsel %vm578, %v565, 0
      %vm675 = vcmask 1043456
      %v677 = vsel %vm675, %v570, 0
      %679 = vmatprep.subr.mxu0 0.0
      %680 = vmatpush1.msra.mxu0 %v566
      %681 = vmatprep.subr.mxu0 0.0
      %682 = vmatpush1.msra.mxu0 %v567
      %683 = vmatprep.subr.mxu0 0.0
      %684 = vmatpush1.msra.mxu0 %v568
      %685 = vmatprep.subr.mxu0 0.0
      %686 = vmatpush1.msra.mxu0 %v569
      %687 = vmatprep.subr.mxu0 0.0
      %688 = vmatpush1.msra.mxu0 %v677
      %689 = vmatprep.subr.mxu0 0.0
      %690 = vmatpush1.msra.mxu0 0.0
      %691 = vmatprep.subr.mxu0 0.0
      %692 = vmatpush1.msra.mxu0 0.0
      %693 = vmatprep.subr.mxu0 0.0
      %694 = vmatpush1.msra.mxu0 0.0
      %695 = vmatprep.subr.mxu0 0.0
      %696 = vmatpush1.msra.mxu0 0.0
      %697 = vmatprep.subr.mxu0 0.0
      %698 = vmatpush1.msra.mxu0 0.0
      %699 = vmatprep.subr.mxu0 0.0
      %700 = vmatpush1.msra.mxu0 0.0
      %701 = vmatprep.subr.mxu0 0.0
      %702 = vmatpush1.msra.mxu0 0.0
      %703 = vmatprep.subr.mxu0 0.0
      %704 = vmatpush1.msra.mxu0 0.0
      %705 = vmatprep.subr.mxu0 0.0
      %706 = vmatpush1.msra.mxu0 0.0
      %707 = vmatprep.subr.mxu0 0.0
      %708 = vmatpush1.msra.mxu0 0.0
      %709 = vmatprep.subr.mxu0 0.0
      %710 = vmatpush1.msra.mxu0 0.0
      %711 = vmatprep.subr.mxu0 0.0
      %712 = vmatpush1.msra.mxu0 0.0
      %713 = vmatprep.subr.mxu0 0.0
      %714 = vmatpush1.msra.mxu0 0.0
      %715 = vmatprep.subr.mxu0 0.0
      %716 = vmatpush1.msra.mxu0 0.0
      %717 = vmatprep.subr.mxu0 0.0
      %718 = vmatpush1.msra.mxu0 0.0
      %719 = vmatprep.subr.mxu0 0.0
      %720 = vmatpush1.msra.mxu0 0.0
      %721 = vmatprep.subr.mxu0 0.0
      %722 = vmatpush1.msra.mxu0 0.0
      %723 = vmatprep.subr.mxu0 0.0
      %724 = vmatpush1.msra.mxu0 0.0
      %725 = vmatprep.subr.mxu0 0.0
      %726 = vmatpush1.msra.mxu0 0.0
      %727 = vmatprep.subr.mxu0 0.0
      %728 = vmatpush1.msra.mxu0 0.0
      %729 = vmatprep.subr.mxu0 0.0
      %730 = vmatpush1.msra.mxu0 0.0
      %731 = vmatprep.subr.mxu0 0.0
      %732 = vmatpush1.msra.mxu0 0.0
      %733 = vmatprep.subr.mxu0 0.0
      %734 = vmatpush1.msra.mxu0 0.0
      %735 = vmatprep.subr.mxu0 0.0
      %736 = vmatpush1.msra.mxu0 0.0
      %737 = vmatprep.subr.mxu0 0.0
      %738 = vmatpush1.msra.mxu0 0.0
      %739 = vmatprep.subr.mxu0 0.0
      %740 = vmatpush1.msra.mxu0 0.0
      %741 = vmatprep.subr.mxu0 0.0
      %742 = vmatpush1.msra.mxu0 0.0
      %743 = vmatprep.mubr.f32.mxu0 0.0
      %744 = vmatmul.mubr.f32.gmra.mrb[0].mxu0 %v580
      %v745 = vpop.f32.mrb[0].mxu0
      %v746 = vadd.f32 %v576, %v745
      %v747 = vpop.f32.mrb[0].mxu0
      %748 = vmatprep.mubr.f32.mxu0 0.0
      %749 = vmatmul.mubr.f32.gmra.mrb[0].mxu0 %v583
      %v750 = vpop.f32.mrb[0].mxu0
      %v751 = vadd.f32 %v576, %v750
      %v752 = vpop.f32.mrb[0].mxu0
      %753 = vmatprep.mubr.f32.mxu0 0.0
      %754 = vmatmul.mubr.f32.gmra.mrb[0].mxu0 %v586
      %v755 = vpop.f32.mrb[0].mxu0
      %v756 = vadd.f32 %v576, %v755
      %v757 = vpop.f32.mrb[0].mxu0
      %758 = vmatprep.mubr.f32.mxu0 0.0
      %759 = vmatmul.mubr.f32.gmra.mrb[0].mxu0 %v589
      %v760 = vpop.f32.mrb[0].mxu0
      %v761 = vadd.f32 %v576, %v760
      %v762 = vpop.f32.mrb[0].mxu0
      %763 = vmatprep.mubr.f32.mxu0 0.0
      %764 = vmatmul.mubr.f32.gmra.mrb[0].mxu0 %v592
      %v765 = vpop.f32.mrb[0].mxu0
      %v766 = vadd.f32 %v576, %v765
      %v767 = vpop.f32.mrb[0].mxu0
      %768 = vmatprep.mubr.f32.mxu0 0.0
      %769 = vmatmul.mubr.f32.gmra.mrb[0].mxu0 %v595
      %v770 = vpop.f32.mrb[0].mxu0
      %v771 = vadd.f32 %v576, %v770
      %v772 = vpop.f32.mrb[0].mxu0
      %773 = vmatprep.mubr.f32.mxu0 0.0
      %774 = vmatmul.mubr.f32.gmra.mrb[0].mxu0 %v598
      %v775 = vpop.f32.mrb[0].mxu0
      %v776 = vadd.f32 %v576, %v775
      %v777 = vpop.f32.mrb[0].mxu0
      %778 = vmatprep.mubr.f32.mxu0 0.0
      %779 = vmatmul.mubr.f32.gmra.mrb[0].mxu0 %v601
      %v780 = vpop.f32.mrb[0].mxu0
      %v781 = vadd.f32 %v576, %v780
      %v782 = vpop.f32.mrb[0].mxu0
      %783 = vmatprep.mubr.f32.mxu0 0.0
      %784 = vmatmul.mubr.f32.gmra.mrb[0].mxu0 %v604
      %v785 = vpop.f32.mrb[0].mxu0
      %v786 = vadd.f32 %v576, %v785
      %v787 = vpop.f32.mrb[0].mxu0
      %788 = vmatprep.mubr.f32.mxu0 0.0
      %789 = vmatmul.mubr.f32.gmra.mrb[0].mxu0 %v607
      %v790 = vpop.f32.mrb[0].mxu0
      %v791 = vadd.f32 %v576, %v790
      %v792 = vpop.f32.mrb[0].mxu0
      %793 = vmatprep.mubr.f32.mxu0 0.0
      %794 = vmatmul.mubr.f32.gmra.mrb[0].mxu0 %v610
      %v795 = vpop.f32.mrb[0].mxu0
      %v796 = vadd.f32 %v576, %v795
      %v797 = vpop.f32.mrb[0].mxu0
      %798 = vmatprep.mubr.f32.mxu0 0.0
      %799 = vmatmul.mubr.f32.gmra.mrb[0].mxu0 %v613
      %v800 = vpop.f32.mrb[0].mxu0
      %v801 = vadd.f32 %v576, %v800
      %v802 = vpop.f32.mrb[0].mxu0
      %803 = vmatprep.mubr.f32.mxu0 0.0
      %804 = vmatmul.mubr.f32.gmra.mrb[0].mxu0 %v616
      %v805 = vpop.f32.mrb[0].mxu0
      %v806 = vadd.f32 %v576, %v805
      %v807 = vpop.f32.mrb[0].mxu0
      %808 = vmatprep.mubr.f32.mxu0 0.0
      %809 = vmatmul.mubr.f32.gmra.mrb[0].mxu0 %v619
      %v810 = vpop.f32.mrb[0].mxu0
      %v811 = vadd.f32 %v576, %v810
      %v812 = vpop.f32.mrb[0].mxu0
      %813 = vmatprep.mubr.f32.mxu0 0.0
      %814 = vmatmul.mubr.f32.gmra.mrb[0].mxu0 %v622
      %v815 = vpop.f32.mrb[0].mxu0
      %v816 = vadd.f32 %v576, %v815
      %v817 = vpop.f32.mrb[0].mxu0
      %818 = vmatprep.mubr.f32.mxu0 0.0
      %819 = vmatmul.mubr.f32.gmra.mrb[0].mxu0 %v625
      %v820 = vpop.f32.mrb[0].mxu0
      %v821 = vadd.f32 %v576, %v820
      %v822 = vpop.f32.mrb[0].mxu0
      %823 = vmatprep.mubr.f32.mxu0 0.0
      %824 = vmatmul.mubr.f32.gmra.mrb[0].mxu0 %v628
      %v825 = vpop.f32.mrb[0].mxu0
      %v826 = vadd.f32 %v576, %v825
      %v827 = vpop.f32.mrb[0].mxu0
      %828 = vmatprep.mubr.f32.mxu0 0.0
      %829 = vmatmul.mubr.f32.gmra.mrb[0].mxu0 %v631
      %v830 = vpop.f32.mrb[0].mxu0
      %v831 = vadd.f32 %v576, %v830
      %v832 = vpop.f32.mrb[0].mxu0
      %833 = vmatprep.mubr.f32.mxu0 0.0
      %834 = vmatmul.mubr.f32.gmra.mrb[0].mxu0 %v634
      %v835 = vpop.f32.mrb[0].mxu0
      %v836 = vadd.f32 %v576, %v835
      %v837 = vpop.f32.mrb[0].mxu0
      %838 = vmatprep.mubr.f32.mxu0 0.0
      %839 = vmatmul.mubr.f32.gmra.mrb[0].mxu0 %v637
      %v840 = vpop.f32.mrb[0].mxu0
      %v841 = vadd.f32 %v576, %v840
      %v842 = vpop.f32.mrb[0].mxu0
      %843 = vmatprep.mubr.f32.mxu0 0.0
      %844 = vmatmul.mubr.f32.gmra.mrb[0].mxu0 %v640
      %v845 = vpop.f32.mrb[0].mxu0
      %v846 = vadd.f32 %v576, %v845
      %v847 = vpop.f32.mrb[0].mxu0
      %848 = vmatprep.mubr.f32.mxu0 0.0
      %849 = vmatmul.mubr.f32.gmra.mrb[0].mxu0 %v643
      %v850 = vpop.f32.mrb[0].mxu0
      %v851 = vadd.f32 %v576, %v850
      %v852 = vpop.f32.mrb[0].mxu0
      %853 = vmatprep.mubr.f32.mxu0 0.0
      %854 = vmatmul.mubr.f32.gmra.mrb[0].mxu0 %v646
      %v855 = vpop.f32.mrb[0].mxu0
      %v856 = vadd.f32 %v576, %v855
      %v857 = vpop.f32.mrb[0].mxu0
      %858 = vmatprep.mubr.f32.mxu0 0.0
      %859 = vmatmul.mubr.f32.gmra.mrb[0].mxu0 %v649
      %v860 = vpop.f32.mrb[0].mxu0
      %v861 = vadd.f32 %v576, %v860
      %v862 = vpop.f32.mrb[0].mxu0
      %863 = vmatprep.mubr.f32.mxu0 0.0
      %864 = vmatmul.mubr.f32.gmra.mrb[0].mxu0 %v652
      %v865 = vpop.f32.mrb[0].mxu0
      %v866 = vadd.f32 %v576, %v865
      %v867 = vpop.f32.mrb[0].mxu0
      %868 = vmatprep.mubr.f32.mxu0 0.0
      %869 = vmatmul.mubr.f32.gmra.mrb[0].mxu0 %v655
      %v870 = vpop.f32.mrb[0].mxu0
      %v871 = vadd.f32 %v576, %v870
      %v872 = vpop.f32.mrb[0].mxu0
      %873 = vmatprep.mubr.f32.mxu0 0.0
      %874 = vmatmul.mubr.f32.gmra.mrb[0].mxu0 %v658
      %v875 = vpop.f32.mrb[0].mxu0
      %v876 = vadd.f32 %v576, %v875
      %v877 = vpop.f32.mrb[0].mxu0
      %878 = vmatprep.mubr.f32.mxu0 0.0
      %879 = vmatmul.mubr.f32.gmra.mrb[0].mxu0 %v661
      %v880 = vpop.f32.mrb[0].mxu0
      %v881 = vadd.f32 %v576, %v880
      %v882 = vpop.f32.mrb[0].mxu0
      %883 = vmatprep.mubr.f32.mxu0 0.0
      %884 = vmatmul.mubr.f32.gmra.mrb[0].mxu0 %v664
      %v885 = vpop.f32.mrb[0].mxu0
      %v886 = vadd.f32 %v576, %v885
      %v887 = vpop.f32.mrb[0].mxu0
      %888 = vmatprep.mubr.f32.mxu0 0.0
      %889 = vmatmul.mubr.f32.gmra.mrb[0].mxu0 %v667
      %v890 = vpop.f32.mrb[0].mxu0
      %v891 = vadd.f32 %v576, %v890
      %v892 = vpop.f32.mrb[0].mxu0
      %893 = vmatprep.mubr.f32.mxu0 0.0
      %894 = vmatmul.mubr.f32.gmra.mrb[0].mxu0 %v670
      %v895 = vpop.f32.mrb[0].mxu0
      %v896 = vadd.f32 %v576, %v895
      %v897 = vpop.f32.mrb[0].mxu0
      %898 = vmatprep.mubr.f32.mxu0 0.0
      %899 = vmatmul.mubr.f32.gmra.mrb[0].mxu0 %v673
      %v900 = vpop.f32.mrb[0].mxu0
      %v901 = vadd.f32 %v576, %v900
      %v902 = vpop.f32.mrb[0].mxu0
      %903 = vdwg.mxu0
      %v904 = vld [vmem:[#allocation2] sm:$0xff]
      %v905 = vld [vmem:[#allocation2 + $0x8] sm:$0xff]
      %v906 = vld [vmem:[#allocation2 + $0x10] sm:$0xff]
      %v907 = vld [vmem:[#allocation2 + $0x18] sm:$0xff]
      %v908 = vld [vmem:[#allocation2 + $0x20] sm:$0xff]
      %v909 = vld [vmem:[#allocation2 + $0x28] sm:$0xff]
      %v910 = vld [vmem:[#allocation2 + $0x30] sm:$0xff]
      %v911 = vld [vmem:[#allocation2 + $0x38] sm:$0xff]
      %v912 = vld [vmem:[#allocation2 + $0x40] sm:$0xff]
      %v913 = vld [vmem:[#allocation2 + $0x48] sm:$0xff]
      %v914 = vld [vmem:[#allocation2 + $0x50] sm:$0xff]
      %v915 = vld [vmem:[#allocation2 + $0x58] sm:$0xff]
      %v916 = vld [vmem:[#allocation2 + $0x60] sm:$0xff]
      %v917 = vld [vmem:[#allocation2 + $0x68] sm:$0xff]
      %v918 = vld [vmem:[#allocation2 + $0x70] sm:$0xff]
      %v919 = vld [vmem:[#allocation2 + $0x78] sm:$0xff]
      %v920 = vld [vmem:[#allocation2 + $0x80] sm:$0xff]
      %v921 = vld [vmem:[#allocation2 + $0x88] sm:$0xff]
      %v922 = vld [vmem:[#allocation2 + $0x90] sm:$0xff]
      %v923 = vld [vmem:[#allocation2 + $0x98] sm:$0xff]
      %v924 = vld [vmem:[#allocation2 + $0xa0] sm:$0xff]
      %v925 = vld [vmem:[#allocation2 + $0xa8] sm:$0xff]
      %v926 = vld [vmem:[#allocation2 + $0xb0] sm:$0xff]
      %v927 = vld [vmem:[#allocation2 + $0xb8] sm:$0xff]
      %v928 = vld [vmem:[#allocation2 + $0xc0] sm:$0xff]
      %v929 = vld [vmem:[#allocation2 + $0xc8] sm:$0xff]
      %v930 = vld [vmem:[#allocation2 + $0xd0] sm:$0xff]
      %v931 = vld [vmem:[#allocation2 + $0xd8] sm:$0xff]
      %v932 = vld [vmem:[#allocation2 + $0xe0] sm:$0xff]
      %v933 = vld [vmem:[#allocation2 + $0xe8] sm:$0xff]
      %v934 = vld [vmem:[#allocation2 + $0xf0] sm:$0xff]
      %v935 = vld [vmem:[#allocation2 + $0xf8] sm:$0xff]
      %v936 = vld [vmem:[#allocation2 + $0x100] sm:$0xff]
      %v937 = vld [vmem:[#allocation2 + $0x108] sm:$0xff]
      %v938 = vld [vmem:[#allocation2 + $0x110] sm:$0xff]
      %v939 = vld [vmem:[#allocation2 + $0x118] sm:$0xff]
      %v940 = vld [vmem:[#allocation2 + $0x120] sm:$0xff]
      %v941 = vld [vmem:[#allocation2 + $0x128] sm:$0xff]
      %v942 = vld [vmem:[#allocation2 + $0x130] sm:$0xff]
      %v943 = vld [vmem:[#allocation2 + $0x138] sm:$0xff]
      %v944 = vld [vmem:[#allocation2 + $0x140] sm:$0xff]
      %v945 = vld [vmem:[#allocation2 + $0x148] sm:$0xff]
      %v946 = vld [vmem:[#allocation2 + $0x150] sm:$0xff]
      %v947 = vld [vmem:[#allocation2 + $0x158] sm:$0xff]
      %v948 = vld [vmem:[#allocation2 + $0x160] sm:$0xff]
      %v949 = vld [vmem:[#allocation2 + $0x168] sm:$0xff]
      %v950 = vld [vmem:[#allocation2 + $0x170] sm:$0xff]
      %v951 = vld [vmem:[#allocation2 + $0x178] sm:$0xff]
      %v952 = vld [vmem:[#allocation2 + $0x180] sm:$0xff]
      %v953 = vld [vmem:[#allocation2 + $0x188] sm:$0xff]
      %v954 = vld [vmem:[#allocation2 + $0x190] sm:$0xff]
      %v955 = vld [vmem:[#allocation2 + $0x198] sm:$0xff]
      %v956 = vld [vmem:[#allocation2 + $0x1a0] sm:$0xff]
      %v957 = vld [vmem:[#allocation2 + $0x1a8] sm:$0xff]
      %v958 = vld [vmem:[#allocation2 + $0x1b0] sm:$0xff]
      %v959 = vld [vmem:[#allocation2 + $0x1b8] sm:$0xff]
      %v960 = vld [vmem:[#allocation2 + $0x1c0] sm:$0xff]
      %v961 = vld [vmem:[#allocation2 + $0x1c8] sm:$0xff]
      %v962 = vld [vmem:[#allocation2 + $0x1d0] sm:$0xff]
      %v963 = vld [vmem:[#allocation2 + $0x1d8] sm:$0xff]
      %v964 = vld [vmem:[#allocation2 + $0x1e0] sm:$0xff]
      %v965 = vld [vmem:[#allocation2 + $0x1e8] sm:$0xff]
      %v966 = vld [vmem:[#allocation2 + $0x1f0] sm:$0xff]
      %v967 = vld [vmem:[#allocation2 + $0x1f8] sm:$0xff]
      %v968 = vld [vmem:[#allocation2 + $0x200] sm:$0xff]
      %v969 = vld [vmem:[#allocation2 + $0x208] sm:$0xff]
      %v970 = vld [vmem:[#allocation2 + $0x210] sm:$0xff]
      %v971 = vld [vmem:[#allocation2 + $0x218] sm:$0xff]
      %v972 = vld [vmem:[#allocation2 + $0x220] sm:$0xff]
      %v973 = vld [vmem:[#allocation2 + $0x228] sm:$0xff]
      %v974 = vld [vmem:[#allocation2 + $0x230] sm:$0xff]
      %v975 = vld [vmem:[#allocation2 + $0x238] sm:$0xff]
      %v976 = vld [vmem:[%s3] sm:$0xff]
      %v977 = vld [vmem:[%s3 + $0x8] sm:$0xff]
      %v978 = vld [vmem:[%s3 + $0x10] sm:$0xff]
      %v979 = vld [vmem:[%s3 + $0x18] sm:$0xff]
      %v980 = vld [vmem:[%s3 + $0x20] sm:$0xff]
      %v981 = vld [vmem:[%s3 + $0x28] sm:$0xff]
      %v982 = vld [vmem:[%s3 + $0x30] sm:$0xff]
      %v983 = vld [vmem:[%s3 + $0x38] sm:$0xff]
      %v984 = vld [vmem:[%s3 + $0x40] sm:$0xff]
      %v985 = vld [vmem:[%s3 + $0x48] sm:$0xff]
      %v986 = vld [vmem:[%s3 + $0x50] sm:$0xff]
      %v987 = vld [vmem:[%s3 + $0x58] sm:$0xff]
      %v988 = vld [vmem:[%s3 + $0x60] sm:$0xff]
      %v989 = vld [vmem:[%s3 + $0x68] sm:$0xff]
      %v990 = vld [vmem:[%s3 + $0x70] sm:$0xff]
      %v991 = vld [vmem:[%s3 + $0x78] sm:$0xff]
      %v992 = vld [vmem:[%s3 + $0x80] sm:$0xff]
      %v993 = vld [vmem:[%s3 + $0x88] sm:$0xff]
      %v994 = vld [vmem:[%s3 + $0x90] sm:$0xff]
      %v995 = vld [vmem:[%s3 + $0x98] sm:$0xff]
      %v996 = vld [vmem:[%s3 + $0xa0] sm:$0xff]
      %v997 = vld [vmem:[%s3 + $0xa8] sm:$0xff]
      %v998 = vld [vmem:[%s3 + $0xb0] sm:$0xff]
      %v999 = vld [vmem:[%s3 + $0xb8] sm:$0xff]
      %v1000 = vld [vmem:[%s3 + $0xc0] sm:$0xff]
      %v1001 = vld [vmem:[%s3 + $0xc8] sm:$0xff]
      %v1002 = vld [vmem:[%s3 + $0xd0] sm:$0xff]
      %v1003 = vld [vmem:[%s3 + $0xd8] sm:$0xff]
      %v1004 = vld [vmem:[%s3 + $0xe0] sm:$0xff]
      %v1005 = vld [vmem:[%s3 + $0xe8] sm:$0xff]
      %v1006 = vld [vmem:[%s3 + $0xf0] sm:$0xff]
      %v1007 = vld [vmem:[%s3 + $0xf8] sm:$0xff]
      %v1008 = vld [vmem:[%s3 + $0x100] sm:$0xff]
      %v1009 = vld [vmem:[%s3 + $0x108] sm:$0xff]
      %v1010 = vld [vmem:[%s3 + $0x110] sm:$0xff]
      %v1011 = vld [vmem:[%s3 + $0x118] sm:$0xff]
      %vm1060 = vcmask 1040384
      %v1061 = vrot.slane %v904, 7
      %v1062 = vrot.slane %v905, 7
      %v1063 = vsel %vm1060, %v1061, %v1062
      %v1064 = vrot.slane %v906, 7
      %v1065 = vsel %vm1060, %v1062, %v1064
      %v1066 = vrot.slane %v908, 7
      %v1067 = vrot.slane %v909, 7
      %v1068 = vsel %vm1060, %v1066, %v1067
      %v1069 = vrot.slane %v910, 7
      %v1070 = vsel %vm1060, %v1067, %v1069
      %v1071 = vrot.slane %v912, 7
      %v1072 = vrot.slane %v913, 7
      %v1073 = vsel %vm1060, %v1071, %v1072
      %v1074 = vrot.slane %v914, 7
      %v1075 = vsel %vm1060, %v1072, %v1074
      %v1076 = vrot.slane %v916, 7
      %v1077 = vrot.slane %v917, 7
      %v1078 = vsel %vm1060, %v1076, %v1077
      %v1079 = vrot.slane %v918, 7
      %v1080 = vsel %vm1060, %v1077, %v1079
      %v1081 = vrot.slane %v920, 7
      %v1082 = vrot.slane %v921, 7
      %v1083 = vsel %vm1060, %v1081, %v1082
      %v1084 = vrot.slane %v922, 7
      %v1085 = vsel %vm1060, %v1082, %v1084
      %v1086 = vrot.slane %v924, 7
      %v1087 = vrot.slane %v925, 7
      %v1088 = vsel %vm1060, %v1086, %v1087
      %v1089 = vrot.slane %v926, 7
      %v1090 = vsel %vm1060, %v1087, %v1089
      %v1091 = vrot.slane %v928, 7
      %v1092 = vrot.slane %v929, 7
      %v1093 = vsel %vm1060, %v1091, %v1092
      %v1094 = vrot.slane %v930, 7
      %v1095 = vsel %vm1060, %v1092, %v1094
      %v1096 = vrot.slane %v932, 7
      %v1097 = vrot.slane %v933, 7
      %v1098 = vsel %vm1060, %v1096, %v1097
      %v1099 = vrot.slane %v934, 7
      %v1100 = vsel %vm1060, %v1097, %v1099
      %v1101 = vrot.slane %v936, 7
      %v1102 = vrot.slane %v937, 7
      %v1103 = vsel %vm1060, %v1101, %v1102
      %v1104 = vrot.slane %v938, 7
      %v1105 = vsel %vm1060, %v1102, %v1104
      %v1106 = vrot.slane %v940, 7
      %v1107 = vrot.slane %v941, 7
      %v1108 = vsel %vm1060, %v1106, %v1107
      %v1109 = vrot.slane %v942, 7
      %v1110 = vsel %vm1060, %v1107, %v1109
      %v1111 = vrot.slane %v944, 7
      %v1112 = vrot.slane %v945, 7
      %v1113 = vsel %vm1060, %v1111, %v1112
      %v1114 = vrot.slane %v946, 7
      %v1115 = vsel %vm1060, %v1112, %v1114
      %v1116 = vrot.slane %v948, 7
      %v1117 = vrot.slane %v949, 7
      %v1118 = vsel %vm1060, %v1116, %v1117
      %v1119 = vrot.slane %v950, 7
      %v1120 = vsel %vm1060, %v1117, %v1119
      %v1121 = vrot.slane %v952, 7
      %v1122 = vrot.slane %v953, 7
      %v1123 = vsel %vm1060, %v1121, %v1122
      %v1124 = vrot.slane %v954, 7
      %v1125 = vsel %vm1060, %v1122, %v1124
      %v1126 = vrot.slane %v956, 7
      %v1127 = vrot.slane %v957, 7
      %v1128 = vsel %vm1060, %v1126, %v1127
      %v1129 = vrot.slane %v958, 7
      %v1130 = vsel %vm1060, %v1127, %v1129
      %v1131 = vrot.slane %v960, 7
      %v1132 = vrot.slane %v961, 7
      %v1133 = vsel %vm1060, %v1131, %v1132
      %v1134 = vrot.slane %v962, 7
      %v1135 = vsel %vm1060, %v1132, %v1134
      %v1136 = vrot.slane %v964, 7
      %v1137 = vrot.slane %v965, 7
      %v1138 = vsel %vm1060, %v1136, %v1137
      %v1139 = vrot.slane %v966, 7
      %v1140 = vsel %vm1060, %v1137, %v1139
      %vm1141 = vcmask 261120
      %v1142 = vsel %vm1141, %v1063, 0
      %v1144 = vsel %vm1141, %v1065, 0
      %v1146 = vsel %vm1141, %v1068, 0
      %v1148 = vsel %vm1141, %v1070, 0
      %v1150 = vsel %vm1141, %v1073, 0
      %v1152 = vsel %vm1141, %v1075, 0
      %v1154 = vsel %vm1141, %v1078, 0
      %v1156 = vsel %vm1141, %v1080, 0
      %v1158 = vsel %vm1141, %v1083, 0
      %v1160 = vsel %vm1141, %v1085, 0
      %v1162 = vsel %vm1141, %v1088, 0
      %v1164 = vsel %vm1141, %v1090, 0
      %v1166 = vsel %vm1141, %v1093, 0
      %v1168 = vsel %vm1141, %v1095, 0
      %v1170 = vsel %vm1141, %v1098, 0
      %v1172 = vsel %vm1141, %v1100, 0
      %v1174 = vsel %vm1141, %v1103, 0
      %v1176 = vsel %vm1141, %v1105, 0
      %v1178 = vsel %vm1141, %v1108, 0
      %v1180 = vsel %vm1141, %v1110, 0
      %v1182 = vsel %vm1141, %v1113, 0
      %v1184 = vsel %vm1141, %v1115, 0
      %v1186 = vsel %vm1141, %v1118, 0
      %v1188 = vsel %vm1141, %v1120, 0
      %v1190 = vsel %vm1141, %v1123, 0
      %v1192 = vsel %vm1141, %v1125, 0
      %v1194 = vsel %vm1141, %v1128, 0
      %v1196 = vsel %vm1141, %v1130, 0
      %v1198 = vsel %vm1141, %v1133, 0
      %v1200 = vsel %vm1141, %v1135, 0
      %v1202 = vsel %vm1141, %v1138, 0
      %v1204 = vsel %vm1141, %v1140, 0
      %1206 = vmatprep.subr.mxu0 0.0
      %1207 = vmatpush1.msra.mxu0 %v976
      %1208 = vmatprep.subr.mxu0 0.0
      %1209 = vmatpush1.msra.mxu0 %v977
      %1210 = vmatprep.subr.mxu0 0.0
      %1211 = vmatpush1.msra.mxu0 %v978
      %1212 = vmatprep.subr.mxu0 0.0
      %1213 = vmatpush1.msra.mxu0 %v979
      %1214 = vmatprep.subr.mxu0 0.0
      %1215 = vmatpush1.msra.mxu0 0.0
      %1216 = vmatprep.subr.mxu0 0.0
      %1217 = vmatpush1.msra.mxu0 0.0
      %1218 = vmatprep.subr.mxu0 0.0
      %1219 = vmatpush1.msra.mxu0 0.0
      %1220 = vmatprep.subr.mxu0 0.0
      %1221 = vmatpush1.msra.mxu0 0.0
      %1222 = vmatprep.subr.mxu0 0.0
      %1223 = vmatpush1.msra.mxu0 0.0
      %1224 = vmatprep.subr.mxu0 0.0
      %1225 = vmatpush1.msra.mxu0 0.0
      %1226 = vmatprep.subr.mxu0 0.0
      %1227 = vmatpush1.msra.mxu0 0.0
      %1228 = vmatprep.subr.mxu0 0.0
      %1229 = vmatpush1.msra.mxu0 0.0
      %1230 = vmatprep.subr.mxu0 0.0
      %1231 = vmatpush1.msra.mxu0 0.0
      %1232 = vmatprep.subr.mxu0 0.0
      %1233 = vmatpush1.msra.mxu0 0.0
      %1234 = vmatprep.subr.mxu0 0.0
      %1235 = vmatpush1.msra.mxu0 0.0
      %1236 = vmatprep.subr.mxu0 0.0
      %1237 = vmatpush1.msra.mxu0 0.0
      %1238 = vmatprep.subr.mxu0 0.0
      %1239 = vmatpush1.msra.mxu0 0.0
      %1240 = vmatprep.subr.mxu0 0.0
      %1241 = vmatpush1.msra.mxu0 0.0
      %1242 = vmatprep.subr.mxu0 0.0
      %1243 = vmatpush1.msra.mxu0 0.0
      %1244 = vmatprep.subr.mxu0 0.0
      %1245 = vmatpush1.msra.mxu0 0.0
      %1246 = vmatprep.subr.mxu0 0.0
      %1247 = vmatpush1.msra.mxu0 0.0
      %1248 = vmatprep.subr.mxu0 0.0
      %1249 = vmatpush1.msra.mxu0 0.0
      %1250 = vmatprep.subr.mxu0 0.0
      %1251 = vmatpush1.msra.mxu0 0.0
      %1252 = vmatprep.subr.mxu0 0.0
      %1253 = vmatpush1.msra.mxu0 0.0
      %1254 = vmatprep.subr.mxu0 0.0
      %1255 = vmatpush1.msra.mxu0 0.0
      %1256 = vmatprep.subr.mxu0 0.0
      %1257 = vmatpush1.msra.mxu0 0.0
      %1258 = vmatprep.subr.mxu0 0.0
      %1259 = vmatpush1.msra.mxu0 0.0
      %1260 = vmatprep.subr.mxu0 0.0
      %1261 = vmatpush1.msra.mxu0 0.0
      %1262 = vmatprep.subr.mxu0 0.0
      %1263 = vmatpush1.msra.mxu0 0.0
      %1264 = vmatprep.subr.mxu0 0.0
      %1265 = vmatpush1.msra.mxu0 0.0
      %1266 = vmatprep.subr.mxu0 0.0
      %1267 = vmatpush1.msra.mxu0 0.0
      %1268 = vmatprep.subr.mxu0 0.0
      %1269 = vmatpush1.msra.mxu0 0.0
      %1270 = vmatprep.mubr.f32.mxu0 0.0
      %1271 = vmatmul.mubr.f32.gmra.mrb[0].mxu0 %v1142
      %v1272 = vpop.f32.mrb[0].mxu0
      %v1273 = vadd.f32 0.0, %v1272
      %v1274 = vpop.f32.mrb[0].mxu0
      %1275 = vmatprep.mubr.f32.mxu0 0.0
      %1276 = vmatmul.mubr.f32.gmra.mrb[0].mxu0 %v1144
      %v1277 = vpop.f32.mrb[0].mxu0
      %v1278 = vadd.f32 0.0, %v1277
      %v1279 = vpop.f32.mrb[0].mxu0
      %1280 = vmatprep.mubr.f32.mxu0 0.0
      %1281 = vmatmul.mubr.f32.gmra.mrb[0].mxu0 %v1146
      %v1282 = vpop.f32.mrb[0].mxu0
      %v1283 = vadd.f32 0.0, %v1282
      %v1284 = vpop.f32.mrb[0].mxu0
      %1285 = vmatprep.mubr.f32.mxu0 0.0
      %1286 = vmatmul.mubr.f32.gmra.mrb[0].mxu0 %v1148
      %v1287 = vpop.f32.mrb[0].mxu0
      %v1288 = vadd.f32 0.0, %v1287
      %v1289 = vpop.f32.mrb[0].mxu0
      %1290 = vmatprep.mubr.f32.mxu0 0.0
      %1291 = vmatmul.mubr.f32.gmra.mrb[0].mxu0 %v1150
      %v1292 = vpop.f32.mrb[0].mxu0
      %v1293 = vadd.f32 0.0, %v1292
      %v1294 = vpop.f32.mrb[0].mxu0
      %1295 = vmatprep.mubr.f32.mxu0 0.0
      %1296 = vmatmul.mubr.f32.gmra.mrb[0].mxu0 %v1152
      %v1297 = vpop.f32.mrb[0].mxu0
      %v1298 = vadd.f32 0.0, %v1297
      %v1299 = vpop.f32.mrb[0].mxu0
      %1300 = vmatprep.mubr.f32.mxu0 0.0
      %1301 = vmatmul.mubr.f32.gmra.mrb[0].mxu0 %v1154
      %v1302 = vpop.f32.mrb[0].mxu0
      %v1303 = vadd.f32 0.0, %v1302
      %v1304 = vpop.f32.mrb[0].mxu0
      %1305 = vmatprep.mubr.f32.mxu0 0.0
      %1306 = vmatmul.mubr.f32.gmra.mrb[0].mxu0 %v1156
      %v1307 = vpop.f32.mrb[0].mxu0
      %v1308 = vadd.f32 0.0, %v1307
      %v1309 = vpop.f32.mrb[0].mxu0
      %1310 = vmatprep.mubr.f32.mxu0 0.0
      %1311 = vmatmul.mubr.f32.gmra.mrb[0].mxu0 %v1158
      %v1312 = vpop.f32.mrb[0].mxu0
      %v1313 = vadd.f32 0.0, %v1312
      %v1314 = vpop.f32.mrb[0].mxu0
      %1315 = vmatprep.mubr.f32.mxu0 0.0
      %1316 = vmatmul.mubr.f32.gmra.mrb[0].mxu0 %v1160
      %v1317 = vpop.f32.mrb[0].mxu0
      %v1318 = vadd.f32 0.0, %v1317
      %v1319 = vpop.f32.mrb[0].mxu0
      %1320 = vmatprep.mubr.f32.mxu0 0.0
      %1321 = vmatmul.mubr.f32.gmra.mrb[0].mxu0 %v1162
      %v1322 = vpop.f32.mrb[0].mxu0
      %v1323 = vadd.f32 0.0, %v1322
      %v1324 = vpop.f32.mrb[0].mxu0
      %1325 = vmatprep.mubr.f32.mxu0 0.0
      %1326 = vmatmul.mubr.f32.gmra.mrb[0].mxu0 %v1164
      %v1327 = vpop.f32.mrb[0].mxu0
      %v1328 = vadd.f32 0.0, %v1327
      %v1329 = vpop.f32.mrb[0].mxu0
      %1330 = vmatprep.mubr.f32.mxu0 0.0
      %1331 = vmatmul.mubr.f32.gmra.mrb[0].mxu0 %v1166
      %v1332 = vpop.f32.mrb[0].mxu0
      %v1333 = vadd.f32 0.0, %v1332
      %v1334 = vpop.f32.mrb[0].mxu0
      %1335 = vmatprep.mubr.f32.mxu0 0.0
      %1336 = vmatmul.mubr.f32.gmra.mrb[0].mxu0 %v1168
      %v1337 = vpop.f32.mrb[0].mxu0
      %v1338 = vadd.f32 0.0, %v1337
      %v1339 = vpop.f32.mrb[0].mxu0
      %1340 = vmatprep.mubr.f32.mxu0 0.0
      %1341 = vmatmul.mubr.f32.gmra.mrb[0].mxu0 %v1170
      %v1342 = vpop.f32.mrb[0].mxu0
      %v1343 = vadd.f32 0.0, %v1342
      %v1344 = vpop.f32.mrb[0].mxu0
      %1345 = vmatprep.mubr.f32.mxu0 0.0
      %1346 = vmatmul.mubr.f32.gmra.mrb[0].mxu0 %v1172
      %v1347 = vpop.f32.mrb[0].mxu0
      %v1348 = vadd.f32 0.0, %v1347
      %v1349 = vpop.f32.mrb[0].mxu0
      %1350 = vmatprep.mubr.f32.mxu0 0.0
      %1351 = vmatmul.mubr.f32.gmra.mrb[0].mxu0 %v1174
      %v1352 = vpop.f32.mrb[0].mxu0
      %v1353 = vadd.f32 0.0, %v1352
      %v1354 = vpop.f32.mrb[0].mxu0
      %1355 = vmatprep.mubr.f32.mxu0 0.0
      %1356 = vmatmul.mubr.f32.gmra.mrb[0].mxu0 %v1176
      %v1357 = vpop.f32.mrb[0].mxu0
      %v1358 = vadd.f32 0.0, %v1357
      %v1359 = vpop.f32.mrb[0].mxu0
      %1360 = vmatprep.mubr.f32.mxu0 0.0
      %1361 = vmatmul.mubr.f32.gmra.mrb[0].mxu0 %v1178
      %v1362 = vpop.f32.mrb[0].mxu0
      %v1363 = vadd.f32 0.0, %v1362
      %v1364 = vpop.f32.mrb[0].mxu0
      %1365 = vmatprep.mubr.f32.mxu0 0.0
      %1366 = vmatmul.mubr.f32.gmra.mrb[0].mxu0 %v1180
      %v1367 = vpop.f32.mrb[0].mxu0
      %v1368 = vadd.f32 0.0, %v1367
      %v1369 = vpop.f32.mrb[0].mxu0
      %1370 = vmatprep.mubr.f32.mxu0 0.0
      %1371 = vmatmul.mubr.f32.gmra.mrb[0].mxu0 %v1182
      %v1372 = vpop.f32.mrb[0].mxu0
      %v1373 = vadd.f32 0.0, %v1372
      %v1374 = vpop.f32.mrb[0].mxu0
      %1375 = vmatprep.mubr.f32.mxu0 0.0
      %1376 = vmatmul.mubr.f32.gmra.mrb[0].mxu0 %v1184
      %v1377 = vpop.f32.mrb[0].mxu0
      %v1378 = vadd.f32 0.0, %v1377
      %v1379 = vpop.f32.mrb[0].mxu0
      %1380 = vmatprep.mubr.f32.mxu0 0.0
      %1381 = vmatmul.mubr.f32.gmra.mrb[0].mxu0 %v1186
      %v1382 = vpop.f32.mrb[0].mxu0
      %v1383 = vadd.f32 0.0, %v1382
      %v1384 = vpop.f32.mrb[0].mxu0
      %1385 = vmatprep.mubr.f32.mxu0 0.0
      %1386 = vmatmul.mubr.f32.gmra.mrb[0].mxu0 %v1188
      %v1387 = vpop.f32.mrb[0].mxu0
      %v1388 = vadd.f32 0.0, %v1387
      %v1389 = vpop.f32.mrb[0].mxu0
      %1390 = vmatprep.mubr.f32.mxu0 0.0
      %1391 = vmatmul.mubr.f32.gmra.mrb[0].mxu0 %v1190
      %v1392 = vpop.f32.mrb[0].mxu0
      %v1393 = vadd.f32 0.0, %v1392
      %v1394 = vpop.f32.mrb[0].mxu0
      %1395 = vmatprep.mubr.f32.mxu0 0.0
      %1396 = vmatmul.mubr.f32.gmra.mrb[0].mxu0 %v1192
      %v1397 = vpop.f32.mrb[0].mxu0
      %v1398 = vadd.f32 0.0, %v1397
      %v1399 = vpop.f32.mrb[0].mxu0
      %1400 = vmatprep.mubr.f32.mxu0 0.0
      %1401 = vmatmul.mubr.f32.gmra.mrb[0].mxu0 %v1194
      %v1402 = vpop.f32.mrb[0].mxu0
      %v1403 = vadd.f32 0.0, %v1402
      %v1404 = vpop.f32.mrb[0].mxu0
      %1405 = vmatprep.mubr.f32.mxu0 0.0
      %1406 = vmatmul.mubr.f32.gmra.mrb[0].mxu0 %v1196
      %v1407 = vpop.f32.mrb[0].mxu0
      %v1408 = vadd.f32 0.0, %v1407
      %v1409 = vpop.f32.mrb[0].mxu0
      %1410 = vmatprep.mubr.f32.mxu0 0.0
      %1411 = vmatmul.mubr.f32.gmra.mrb[0].mxu0 %v1198
      %v1412 = vpop.f32.mrb[0].mxu0
      %v1413 = vadd.f32 0.0, %v1412
      %v1414 = vpop.f32.mrb[0].mxu0
      %1415 = vmatprep.mubr.f32.mxu0 0.0
      %1416 = vmatmul.mubr.f32.gmra.mrb[0].mxu0 %v1200
      %v1417 = vpop.f32.mrb[0].mxu0
      %v1418 = vadd.f32 0.0, %v1417
      %v1419 = vpop.f32.mrb[0].mxu0
      %1420 = vmatprep.mubr.f32.mxu0 0.0
      %1421 = vmatmul.mubr.f32.gmra.mrb[0].mxu0 %v1202
      %v1422 = vpop.f32.mrb[0].mxu0
      %v1423 = vadd.f32 0.0, %v1422
      %v1424 = vpop.f32.mrb[0].mxu0
      %1425 = vmatprep.mubr.f32.mxu0 0.0
      %1426 = vmatmul.mubr.f32.gmra.mrb[0].mxu0 %v1204
      %v1427 = vpop.f32.mrb[0].mxu0
      %v1428 = vadd.f32 0.0, %v1427
      %v1429 = vpop.f32.mrb[0].mxu0
      %1430 = vdwg.mxu0
      %v1431 = vadd.f32 %v746, %v1273
      %v1432 = vadd.f32 %v751, %v1278
      %v1433 = vadd.f32 %v756, %v1283
      %v1434 = vadd.f32 %v761, %v1288
      %v1435 = vadd.f32 %v766, %v1293
      %v1436 = vadd.f32 %v771, %v1298
      %v1437 = vadd.f32 %v776, %v1303
      %v1438 = vadd.f32 %v781, %v1308
      %v1439 = vadd.f32 %v786, %v1313
      %v1440 = vadd.f32 %v791, %v1318
      %v1441 = vadd.f32 %v796, %v1323
      %v1442 = vadd.f32 %v801, %v1328
      %v1443 = vadd.f32 %v806, %v1333
      %v1444 = vadd.f32 %v811, %v1338
      %v1445 = vadd.f32 %v816, %v1343
      %v1446 = vadd.f32 %v821, %v1348
      %v1447 = vadd.f32 %v826, %v1353
      %v1448 = vadd.f32 %v831, %v1358
      %v1449 = vadd.f32 %v836, %v1363
      %v1450 = vadd.f32 %v841, %v1368
      %v1451 = vadd.f32 %v846, %v1373
      %v1452 = vadd.f32 %v851, %v1378
      %v1453 = vadd.f32 %v856, %v1383
      %v1454 = vadd.f32 %v861, %v1388
      %v1455 = vadd.f32 %v866, %v1393
      %v1456 = vadd.f32 %v871, %v1398
      %v1457 = vadd.f32 %v876, %v1403
      %v1458 = vadd.f32 %v881, %v1408
      %v1459 = vadd.f32 %v886, %v1413
      %v1460 = vadd.f32 %v891, %v1418
      %v1461 = vadd.f32 %v896, %v1423
      %v1462 = vadd.f32 %v901, %v1428
      %v1463 = vsel %vm1141, %v905, 0
      %v1465 = vsel %vm1141, %v906, 0
      %v1467 = vsel %vm1141, %v909, 0
      %v1469 = vsel %vm1141, %v910, 0
      %v1471 = vsel %vm1141, %v913, 0
      %v1473 = vsel %vm1141, %v914, 0
      %v1475 = vsel %vm1141, %v917, 0
      %v1477 = vsel %vm1141, %v918, 0
      %v1479 = vsel %vm1141, %v921, 0
      %v1481 = vsel %vm1141, %v922, 0
      %v1483 = vsel %vm1141, %v925, 0
      %v1485 = vsel %vm1141, %v926, 0
      %v1487 = vsel %vm1141, %v929, 0
      %v1489 = vsel %vm1141, %v930, 0
      %v1491 = vsel %vm1141, %v933, 0
      %v1493 = vsel %vm1141, %v934, 0
      %v1495 = vsel %vm1141, %v937, 0
      %v1497 = vsel %vm1141, %v938, 0
      %v1499 = vsel %vm1141, %v941, 0
      %v1501 = vsel %vm1141, %v942, 0
      %v1503 = vsel %vm1141, %v945, 0
      %v1505 = vsel %vm1141, %v946, 0
      %v1507 = vsel %vm1141, %v949, 0
      %v1509 = vsel %vm1141, %v950, 0
      %v1511 = vsel %vm1141, %v953, 0
      %v1513 = vsel %vm1141, %v954, 0
      %v1515 = vsel %vm1141, %v957, 0
      %v1517 = vsel %vm1141, %v958, 0
      %v1519 = vsel %vm1141, %v961, 0
      %v1521 = vsel %vm1141, %v962, 0
      %v1523 = vsel %vm1141, %v965, 0
      %v1525 = vsel %vm1141, %v966, 0
      %1527 = vmatprep.subr.mxu0 0.0
      %1528 = vmatpush1.msra.mxu0 %v980
      %1529 = vmatprep.subr.mxu0 0.0
      %1530 = vmatpush1.msra.mxu0 %v981
      %1531 = vmatprep.subr.mxu0 0.0
      %1532 = vmatpush1.msra.mxu0 %v982
      %1533 = vmatprep.subr.mxu0 0.0
      %1534 = vmatpush1.msra.mxu0 %v983
      %1535 = vmatprep.subr.mxu0 0.0
      %1536 = vmatpush1.msra.mxu0 0.0
      %1537 = vmatprep.subr.mxu0 0.0
      %1538 = vmatpush1.msra.mxu0 0.0
      %1539 = vmatprep.subr.mxu0 0.0
      %1540 = vmatpush1.msra.mxu0 0.0
      %1541 = vmatprep.subr.mxu0 0.0
      %1542 = vmatpush1.msra.mxu0 0.0
      %1543 = vmatprep.subr.mxu0 0.0
      %1544 = vmatpush1.msra.mxu0 0.0
      %1545 = vmatprep.subr.mxu0 0.0
      %1546 = vmatpush1.msra.mxu0 0.0
      %1547 = vmatprep.subr.mxu0 0.0
      %1548 = vmatpush1.msra.mxu0 0.0
      %1549 = vmatprep.subr.mxu0 0.0
      %1550 = vmatpush1.msra.mxu0 0.0
      %1551 = vmatprep.subr.mxu0 0.0
      %1552 = vmatpush1.msra.mxu0 0.0
      %1553 = vmatprep.subr.mxu0 0.0
      %1554 = vmatpush1.msra.mxu0 0.0
      %1555 = vmatprep.subr.mxu0 0.0
      %1556 = vmatpush1.msra.mxu0 0.0
      %1557 = vmatprep.subr.mxu0 0.0
      %1558 = vmatpush1.msra.mxu0 0.0
      %1559 = vmatprep.subr.mxu0 0.0
      %1560 = vmatpush1.msra.mxu0 0.0
      %1561 = vmatprep.subr.mxu0 0.0
      %1562 = vmatpush1.msra.mxu0 0.0
      %1563 = vmatprep.subr.mxu0 0.0
      %1564 = vmatpush1.msra.mxu0 0.0
      %1565 = vmatprep.subr.mxu0 0.0
      %1566 = vmatpush1.msra.mxu0 0.0
      %1567 = vmatprep.subr.mxu0 0.0
      %1568 = vmatpush1.msra.mxu0 0.0
      %1569 = vmatprep.subr.mxu0 0.0
      %1570 = vmatpush1.msra.mxu0 0.0
      %1571 = vmatprep.subr.mxu0 0.0
      %1572 = vmatpush1.msra.mxu0 0.0
      %1573 = vmatprep.subr.mxu0 0.0
      %1574 = vmatpush1.msra.mxu0 0.0
      %1575 = vmatprep.subr.mxu0 0.0
      %1576 = vmatpush1.msra.mxu0 0.0
      %1577 = vmatprep.subr.mxu0 0.0
      %1578 = vmatpush1.msra.mxu0 0.0
      %1579 = vmatprep.subr.mxu0 0.0
      %1580 = vmatpush1.msra.mxu0 0.0
      %1581 = vmatprep.subr.mxu0 0.0
      %1582 = vmatpush1.msra.mxu0 0.0
      %1583 = vmatprep.subr.mxu0 0.0
      %1584 = vmatpush1.msra.mxu0 0.0
      %1585 = vmatprep.subr.mxu0 0.0
      %1586 = vmatpush1.msra.mxu0 0.0
      %1587 = vmatprep.subr.mxu0 0.0
      %1588 = vmatpush1.msra.mxu0 0.0
      %1589 = vmatprep.subr.mxu0 0.0
      %1590 = vmatpush1.msra.mxu0 0.0
      %1591 = vmatprep.mubr.f32.mxu0 0.0
      %1592 = vmatmul.mubr.f32.gmra.mrb[0].mxu0 %v1463
      %v1593 = vpop.f32.mrb[0].mxu0
      %v1594 = vadd.f32 0.0, %v1593
      %v1595 = vpop.f32.mrb[0].mxu0
      %1596 = vmatprep.mubr.f32.mxu0 0.0
      %1597 = vmatmul.mubr.f32.gmra.mrb[0].mxu0 %v1465
      %v1598 = vpop.f32.mrb[0].mxu0
      %v1599 = vadd.f32 0.0, %v1598
      %v1600 = vpop.f32.mrb[0].mxu0
      %1601 = vmatprep.mubr.f32.mxu0 0.0
      %1602 = vmatmul.mubr.f32.gmra.mrb[0].mxu0 %v1467
      %v1603 = vpop.f32.mrb[0].mxu0
      %v1604 = vadd.f32 0.0, %v1603
      %v1605 = vpop.f32.mrb[0].mxu0
      %1606 = vmatprep.mubr.f32.mxu0 0.0
      %1607 = vmatmul.mubr.f32.gmra.mrb[0].mxu0 %v1469
      %v1608 = vpop.f32.mrb[0].mxu0
      %v1609 = vadd.f32 0.0, %v1608
      %v1610 = vpop.f32.mrb[0].mxu0
      %1611 = vmatprep.mubr.f32.mxu0 0.0
      %1612 = vmatmul.mubr.f32.gmra.mrb[0].mxu0 %v1471
      %v1613 = vpop.f32.mrb[0].mxu0
      %v1614 = vadd.f32 0.0, %v1613
      %v1615 = vpop.f32.mrb[0].mxu0
      %1616 = vmatprep.mubr.f32.mxu0 0.0
      %1617 = vmatmul.mubr.f32.gmra.mrb[0].mxu0 %v1473
      %v1618 = vpop.f32.mrb[0].mxu0
      %v1619 = vadd.f32 0.0, %v1618
      %v1620 = vpop.f32.mrb[0].mxu0
      %1621 = vmatprep.mubr.f32.mxu0 0.0
      %1622 = vmatmul.mubr.f32.gmra.mrb[0].mxu0 %v1475
      %v1623 = vpop.f32.mrb[0].mxu0
      %v1624 = vadd.f32 0.0, %v1623
      %v1625 = vpop.f32.mrb[0].mxu0
      %1626 = vmatprep.mubr.f32.mxu0 0.0
      %1627 = vmatmul.mubr.f32.gmra.mrb[0].mxu0 %v1477
      %v1628 = vpop.f32.mrb[0].mxu0
      %v1629 = vadd.f32 0.0, %v1628
      %v1630 = vpop.f32.mrb[0].mxu0
      %1631 = vmatprep.mubr.f32.mxu0 0.0
      %1632 = vmatmul.mubr.f32.gmra.mrb[0].mxu0 %v1479
      %v1633 = vpop.f32.mrb[0].mxu0
      %v1634 = vadd.f32 0.0, %v1633
      %v1635 = vpop.f32.mrb[0].mxu0
      %1636 = vmatprep.mubr.f32.mxu0 0.0
      %1637 = vmatmul.mubr.f32.gmra.mrb[0].mxu0 %v1481
      %v1638 = vpop.f32.mrb[0].mxu0
      %v1639 = vadd.f32 0.0, %v1638
      %v1640 = vpop.f32.mrb[0].mxu0
      %1641 = vmatprep.mubr.f32.mxu0 0.0
      %1642 = vmatmul.mubr.f32.gmra.mrb[0].mxu0 %v1483
      %v1643 = vpop.f32.mrb[0].mxu0
      %v1644 = vadd.f32 0.0, %v1643
      %v1645 = vpop.f32.mrb[0].mxu0
      %1646 = vmatprep.mubr.f32.mxu0 0.0
      %1647 = vmatmul.mubr.f32.gmra.mrb[0].mxu0 %v1485
      %v1648 = vpop.f32.mrb[0].mxu0
      %v1649 = vadd.f32 0.0, %v1648
      %v1650 = vpop.f32.mrb[0].mxu0
      %1651 = vmatprep.mubr.f32.mxu0 0.0
      %1652 = vmatmul.mubr.f32.gmra.mrb[0].mxu0 %v1487
      %v1653 = vpop.f32.mrb[0].mxu0
      %v1654 = vadd.f32 0.0, %v1653
      %v1655 = vpop.f32.mrb[0].mxu0
      %1656 = vmatprep.mubr.f32.mxu0 0.0
      %1657 = vmatmul.mubr.f32.gmra.mrb[0].mxu0 %v1489
      %v1658 = vpop.f32.mrb[0].mxu0
      %v1659 = vadd.f32 0.0, %v1658
      %v1660 = vpop.f32.mrb[0].mxu0
      %1661 = vmatprep.mubr.f32.mxu0 0.0
      %1662 = vmatmul.mubr.f32.gmra.mrb[0].mxu0 %v1491
      %v1663 = vpop.f32.mrb[0].mxu0
      %v1664 = vadd.f32 0.0, %v1663
      %v1665 = vpop.f32.mrb[0].mxu0
      %1666 = vmatprep.mubr.f32.mxu0 0.0
      %1667 = vmatmul.mubr.f32.gmra.mrb[0].mxu0 %v1493
      %v1668 = vpop.f32.mrb[0].mxu0
      %v1669 = vadd.f32 0.0, %v1668
      %v1670 = vpop.f32.mrb[0].mxu0
      %1671 = vmatprep.mubr.f32.mxu0 0.0
      %1672 = vmatmul.mubr.f32.gmra.mrb[0].mxu0 %v1495
      %v1673 = vpop.f32.mrb[0].mxu0
      %v1674 = vadd.f32 0.0, %v1673
      %v1675 = vpop.f32.mrb[0].mxu0
      %1676 = vmatprep.mubr.f32.mxu0 0.0
      %1677 = vmatmul.mubr.f32.gmra.mrb[0].mxu0 %v1497
      %v1678 = vpop.f32.mrb[0].mxu0
      %v1679 = vadd.f32 0.0, %v1678
      %v1680 = vpop.f32.mrb[0].mxu0
      %1681 = vmatprep.mubr.f32.mxu0 0.0
      %1682 = vmatmul.mubr.f32.gmra.mrb[0].mxu0 %v1499
      %v1683 = vpop.f32.mrb[0].mxu0
      %v1684 = vadd.f32 0.0, %v1683
      %v1685 = vpop.f32.mrb[0].mxu0
      %1686 = vmatprep.mubr.f32.mxu0 0.0
      %1687 = vmatmul.mubr.f32.gmra.mrb[0].mxu0 %v1501
      %v1688 = vpop.f32.mrb[0].mxu0
      %v1689 = vadd.f32 0.0, %v1688
      %v1690 = vpop.f32.mrb[0].mxu0
      %1691 = vmatprep.mubr.f32.mxu0 0.0
      %1692 = vmatmul.mubr.f32.gmra.mrb[0].mxu0 %v1503
      %v1693 = vpop.f32.mrb[0].mxu0
      %v1694 = vadd.f32 0.0, %v1693
      %v1695 = vpop.f32.mrb[0].mxu0
      %1696 = vmatprep.mubr.f32.mxu0 0.0
      %1697 = vmatmul.mubr.f32.gmra.mrb[0].mxu0 %v1505
      %v1698 = vpop.f32.mrb[0].mxu0
      %v1699 = vadd.f32 0.0, %v1698
      %v1700 = vpop.f32.mrb[0].mxu0
      %1701 = vmatprep.mubr.f32.mxu0 0.0
      %1702 = vmatmul.mubr.f32.gmra.mrb[0].mxu0 %v1507
      %v1703 = vpop.f32.mrb[0].mxu0
      %v1704 = vadd.f32 0.0, %v1703
      %v1705 = vpop.f32.mrb[0].mxu0
      %1706 = vmatprep.mubr.f32.mxu0 0.0
      %1707 = vmatmul.mubr.f32.gmra.mrb[0].mxu0 %v1509
      %v1708 = vpop.f32.mrb[0].mxu0
      %v1709 = vadd.f32 0.0, %v1708
      %v1710 = vpop.f32.mrb[0].mxu0
      %1711 = vmatprep.mubr.f32.mxu0 0.0
      %1712 = vmatmul.mubr.f32.gmra.mrb[0].mxu0 %v1511
      %v1713 = vpop.f32.mrb[0].mxu0
      %v1714 = vadd.f32 0.0, %v1713
      %v1715 = vpop.f32.mrb[0].mxu0
      %1716 = vmatprep.mubr.f32.mxu0 0.0
      %1717 = vmatmul.mubr.f32.gmra.mrb[0].mxu0 %v1513
      %v1718 = vpop.f32.mrb[0].mxu0
      %v1719 = vadd.f32 0.0, %v1718
      %v1720 = vpop.f32.mrb[0].mxu0
      %1721 = vmatprep.mubr.f32.mxu0 0.0
      %1722 = vmatmul.mubr.f32.gmra.mrb[0].mxu0 %v1515
      %v1723 = vpop.f32.mrb[0].mxu0
      %v1724 = vadd.f32 0.0, %v1723
      %v1725 = vpop.f32.mrb[0].mxu0
      %1726 = vmatprep.mubr.f32.mxu0 0.0
      %1727 = vmatmul.mubr.f32.gmra.mrb[0].mxu0 %v1517
      %v1728 = vpop.f32.mrb[0].mxu0
      %v1729 = vadd.f32 0.0, %v1728
      %v1730 = vpop.f32.mrb[0].mxu0
      %1731 = vmatprep.mubr.f32.mxu0 0.0
      %1732 = vmatmul.mubr.f32.gmra.mrb[0].mxu0 %v1519
      %v1733 = vpop.f32.mrb[0].mxu0
      %v1734 = vadd.f32 0.0, %v1733
      %v1735 = vpop.f32.mrb[0].mxu0
      %1736 = vmatprep.mubr.f32.mxu0 0.0
      %1737 = vmatmul.mubr.f32.gmra.mrb[0].mxu0 %v1521
      %v1738 = vpop.f32.mrb[0].mxu0
      %v1739 = vadd.f32 0.0, %v1738
      %v1740 = vpop.f32.mrb[0].mxu0
      %1741 = vmatprep.mubr.f32.mxu0 0.0
      %1742 = vmatmul.mubr.f32.gmra.mrb[0].mxu0 %v1523
      %v1743 = vpop.f32.mrb[0].mxu0
      %v1744 = vadd.f32 0.0, %v1743
      %v1745 = vpop.f32.mrb[0].mxu0
      %1746 = vmatprep.mubr.f32.mxu0 0.0
      %1747 = vmatmul.mubr.f32.gmra.mrb[0].mxu0 %v1525
      %v1748 = vpop.f32.mrb[0].mxu0
      %v1749 = vadd.f32 0.0, %v1748
      %v1750 = vpop.f32.mrb[0].mxu0
      %1751 = vdwg.mxu0
      %v1752 = vadd.f32 %v1431, %v1594
      %v1753 = vadd.f32 %v1432, %v1599
      %v1754 = vadd.f32 %v1433, %v1604
      %v1755 = vadd.f32 %v1434, %v1609
      %v1756 = vadd.f32 %v1435, %v1614
      %v1757 = vadd.f32 %v1436, %v1619
      %v1758 = vadd.f32 %v1437, %v1624
      %v1759 = vadd.f32 %v1438, %v1629
      %v1760 = vadd.f32 %v1439, %v1634
      %v1761 = vadd.f32 %v1440, %v1639
      %v1762 = vadd.f32 %v1441, %v1644
      %v1763 = vadd.f32 %v1442, %v1649
      %v1764 = vadd.f32 %v1443, %v1654
      %v1765 = vadd.f32 %v1444, %v1659
      %v1766 = vadd.f32 %v1445, %v1664
      %v1767 = vadd.f32 %v1446, %v1669
      %v1768 = vadd.f32 %v1447, %v1674
      %v1769 = vadd.f32 %v1448, %v1679
      %v1770 = vadd.f32 %v1449, %v1684
      %v1771 = vadd.f32 %v1450, %v1689
      %v1772 = vadd.f32 %v1451, %v1694
      %v1773 = vadd.f32 %v1452, %v1699
      %v1774 = vadd.f32 %v1453, %v1704
      %v1775 = vadd.f32 %v1454, %v1709
      %v1776 = vadd.f32 %v1455, %v1714
      %v1777 = vadd.f32 %v1456, %v1719
      %v1778 = vadd.f32 %v1457, %v1724
      %v1779 = vadd.f32 %v1458, %v1729
      %v1780 = vadd.f32 %v1459, %v1734
      %v1781 = vadd.f32 %v1460, %v1739
      %v1782 = vadd.f32 %v1461, %v1744
      %v1783 = vadd.f32 %v1462, %v1749
      %vm1800 = vcmask 1046528
      %v1801 = vrot.slane %v905, 1
      %v1802 = vrot.slane %v906, 1
      %v1803 = vsel %vm1800, %v1801, %v1802
      %v1804 = vrot.slane %v907, 1
      %v1805 = vsel %vm1800, %v1802, %v1804
      %v1806 = vrot.slane %v909, 1
      %v1807 = vrot.slane %v910, 1
      %v1808 = vsel %vm1800, %v1806, %v1807
      %v1809 = vrot.slane %v911, 1
      %v1810 = vsel %vm1800, %v1807, %v1809
      %v1811 = vrot.slane %v913, 1
      %v1812 = vrot.slane %v914, 1
      %v1813 = vsel %vm1800, %v1811, %v1812
      %v1814 = vrot.slane %v915, 1
      %v1815 = vsel %vm1800, %v1812, %v1814
      %v1816 = vrot.slane %v917, 1
      %v1817 = vrot.slane %v918, 1
      %v1818 = vsel %vm1800, %v1816, %v1817
      %v1819 = vrot.slane %v919, 1
      %v1820 = vsel %vm1800, %v1817, %v1819
      %v1821 = vrot.slane %v921, 1
      %v1822 = vrot.slane %v922, 1
      %v1823 = vsel %vm1800, %v1821, %v1822
      %v1824 = vrot.slane %v923, 1
      %v1825 = vsel %vm1800, %v1822, %v1824
      %v1826 = vrot.slane %v925, 1
      %v1827 = vrot.slane %v926, 1
      %v1828 = vsel %vm1800, %v1826, %v1827
      %v1829 = vrot.slane %v927, 1
      %v1830 = vsel %vm1800, %v1827, %v1829
      %v1831 = vrot.slane %v929, 1
      %v1832 = vrot.slane %v930, 1
      %v1833 = vsel %vm1800, %v1831, %v1832
      %v1834 = vrot.slane %v931, 1
      %v1835 = vsel %vm1800, %v1832, %v1834
      %v1836 = vrot.slane %v933, 1
      %v1837 = vrot.slane %v934, 1
      %v1838 = vsel %vm1800, %v1836, %v1837
      %v1839 = vrot.slane %v935, 1
      %v1840 = vsel %vm1800, %v1837, %v1839
      %v1841 = vrot.slane %v937, 1
      %v1842 = vrot.slane %v938, 1
      %v1843 = vsel %vm1800, %v1841, %v1842
      %v1844 = vrot.slane %v939, 1
      %v1845 = vsel %vm1800, %v1842, %v1844
      %v1846 = vrot.slane %v941, 1
      %v1847 = vrot.slane %v942, 1
      %v1848 = vsel %vm1800, %v1846, %v1847
      %v1849 = vrot.slane %v943, 1
      %v1850 = vsel %vm1800, %v1847, %v1849
      %v1851 = vrot.slane %v945, 1
      %v1852 = vrot.slane %v946, 1
      %v1853 = vsel %vm1800, %v1851, %v1852
      %v1854 = vrot.slane %v947, 1
      %v1855 = vsel %vm1800, %v1852, %v1854
      %v1856 = vrot.slane %v949, 1
      %v1857 = vrot.slane %v950, 1
      %v1858 = vsel %vm1800, %v1856, %v1857
      %v1859 = vrot.slane %v951, 1
      %v1860 = vsel %vm1800, %v1857, %v1859
      %v1861 = vrot.slane %v953, 1
      %v1862 = vrot.slane %v954, 1
      %v1863 = vsel %vm1800, %v1861, %v1862
      %v1864 = vrot.slane %v955, 1
      %v1865 = vsel %vm1800, %v1862, %v1864
      %v1866 = vrot.slane %v957, 1
      %v1867 = vrot.slane %v958, 1
      %v1868 = vsel %vm1800, %v1866, %v1867
      %v1869 = vrot.slane %v959, 1
      %v1870 = vsel %vm1800, %v1867, %v1869
      %v1871 = vrot.slane %v961, 1
      %v1872 = vrot.slane %v962, 1
      %v1873 = vsel %vm1800, %v1871, %v1872
      %v1874 = vrot.slane %v963, 1
      %v1875 = vsel %vm1800, %v1872, %v1874
      %v1876 = vrot.slane %v965, 1
      %v1877 = vrot.slane %v966, 1
      %v1878 = vsel %vm1800, %v1876, %v1877
      %v1879 = vrot.slane %v967, 1
      %v1880 = vsel %vm1800, %v1877, %v1879
      %v1881 = vsel %vm1141, %v1803, 0
      %v1883 = vsel %vm1141, %v1805, 0
      %v1885 = vsel %vm1141, %v1808, 0
      %v1887 = vsel %vm1141, %v1810, 0
      %v1889 = vsel %vm1141, %v1813, 0
      %v1891 = vsel %vm1141, %v1815, 0
      %v1893 = vsel %vm1141, %v1818, 0
      %v1895 = vsel %vm1141, %v1820, 0
      %v1897 = vsel %vm1141, %v1823, 0
      %v1899 = vsel %vm1141, %v1825, 0
      %v1901 = vsel %vm1141, %v1828, 0
      %v1903 = vsel %vm1141, %v1830, 0
      %v1905 = vsel %vm1141, %v1833, 0
      %v1907 = vsel %vm1141, %v1835, 0
      %v1909 = vsel %vm1141, %v1838, 0
      %v1911 = vsel %vm1141, %v1840, 0
      %v1913 = vsel %vm1141, %v1843, 0
      %v1915 = vsel %vm1141, %v1845, 0
      %v1917 = vsel %vm1141, %v1848, 0
      %v1919 = vsel %vm1141, %v1850, 0
      %v1921 = vsel %vm1141, %v1853, 0
      %v1923 = vsel %vm1141, %v1855, 0
      %v1925 = vsel %vm1141, %v1858, 0
      %v1927 = vsel %vm1141, %v1860, 0
      %v1929 = vsel %vm1141, %v1863, 0
      %v1931 = vsel %vm1141, %v1865, 0
      %v1933 = vsel %vm1141, %v1868, 0
      %v1935 = vsel %vm1141, %v1870, 0
      %v1937 = vsel %vm1141, %v1873, 0
      %v1939 = vsel %vm1141, %v1875, 0
      %v1941 = vsel %vm1141, %v1878, 0
      %v1943 = vsel %vm1141, %v1880, 0
      %1945 = vmatprep.subr.mxu0 0.0
      %1946 = vmatpush1.msra.mxu0 %v984
      %1947 = vmatprep.subr.mxu0 0.0
      %1948 = vmatpush1.msra.mxu0 %v985
      %1949 = vmatprep.subr.mxu0 0.0
      %1950 = vmatpush1.msra.mxu0 %v986
      %1951 = vmatprep.subr.mxu0 0.0
      %1952 = vmatpush1.msra.mxu0 %v987
      %1953 = vmatprep.subr.mxu0 0.0
      %1954 = vmatpush1.msra.mxu0 0.0
      %1955 = vmatprep.subr.mxu0 0.0
      %1956 = vmatpush1.msra.mxu0 0.0
      %1957 = vmatprep.subr.mxu0 0.0
      %1958 = vmatpush1.msra.mxu0 0.0
      %1959 = vmatprep.subr.mxu0 0.0
      %1960 = vmatpush1.msra.mxu0 0.0
      %1961 = vmatprep.subr.mxu0 0.0
      %1962 = vmatpush1.msra.mxu0 0.0
      %1963 = vmatprep.subr.mxu0 0.0
      %1964 = vmatpush1.msra.mxu0 0.0
      %1965 = vmatprep.subr.mxu0 0.0
      %1966 = vmatpush1.msra.mxu0 0.0
      %1967 = vmatprep.subr.mxu0 0.0
      %1968 = vmatpush1.msra.mxu0 0.0
      %1969 = vmatprep.subr.mxu0 0.0
      %1970 = vmatpush1.msra.mxu0 0.0
      %1971 = vmatprep.subr.mxu0 0.0
      %1972 = vmatpush1.msra.mxu0 0.0
      %1973 = vmatprep.subr.mxu0 0.0
      %1974 = vmatpush1.msra.mxu0 0.0
      %1975 = vmatprep.subr.mxu0 0.0
      %1976 = vmatpush1.msra.mxu0 0.0
      %1977 = vmatprep.subr.mxu0 0.0
      %1978 = vmatpush1.msra.mxu0 0.0
      %1979 = vmatprep.subr.mxu0 0.0
      %1980 = vmatpush1.msra.mxu0 0.0
      %1981 = vmatprep.subr.mxu0 0.0
      %1982 = vmatpush1.msra.mxu0 0.0
      %1983 = vmatprep.subr.mxu0 0.0
      %1984 = vmatpush1.msra.mxu0 0.0
      %1985 = vmatprep.subr.mxu0 0.0
      %1986 = vmatpush1.msra.mxu0 0.0
      %1987 = vmatprep.subr.mxu0 0.0
      %1988 = vmatpush1.msra.mxu0 0.0
      %1989 = vmatprep.subr.mxu0 0.0
      %1990 = vmatpush1.msra.mxu0 0.0
      %1991 = vmatprep.subr.mxu0 0.0
      %1992 = vmatpush1.msra.mxu0 0.0
      %1993 = vmatprep.subr.mxu0 0.0
      %1994 = vmatpush1.msra.mxu0 0.0
      %1995 = vmatprep.subr.mxu0 0.0
      %1996 = vmatpush1.msra.mxu0 0.0
      %1997 = vmatprep.subr.mxu0 0.0
      %1998 = vmatpush1.msra.mxu0 0.0
      %1999 = vmatprep.subr.mxu0 0.0
      %2000 = vmatpush1.msra.mxu0 0.0
      %2001 = vmatprep.subr.mxu0 0.0
      %2002 = vmatpush1.msra.mxu0 0.0
      %2003 = vmatprep.subr.mxu0 0.0
      %2004 = vmatpush1.msra.mxu0 0.0
      %2005 = vmatprep.subr.mxu0 0.0
      %2006 = vmatpush1.msra.mxu0 0.0
      %2007 = vmatprep.subr.mxu0 0.0
      %2008 = vmatpush1.msra.mxu0 0.0
      %2009 = vmatprep.mubr.f32.mxu0 0.0
      %2010 = vmatmul.mubr.f32.gmra.mrb[0].mxu0 %v1881
      %v2011 = vpop.f32.mrb[0].mxu0
      %v2012 = vadd.f32 0.0, %v2011
      %v2013 = vpop.f32.mrb[0].mxu0
      %2014 = vmatprep.mubr.f32.mxu0 0.0
      %2015 = vmatmul.mubr.f32.gmra.mrb[0].mxu0 %v1883
      %v2016 = vpop.f32.mrb[0].mxu0
      %v2017 = vadd.f32 0.0, %v2016
      %v2018 = vpop.f32.mrb[0].mxu0
      %2019 = vmatprep.mubr.f32.mxu0 0.0
      %2020 = vmatmul.mubr.f32.gmra.mrb[0].mxu0 %v1885
      %v2021 = vpop.f32.mrb[0].mxu0
      %v2022 = vadd.f32 0.0, %v2021
      %v2023 = vpop.f32.mrb[0].mxu0
      %2024 = vmatprep.mubr.f32.mxu0 0.0
      %2025 = vmatmul.mubr.f32.gmra.mrb[0].mxu0 %v1887
      %v2026 = vpop.f32.mrb[0].mxu0
      %v2027 = vadd.f32 0.0, %v2026
      %v2028 = vpop.f32.mrb[0].mxu0
      %2029 = vmatprep.mubr.f32.mxu0 0.0
      %2030 = vmatmul.mubr.f32.gmra.mrb[0].mxu0 %v1889
      %v2031 = vpop.f32.mrb[0].mxu0
      %v2032 = vadd.f32 0.0, %v2031
      %v2033 = vpop.f32.mrb[0].mxu0
      %2034 = vmatprep.mubr.f32.mxu0 0.0
      %2035 = vmatmul.mubr.f32.gmra.mrb[0].mxu0 %v1891
      %v2036 = vpop.f32.mrb[0].mxu0
      %v2037 = vadd.f32 0.0, %v2036
      %v2038 = vpop.f32.mrb[0].mxu0
      %2039 = vmatprep.mubr.f32.mxu0 0.0
      %2040 = vmatmul.mubr.f32.gmra.mrb[0].mxu0 %v1893
      %v2041 = vpop.f32.mrb[0].mxu0
      %v2042 = vadd.f32 0.0, %v2041
      %v2043 = vpop.f32.mrb[0].mxu0
      %2044 = vmatprep.mubr.f32.mxu0 0.0
      %2045 = vmatmul.mubr.f32.gmra.mrb[0].mxu0 %v1895
      %v2046 = vpop.f32.mrb[0].mxu0
      %v2047 = vadd.f32 0.0, %v2046
      %v2048 = vpop.f32.mrb[0].mxu0
      %2049 = vmatprep.mubr.f32.mxu0 0.0
      %2050 = vmatmul.mubr.f32.gmra.mrb[0].mxu0 %v1897
      %v2051 = vpop.f32.mrb[0].mxu0
      %v2052 = vadd.f32 0.0, %v2051
      %v2053 = vpop.f32.mrb[0].mxu0
      %2054 = vmatprep.mubr.f32.mxu0 0.0
      %2055 = vmatmul.mubr.f32.gmra.mrb[0].mxu0 %v1899
      %v2056 = vpop.f32.mrb[0].mxu0
      %v2057 = vadd.f32 0.0, %v2056
      %v2058 = vpop.f32.mrb[0].mxu0
      %2059 = vmatprep.mubr.f32.mxu0 0.0
      %2060 = vmatmul.mubr.f32.gmra.mrb[0].mxu0 %v1901
      %v2061 = vpop.f32.mrb[0].mxu0
      %v2062 = vadd.f32 0.0, %v2061
      %v2063 = vpop.f32.mrb[0].mxu0
      %2064 = vmatprep.mubr.f32.mxu0 0.0
      %2065 = vmatmul.mubr.f32.gmra.mrb[0].mxu0 %v1903
      %v2066 = vpop.f32.mrb[0].mxu0
      %v2067 = vadd.f32 0.0, %v2066
      %v2068 = vpop.f32.mrb[0].mxu0
      %2069 = vmatprep.mubr.f32.mxu0 0.0
      %2070 = vmatmul.mubr.f32.gmra.mrb[0].mxu0 %v1905
      %v2071 = vpop.f32.mrb[0].mxu0
      %v2072 = vadd.f32 0.0, %v2071
      %v2073 = vpop.f32.mrb[0].mxu0
      %2074 = vmatprep.mubr.f32.mxu0 0.0
      %2075 = vmatmul.mubr.f32.gmra.mrb[0].mxu0 %v1907
      %v2076 = vpop.f32.mrb[0].mxu0
      %v2077 = vadd.f32 0.0, %v2076
      %v2078 = vpop.f32.mrb[0].mxu0
      %2079 = vmatprep.mubr.f32.mxu0 0.0
      %2080 = vmatmul.mubr.f32.gmra.mrb[0].mxu0 %v1909
      %v2081 = vpop.f32.mrb[0].mxu0
      %v2082 = vadd.f32 0.0, %v2081
      %v2083 = vpop.f32.mrb[0].mxu0
      %2084 = vmatprep.mubr.f32.mxu0 0.0
      %2085 = vmatmul.mubr.f32.gmra.mrb[0].mxu0 %v1911
      %v2086 = vpop.f32.mrb[0].mxu0
      %v2087 = vadd.f32 0.0, %v2086
      %v2088 = vpop.f32.mrb[0].mxu0
      %2089 = vmatprep.mubr.f32.mxu0 0.0
      %2090 = vmatmul.mubr.f32.gmra.mrb[0].mxu0 %v1913
      %v2091 = vpop.f32.mrb[0].mxu0
      %v2092 = vadd.f32 0.0, %v2091
      %v2093 = vpop.f32.mrb[0].mxu0
      %2094 = vmatprep.mubr.f32.mxu0 0.0
      %2095 = vmatmul.mubr.f32.gmra.mrb[0].mxu0 %v1915
      %v2096 = vpop.f32.mrb[0].mxu0
      %v2097 = vadd.f32 0.0, %v2096
      %v2098 = vpop.f32.mrb[0].mxu0
      %2099 = vmatprep.mubr.f32.mxu0 0.0
      %2100 = vmatmul.mubr.f32.gmra.mrb[0].mxu0 %v1917
      %v2101 = vpop.f32.mrb[0].mxu0
      %v2102 = vadd.f32 0.0, %v2101
      %v2103 = vpop.f32.mrb[0].mxu0
      %2104 = vmatprep.mubr.f32.mxu0 0.0
      %2105 = vmatmul.mubr.f32.gmra.mrb[0].mxu0 %v1919
      %v2106 = vpop.f32.mrb[0].mxu0
      %v2107 = vadd.f32 0.0, %v2106
      %v2108 = vpop.f32.mrb[0].mxu0
      %2109 = vmatprep.mubr.f32.mxu0 0.0
      %2110 = vmatmul.mubr.f32.gmra.mrb[0].mxu0 %v1921
      %v2111 = vpop.f32.mrb[0].mxu0
      %v2112 = vadd.f32 0.0, %v2111
      %v2113 = vpop.f32.mrb[0].mxu0
      %2114 = vmatprep.mubr.f32.mxu0 0.0
      %2115 = vmatmul.mubr.f32.gmra.mrb[0].mxu0 %v1923
      %v2116 = vpop.f32.mrb[0].mxu0
      %v2117 = vadd.f32 0.0, %v2116
      %v2118 = vpop.f32.mrb[0].mxu0
      %2119 = vmatprep.mubr.f32.mxu0 0.0
      %2120 = vmatmul.mubr.f32.gmra.mrb[0].mxu0 %v1925
      %v2121 = vpop.f32.mrb[0].mxu0
      %v2122 = vadd.f32 0.0, %v2121
      %v2123 = vpop.f32.mrb[0].mxu0
      %2124 = vmatprep.mubr.f32.mxu0 0.0
      %2125 = vmatmul.mubr.f32.gmra.mrb[0].mxu0 %v1927
      %v2126 = vpop.f32.mrb[0].mxu0
      %v2127 = vadd.f32 0.0, %v2126
      %v2128 = vpop.f32.mrb[0].mxu0
      %2129 = vmatprep.mubr.f32.mxu0 0.0
      %2130 = vmatmul.mubr.f32.gmra.mrb[0].mxu0 %v1929
      %v2131 = vpop.f32.mrb[0].mxu0
      %v2132 = vadd.f32 0.0, %v2131
      %v2133 = vpop.f32.mrb[0].mxu0
      %2134 = vmatprep.mubr.f32.mxu0 0.0
      %2135 = vmatmul.mubr.f32.gmra.mrb[0].mxu0 %v1931
      %v2136 = vpop.f32.mrb[0].mxu0
      %v2137 = vadd.f32 0.0, %v2136
      %v2138 = vpop.f32.mrb[0].mxu0
      %2139 = vmatprep.mubr.f32.mxu0 0.0
      %2140 = vmatmul.mubr.f32.gmra.mrb[0].mxu0 %v1933
      %v2141 = vpop.f32.mrb[0].mxu0
      %v2142 = vadd.f32 0.0, %v2141
      %v2143 = vpop.f32.mrb[0].mxu0
      %2144 = vmatprep.mubr.f32.mxu0 0.0
      %2145 = vmatmul.mubr.f32.gmra.mrb[0].mxu0 %v1935
      %v2146 = vpop.f32.mrb[0].mxu0
      %v2147 = vadd.f32 0.0, %v2146
      %v2148 = vpop.f32.mrb[0].mxu0
      %2149 = vmatprep.mubr.f32.mxu0 0.0
      %2150 = vmatmul.mubr.f32.gmra.mrb[0].mxu0 %v1937
      %v2151 = vpop.f32.mrb[0].mxu0
      %v2152 = vadd.f32 0.0, %v2151
      %v2153 = vpop.f32.mrb[0].mxu0
      %2154 = vmatprep.mubr.f32.mxu0 0.0
      %2155 = vmatmul.mubr.f32.gmra.mrb[0].mxu0 %v1939
      %v2156 = vpop.f32.mrb[0].mxu0
      %v2157 = vadd.f32 0.0, %v2156
      %v2158 = vpop.f32.mrb[0].mxu0
      %2159 = vmatprep.mubr.f32.mxu0 0.0
      %2160 = vmatmul.mubr.f32.gmra.mrb[0].mxu0 %v1941
      %v2161 = vpop.f32.mrb[0].mxu0
      %v2162 = vadd.f32 0.0, %v2161
      %v2163 = vpop.f32.mrb[0].mxu0
      %2164 = vmatprep.mubr.f32.mxu0 0.0
      %2165 = vmatmul.mubr.f32.gmra.mrb[0].mxu0 %v1943
      %v2166 = vpop.f32.mrb[0].mxu0
      %v2167 = vadd.f32 0.0, %v2166
      %v2168 = vpop.f32.mrb[0].mxu0
      %2169 = vdwg.mxu0
      %v2170 = vadd.f32 %v1752, %v2012
      %v2171 = vadd.f32 %v1753, %v2017
      %v2172 = vadd.f32 %v1754, %v2022
      %v2173 = vadd.f32 %v1755, %v2027
      %v2174 = vadd.f32 %v1756, %v2032
      %v2175 = vadd.f32 %v1757, %v2037
      %v2176 = vadd.f32 %v1758, %v2042
      %v2177 = vadd.f32 %v1759, %v2047
      %v2178 = vadd.f32 %v1760, %v2052
      %v2179 = vadd.f32 %v1761, %v2057
      %v2180 = vadd.f32 %v1762, %v2062
      %v2181 = vadd.f32 %v1763, %v2067
      %v2182 = vadd.f32 %v1764, %v2072
      %v2183 = vadd.f32 %v1765, %v2077
      %v2184 = vadd.f32 %v1766, %v2082
      %v2185 = vadd.f32 %v1767, %v2087
      %v2186 = vadd.f32 %v1768, %v2092
      %v2187 = vadd.f32 %v1769, %v2097
      %v2188 = vadd.f32 %v1770, %v2102
      %v2189 = vadd.f32 %v1771, %v2107
      %v2190 = vadd.f32 %v1772, %v2112
      %v2191 = vadd.f32 %v1773, %v2117
      %v2192 = vadd.f32 %v1774, %v2122
      %v2193 = vadd.f32 %v1775, %v2127
      %v2194 = vadd.f32 %v1776, %v2132
      %v2195 = vadd.f32 %v1777, %v2137
      %v2196 = vadd.f32 %v1778, %v2142
      %v2197 = vadd.f32 %v1779, %v2147
      %v2198 = vadd.f32 %v1780, %v2152
      %v2199 = vadd.f32 %v1781, %v2157
      %v2200 = vadd.f32 %v1782, %v2162
      %v2201 = vadd.f32 %v1783, %v2167
      %v2205 = vrot.slane %v968, 7
      %v2206 = vrot.slane %v969, 7
      %v2207 = vsel %vm1060, %v2205, %v2206
      %v2208 = vrot.slane %v970, 7
      %v2209 = vsel %vm1060, %v2206, %v2208
      %v2210 = vsel %vm1141, %v2207, 0
      %v2212 = vsel %vm1141, %v2209, 0
      %2214 = vmatprep.subr.mxu0 0.0
      %2215 = vmatpush1.msra.mxu0 %v988
      %2216 = vmatprep.subr.mxu0 0.0
      %2217 = vmatpush1.msra.mxu0 %v989
      %2218 = vmatprep.subr.mxu0 0.0
      %2219 = vmatpush1.msra.mxu0 %v990
      %2220 = vmatprep.subr.mxu0 0.0
      %2221 = vmatpush1.msra.mxu0 %v991
      %2222 = vmatprep.subr.mxu0 0.0
      %2223 = vmatpush1.msra.mxu0 0.0
      %2224 = vmatprep.subr.mxu0 0.0
      %2225 = vmatpush1.msra.mxu0 0.0
      %2226 = vmatprep.subr.mxu0 0.0
      %2227 = vmatpush1.msra.mxu0 0.0
      %2228 = vmatprep.subr.mxu0 0.0
      %2229 = vmatpush1.msra.mxu0 0.0
      %2230 = vmatprep.subr.mxu0 0.0
      %2231 = vmatpush1.msra.mxu0 0.0
      %2232 = vmatprep.subr.mxu0 0.0
      %2233 = vmatpush1.msra.mxu0 0.0
      %2234 = vmatprep.subr.mxu0 0.0
      %2235 = vmatpush1.msra.mxu0 0.0
      %2236 = vmatprep.subr.mxu0 0.0
      %2237 = vmatpush1.msra.mxu0 0.0
      %2238 = vmatprep.subr.mxu0 0.0
      %2239 = vmatpush1.msra.mxu0 0.0
      %2240 = vmatprep.subr.mxu0 0.0
      %2241 = vmatpush1.msra.mxu0 0.0
      %2242 = vmatprep.subr.mxu0 0.0
      %2243 = vmatpush1.msra.mxu0 0.0
      %2244 = vmatprep.subr.mxu0 0.0
      %2245 = vmatpush1.msra.mxu0 0.0
      %2246 = vmatprep.subr.mxu0 0.0
      %2247 = vmatpush1.msra.mxu0 0.0
      %2248 = vmatprep.subr.mxu0 0.0
      %2249 = vmatpush1.msra.mxu0 0.0
      %2250 = vmatprep.subr.mxu0 0.0
      %2251 = vmatpush1.msra.mxu0 0.0
      %2252 = vmatprep.subr.mxu0 0.0
      %2253 = vmatpush1.msra.mxu0 0.0
      %2254 = vmatprep.subr.mxu0 0.0
      %2255 = vmatpush1.msra.mxu0 0.0
      %2256 = vmatprep.subr.mxu0 0.0
      %2257 = vmatpush1.msra.mxu0 0.0
      %2258 = vmatprep.subr.mxu0 0.0
      %2259 = vmatpush1.msra.mxu0 0.0
      %2260 = vmatprep.subr.mxu0 0.0
      %2261 = vmatpush1.msra.mxu0 0.0
      %2262 = vmatprep.subr.mxu0 0.0
      %2263 = vmatpush1.msra.mxu0 0.0
      %2264 = vmatprep.subr.mxu0 0.0
      %2265 = vmatpush1.msra.mxu0 0.0
      %2266 = vmatprep.subr.mxu0 0.0
      %2267 = vmatpush1.msra.mxu0 0.0
      %2268 = vmatprep.subr.mxu0 0.0
      %2269 = vmatpush1.msra.mxu0 0.0
      %2270 = vmatprep.subr.mxu0 0.0
      %2271 = vmatpush1.msra.mxu0 0.0
      %2272 = vmatprep.subr.mxu0 0.0
      %2273 = vmatpush1.msra.mxu0 0.0
      %2274 = vmatprep.subr.mxu0 0.0
      %2275 = vmatpush1.msra.mxu0 0.0
      %2276 = vmatprep.subr.mxu0 0.0
      %2277 = vmatpush1.msra.mxu0 0.0
      %2278 = vmatprep.mubr.f32.mxu0 0.0
      %2279 = vmatmul.mubr.f32.gmra.mrb[0].mxu0 %v1146
      %v2280 = vpop.f32.mrb[0].mxu0
      %v2281 = vadd.f32 0.0, %v2280
      %v2282 = vpop.f32.mrb[0].mxu0
      %2283 = vmatprep.mubr.f32.mxu0 0.0
      %2284 = vmatmul.mubr.f32.gmra.mrb[0].mxu0 %v1148
      %v2285 = vpop.f32.mrb[0].mxu0
      %v2286 = vadd.f32 0.0, %v2285
      %v2287 = vpop.f32.mrb[0].mxu0
      %2288 = vmatprep.mubr.f32.mxu0 0.0
      %2289 = vmatmul.mubr.f32.gmra.mrb[0].mxu0 %v1150
      %v2290 = vpop.f32.mrb[0].mxu0
      %v2291 = vadd.f32 0.0, %v2290
      %v2292 = vpop.f32.mrb[0].mxu0
      %2293 = vmatprep.mubr.f32.mxu0 0.0
      %2294 = vmatmul.mubr.f32.gmra.mrb[0].mxu0 %v1152
      %v2295 = vpop.f32.mrb[0].mxu0
      %v2296 = vadd.f32 0.0, %v2295
      %v2297 = vpop.f32.mrb[0].mxu0
      %2298 = vmatprep.mubr.f32.mxu0 0.0
      %2299 = vmatmul.mubr.f32.gmra.mrb[0].mxu0 %v1154
      %v2300 = vpop.f32.mrb[0].mxu0
      %v2301 = vadd.f32 0.0, %v2300
      %v2302 = vpop.f32.mrb[0].mxu0
      %2303 = vmatprep.mubr.f32.mxu0 0.0
      %2304 = vmatmul.mubr.f32.gmra.mrb[0].mxu0 %v1156
      %v2305 = vpop.f32.mrb[0].mxu0
      %v2306 = vadd.f32 0.0, %v2305
      %v2307 = vpop.f32.mrb[0].mxu0
      %2308 = vmatprep.mubr.f32.mxu0 0.0
      %2309 = vmatmul.mubr.f32.gmra.mrb[0].mxu0 %v1158
      %v2310 = vpop.f32.mrb[0].mxu0
      %v2311 = vadd.f32 0.0, %v2310
      %v2312 = vpop.f32.mrb[0].mxu0
      %2313 = vmatprep.mubr.f32.mxu0 0.0
      %2314 = vmatmul.mubr.f32.gmra.mrb[0].mxu0 %v1160
      %v2315 = vpop.f32.mrb[0].mxu0
      %v2316 = vadd.f32 0.0, %v2315
      %v2317 = vpop.f32.mrb[0].mxu0
      %2318 = vmatprep.mubr.f32.mxu0 0.0
      %2319 = vmatmul.mubr.f32.gmra.mrb[0].mxu0 %v1162
      %v2320 = vpop.f32.mrb[0].mxu0
      %v2321 = vadd.f32 0.0, %v2320
      %v2322 = vpop.f32.mrb[0].mxu0
      %2323 = vmatprep.mubr.f32.mxu0 0.0
      %2324 = vmatmul.mubr.f32.gmra.mrb[0].mxu0 %v1164
      %v2325 = vpop.f32.mrb[0].mxu0
      %v2326 = vadd.f32 0.0, %v2325
      %v2327 = vpop.f32.mrb[0].mxu0
      %2328 = vmatprep.mubr.f32.mxu0 0.0
      %2329 = vmatmul.mubr.f32.gmra.mrb[0].mxu0 %v1166
      %v2330 = vpop.f32.mrb[0].mxu0
      %v2331 = vadd.f32 0.0, %v2330
      %v2332 = vpop.f32.mrb[0].mxu0
      %2333 = vmatprep.mubr.f32.mxu0 0.0
      %2334 = vmatmul.mubr.f32.gmra.mrb[0].mxu0 %v1168
      %v2335 = vpop.f32.mrb[0].mxu0
      %v2336 = vadd.f32 0.0, %v2335
      %v2337 = vpop.f32.mrb[0].mxu0
      %2338 = vmatprep.mubr.f32.mxu0 0.0
      %2339 = vmatmul.mubr.f32.gmra.mrb[0].mxu0 %v1170
      %v2340 = vpop.f32.mrb[0].mxu0
      %v2341 = vadd.f32 0.0, %v2340
      %v2342 = vpop.f32.mrb[0].mxu0
      %2343 = vmatprep.mubr.f32.mxu0 0.0
      %2344 = vmatmul.mubr.f32.gmra.mrb[0].mxu0 %v1172
      %v2345 = vpop.f32.mrb[0].mxu0
      %v2346 = vadd.f32 0.0, %v2345
      %v2347 = vpop.f32.mrb[0].mxu0
      %2348 = vmatprep.mubr.f32.mxu0 0.0
      %2349 = vmatmul.mubr.f32.gmra.mrb[0].mxu0 %v1174
      %v2350 = vpop.f32.mrb[0].mxu0
      %v2351 = vadd.f32 0.0, %v2350
      %v2352 = vpop.f32.mrb[0].mxu0
      %2353 = vmatprep.mubr.f32.mxu0 0.0
      %2354 = vmatmul.mubr.f32.gmra.mrb[0].mxu0 %v1176
      %v2355 = vpop.f32.mrb[0].mxu0
      %v2356 = vadd.f32 0.0, %v2355
      %v2357 = vpop.f32.mrb[0].mxu0
      %2358 = vmatprep.mubr.f32.mxu0 0.0
      %2359 = vmatmul.mubr.f32.gmra.mrb[0].mxu0 %v1178
      %v2360 = vpop.f32.mrb[0].mxu0
      %v2361 = vadd.f32 0.0, %v2360
      %v2362 = vpop.f32.mrb[0].mxu0
      %2363 = vmatprep.mubr.f32.mxu0 0.0
      %2364 = vmatmul.mubr.f32.gmra.mrb[0].mxu0 %v1180
      %v2365 = vpop.f32.mrb[0].mxu0
      %v2366 = vadd.f32 0.0, %v2365
      %v2367 = vpop.f32.mrb[0].mxu0
      %2368 = vmatprep.mubr.f32.mxu0 0.0
      %2369 = vmatmul.mubr.f32.gmra.mrb[0].mxu0 %v1182
      %v2370 = vpop.f32.mrb[0].mxu0
      %v2371 = vadd.f32 0.0, %v2370
      %v2372 = vpop.f32.mrb[0].mxu0
      %2373 = vmatprep.mubr.f32.mxu0 0.0
      %2374 = vmatmul.mubr.f32.gmra.mrb[0].mxu0 %v1184
      %v2375 = vpop.f32.mrb[0].mxu0
      %v2376 = vadd.f32 0.0, %v2375
      %v2377 = vpop.f32.mrb[0].mxu0
      %2378 = vmatprep.mubr.f32.mxu0 0.0
      %2379 = vmatmul.mubr.f32.gmra.mrb[0].mxu0 %v1186
      %v2380 = vpop.f32.mrb[0].mxu0
      %v2381 = vadd.f32 0.0, %v2380
      %v2382 = vpop.f32.mrb[0].mxu0
      %2383 = vmatprep.mubr.f32.mxu0 0.0
      %2384 = vmatmul.mubr.f32.gmra.mrb[0].mxu0 %v1188
      %v2385 = vpop.f32.mrb[0].mxu0
      %v2386 = vadd.f32 0.0, %v2385
      %v2387 = vpop.f32.mrb[0].mxu0
      %2388 = vmatprep.mubr.f32.mxu0 0.0
      %2389 = vmatmul.mubr.f32.gmra.mrb[0].mxu0 %v1190
      %v2390 = vpop.f32.mrb[0].mxu0
      %v2391 = vadd.f32 0.0, %v2390
      %v2392 = vpop.f32.mrb[0].mxu0
      %2393 = vmatprep.mubr.f32.mxu0 0.0
      %2394 = vmatmul.mubr.f32.gmra.mrb[0].mxu0 %v1192
      %v2395 = vpop.f32.mrb[0].mxu0
      %v2396 = vadd.f32 0.0, %v2395
      %v2397 = vpop.f32.mrb[0].mxu0
      %2398 = vmatprep.mubr.f32.mxu0 0.0
      %2399 = vmatmul.mubr.f32.gmra.mrb[0].mxu0 %v1194
      %v2400 = vpop.f32.mrb[0].mxu0
      %v2401 = vadd.f32 0.0, %v2400
      %v2402 = vpop.f32.mrb[0].mxu0
      %2403 = vmatprep.mubr.f32.mxu0 0.0
      %2404 = vmatmul.mubr.f32.gmra.mrb[0].mxu0 %v1196
      %v2405 = vpop.f32.mrb[0].mxu0
      %v2406 = vadd.f32 0.0, %v2405
      %v2407 = vpop.f32.mrb[0].mxu0
      %2408 = vmatprep.mubr.f32.mxu0 0.0
      %2409 = vmatmul.mubr.f32.gmra.mrb[0].mxu0 %v1198
      %v2410 = vpop.f32.mrb[0].mxu0
      %v2411 = vadd.f32 0.0, %v2410
      %v2412 = vpop.f32.mrb[0].mxu0
      %2413 = vmatprep.mubr.f32.mxu0 0.0
      %2414 = vmatmul.mubr.f32.gmra.mrb[0].mxu0 %v1200
      %v2415 = vpop.f32.mrb[0].mxu0
      %v2416 = vadd.f32 0.0, %v2415
      %v2417 = vpop.f32.mrb[0].mxu0
      %2418 = vmatprep.mubr.f32.mxu0 0.0
      %2419 = vmatmul.mubr.f32.gmra.mrb[0].mxu0 %v1202
      %v2420 = vpop.f32.mrb[0].mxu0
      %v2421 = vadd.f32 0.0, %v2420
      %v2422 = vpop.f32.mrb[0].mxu0
      %2423 = vmatprep.mubr.f32.mxu0 0.0
      %2424 = vmatmul.mubr.f32.gmra.mrb[0].mxu0 %v1204
      %v2425 = vpop.f32.mrb[0].mxu0
      %v2426 = vadd.f32 0.0, %v2425
      %v2427 = vpop.f32.mrb[0].mxu0
      %2428 = vmatprep.mubr.f32.mxu0 0.0
      %2429 = vmatmul.mubr.f32.gmra.mrb[0].mxu0 %v2210
      %v2430 = vpop.f32.mrb[0].mxu0
      %v2431 = vadd.f32 0.0, %v2430
      %v2432 = vpop.f32.mrb[0].mxu0
      %2433 = vmatprep.mubr.f32.mxu0 0.0
      %2434 = vmatmul.mubr.f32.gmra.mrb[0].mxu0 %v2212
      %v2435 = vpop.f32.mrb[0].mxu0
      %v2436 = vadd.f32 0.0, %v2435
      %v2437 = vpop.f32.mrb[0].mxu0
      %2438 = vdwg.mxu0
      %v2439 = vadd.f32 %v2170, %v2281
      %v2440 = vadd.f32 %v2171, %v2286
      %v2441 = vadd.f32 %v2172, %v2291
      %v2442 = vadd.f32 %v2173, %v2296
      %v2443 = vadd.f32 %v2174, %v2301
      %v2444 = vadd.f32 %v2175, %v2306
      %v2445 = vadd.f32 %v2176, %v2311
      %v2446 = vadd.f32 %v2177, %v2316
      %v2447 = vadd.f32 %v2178, %v2321
      %v2448 = vadd.f32 %v2179, %v2326
      %v2449 = vadd.f32 %v2180, %v2331
      %v2450 = vadd.f32 %v2181, %v2336
      %v2451 = vadd.f32 %v2182, %v2341
      %v2452 = vadd.f32 %v2183, %v2346
      %v2453 = vadd.f32 %v2184, %v2351
      %v2454 = vadd.f32 %v2185, %v2356
      %v2455 = vadd.f32 %v2186, %v2361
      %v2456 = vadd.f32 %v2187, %v2366
      %v2457 = vadd.f32 %v2188, %v2371
      %v2458 = vadd.f32 %v2189, %v2376
      %v2459 = vadd.f32 %v2190, %v2381
      %v2460 = vadd.f32 %v2191, %v2386
      %v2461 = vadd.f32 %v2192, %v2391
      %v2462 = vadd.f32 %v2193, %v2396
      %v2463 = vadd.f32 %v2194, %v2401
      %v2464 = vadd.f32 %v2195, %v2406
      %v2465 = vadd.f32 %v2196, %v2411
      %v2466 = vadd.f32 %v2197, %v2416
      %v2467 = vadd.f32 %v2198, %v2421
      %v2468 = vadd.f32 %v2199, %v2426
      %v2469 = vadd.f32 %v2200, %v2431
      %v2470 = vadd.f32 %v2201, %v2436
      %v2471 = vsel %vm1141, %v969, 0
      %v2473 = vsel %vm1141, %v970, 0
      %2475 = vmatprep.subr.mxu0 0.0
      %2476 = vmatpush1.msra.mxu0 %v992
      %2477 = vmatprep.subr.mxu0 0.0
      %2478 = vmatpush1.msra.mxu0 %v993
      %2479 = vmatprep.subr.mxu0 0.0
      %2480 = vmatpush1.msra.mxu0 %v994
      %2481 = vmatprep.subr.mxu0 0.0
      %2482 = vmatpush1.msra.mxu0 %v995
      %2483 = vmatprep.subr.mxu0 0.0
      %2484 = vmatpush1.msra.mxu0 0.0
      %2485 = vmatprep.subr.mxu0 0.0
      %2486 = vmatpush1.msra.mxu0 0.0
      %2487 = vmatprep.subr.mxu0 0.0
      %2488 = vmatpush1.msra.mxu0 0.0
      %2489 = vmatprep.subr.mxu0 0.0
      %2490 = vmatpush1.msra.mxu0 0.0
      %2491 = vmatprep.subr.mxu0 0.0
      %2492 = vmatpush1.msra.mxu0 0.0
      %2493 = vmatprep.subr.mxu0 0.0
      %2494 = vmatpush1.msra.mxu0 0.0
      %2495 = vmatprep.subr.mxu0 0.0
      %2496 = vmatpush1.msra.mxu0 0.0
      %2497 = vmatprep.subr.mxu0 0.0
      %2498 = vmatpush1.msra.mxu0 0.0
      %2499 = vmatprep.subr.mxu0 0.0
      %2500 = vmatpush1.msra.mxu0 0.0
      %2501 = vmatprep.subr.mxu0 0.0
      %2502 = vmatpush1.msra.mxu0 0.0
      %2503 = vmatprep.subr.mxu0 0.0
      %2504 = vmatpush1.msra.mxu0 0.0
      %2505 = vmatprep.subr.mxu0 0.0
      %2506 = vmatpush1.msra.mxu0 0.0
      %2507 = vmatprep.subr.mxu0 0.0
      %2508 = vmatpush1.msra.mxu0 0.0
      %2509 = vmatprep.subr.mxu0 0.0
      %2510 = vmatpush1.msra.mxu0 0.0
      %2511 = vmatprep.subr.mxu0 0.0
      %2512 = vmatpush1.msra.mxu0 0.0
      %2513 = vmatprep.subr.mxu0 0.0
      %2514 = vmatpush1.msra.mxu0 0.0
      %2515 = vmatprep.subr.mxu0 0.0
      %2516 = vmatpush1.msra.mxu0 0.0
      %2517 = vmatprep.subr.mxu0 0.0
      %2518 = vmatpush1.msra.mxu0 0.0
      %2519 = vmatprep.subr.mxu0 0.0
      %2520 = vmatpush1.msra.mxu0 0.0
      %2521 = vmatprep.subr.mxu0 0.0
      %2522 = vmatpush1.msra.mxu0 0.0
      %2523 = vmatprep.subr.mxu0 0.0
      %2524 = vmatpush1.msra.mxu0 0.0
      %2525 = vmatprep.subr.mxu0 0.0
      %2526 = vmatpush1.msra.mxu0 0.0
      %2527 = vmatprep.subr.mxu0 0.0
      %2528 = vmatpush1.msra.mxu0 0.0
      %2529 = vmatprep.subr.mxu0 0.0
      %2530 = vmatpush1.msra.mxu0 0.0
      %2531 = vmatprep.subr.mxu0 0.0
      %2532 = vmatpush1.msra.mxu0 0.0
      %2533 = vmatprep.subr.mxu0 0.0
      %2534 = vmatpush1.msra.mxu0 0.0
      %2535 = vmatprep.subr.mxu0 0.0
      %2536 = vmatpush1.msra.mxu0 0.0
      %2537 = vmatprep.subr.mxu0 0.0
      %2538 = vmatpush1.msra.mxu0 0.0
      %2539 = vmatprep.mubr.f32.mxu0 0.0
      %2540 = vmatmul.mubr.f32.gmra.mrb[0].mxu0 %v1467
      %v2541 = vpop.f32.mrb[0].mxu0
      %v2542 = vadd.f32 0.0, %v2541
      %v2543 = vpop.f32.mrb[0].mxu0
      %2544 = vmatprep.mubr.f32.mxu0 0.0
      %2545 = vmatmul.mubr.f32.gmra.mrb[0].mxu0 %v1469
      %v2546 = vpop.f32.mrb[0].mxu0
      %v2547 = vadd.f32 0.0, %v2546
      %v2548 = vpop.f32.mrb[0].mxu0
      %2549 = vmatprep.mubr.f32.mxu0 0.0
      %2550 = vmatmul.mubr.f32.gmra.mrb[0].mxu0 %v1471
      %v2551 = vpop.f32.mrb[0].mxu0
      %v2552 = vadd.f32 0.0, %v2551
      %v2553 = vpop.f32.mrb[0].mxu0
      %2554 = vmatprep.mubr.f32.mxu0 0.0
      %2555 = vmatmul.mubr.f32.gmra.mrb[0].mxu0 %v1473
      %v2556 = vpop.f32.mrb[0].mxu0
      %v2557 = vadd.f32 0.0, %v2556
      %v2558 = vpop.f32.mrb[0].mxu0
      %2559 = vmatprep.mubr.f32.mxu0 0.0
      %2560 = vmatmul.mubr.f32.gmra.mrb[0].mxu0 %v1475
      %v2561 = vpop.f32.mrb[0].mxu0
      %v2562 = vadd.f32 0.0, %v2561
      %v2563 = vpop.f32.mrb[0].mxu0
      %2564 = vmatprep.mubr.f32.mxu0 0.0
      %2565 = vmatmul.mubr.f32.gmra.mrb[0].mxu0 %v1477
      %v2566 = vpop.f32.mrb[0].mxu0
      %v2567 = vadd.f32 0.0, %v2566
      %v2568 = vpop.f32.mrb[0].mxu0
      %2569 = vmatprep.mubr.f32.mxu0 0.0
      %2570 = vmatmul.mubr.f32.gmra.mrb[0].mxu0 %v1479
      %v2571 = vpop.f32.mrb[0].mxu0
      %v2572 = vadd.f32 0.0, %v2571
      %v2573 = vpop.f32.mrb[0].mxu0
      %2574 = vmatprep.mubr.f32.mxu0 0.0
      %2575 = vmatmul.mubr.f32.gmra.mrb[0].mxu0 %v1481
      %v2576 = vpop.f32.mrb[0].mxu0
      %v2577 = vadd.f32 0.0, %v2576
      %v2578 = vpop.f32.mrb[0].mxu0
      %2579 = vmatprep.mubr.f32.mxu0 0.0
      %2580 = vmatmul.mubr.f32.gmra.mrb[0].mxu0 %v1483
      %v2581 = vpop.f32.mrb[0].mxu0
      %v2582 = vadd.f32 0.0, %v2581
      %v2583 = vpop.f32.mrb[0].mxu0
      %2584 = vmatprep.mubr.f32.mxu0 0.0
      %2585 = vmatmul.mubr.f32.gmra.mrb[0].mxu0 %v1485
      %v2586 = vpop.f32.mrb[0].mxu0
      %v2587 = vadd.f32 0.0, %v2586
      %v2588 = vpop.f32.mrb[0].mxu0
      %2589 = vmatprep.mubr.f32.mxu0 0.0
      %2590 = vmatmul.mubr.f32.gmra.mrb[0].mxu0 %v1487
      %v2591 = vpop.f32.mrb[0].mxu0
      %v2592 = vadd.f32 0.0, %v2591
      %v2593 = vpop.f32.mrb[0].mxu0
      %2594 = vmatprep.mubr.f32.mxu0 0.0
      %2595 = vmatmul.mubr.f32.gmra.mrb[0].mxu0 %v1489
      %v2596 = vpop.f32.mrb[0].mxu0
      %v2597 = vadd.f32 0.0, %v2596
      %v2598 = vpop.f32.mrb[0].mxu0
      %2599 = vmatprep.mubr.f32.mxu0 0.0
      %2600 = vmatmul.mubr.f32.gmra.mrb[0].mxu0 %v1491
      %v2601 = vpop.f32.mrb[0].mxu0
      %v2602 = vadd.f32 0.0, %v2601
      %v2603 = vpop.f32.mrb[0].mxu0
      %2604 = vmatprep.mubr.f32.mxu0 0.0
      %2605 = vmatmul.mubr.f32.gmra.mrb[0].mxu0 %v1493
      %v2606 = vpop.f32.mrb[0].mxu0
      %v2607 = vadd.f32 0.0, %v2606
      %v2608 = vpop.f32.mrb[0].mxu0
      %2609 = vmatprep.mubr.f32.mxu0 0.0
      %2610 = vmatmul.mubr.f32.gmra.mrb[0].mxu0 %v1495
      %v2611 = vpop.f32.mrb[0].mxu0
      %v2612 = vadd.f32 0.0, %v2611
      %v2613 = vpop.f32.mrb[0].mxu0
      %2614 = vmatprep.mubr.f32.mxu0 0.0
      %2615 = vmatmul.mubr.f32.gmra.mrb[0].mxu0 %v1497
      %v2616 = vpop.f32.mrb[0].mxu0
      %v2617 = vadd.f32 0.0, %v2616
      %v2618 = vpop.f32.mrb[0].mxu0
      %2619 = vmatprep.mubr.f32.mxu0 0.0
      %2620 = vmatmul.mubr.f32.gmra.mrb[0].mxu0 %v1499
      %v2621 = vpop.f32.mrb[0].mxu0
      %v2622 = vadd.f32 0.0, %v2621
      %v2623 = vpop.f32.mrb[0].mxu0
      %2624 = vmatprep.mubr.f32.mxu0 0.0
      %2625 = vmatmul.mubr.f32.gmra.mrb[0].mxu0 %v1501
      %v2626 = vpop.f32.mrb[0].mxu0
      %v2627 = vadd.f32 0.0, %v2626
      %v2628 = vpop.f32.mrb[0].mxu0
      %2629 = vmatprep.mubr.f32.mxu0 0.0
      %2630 = vmatmul.mubr.f32.gmra.mrb[0].mxu0 %v1503
      %v2631 = vpop.f32.mrb[0].mxu0
      %v2632 = vadd.f32 0.0, %v2631
      %v2633 = vpop.f32.mrb[0].mxu0
      %2634 = vmatprep.mubr.f32.mxu0 0.0
      %2635 = vmatmul.mubr.f32.gmra.mrb[0].mxu0 %v1505
      %v2636 = vpop.f32.mrb[0].mxu0
      %v2637 = vadd.f32 0.0, %v2636
      %v2638 = vpop.f32.mrb[0].mxu0
      %2639 = vmatprep.mubr.f32.mxu0 0.0
      %2640 = vmatmul.mubr.f32.gmra.mrb[0].mxu0 %v1507
      %v2641 = vpop.f32.mrb[0].mxu0
      %v2642 = vadd.f32 0.0, %v2641
      %v2643 = vpop.f32.mrb[0].mxu0
      %2644 = vmatprep.mubr.f32.mxu0 0.0
      %2645 = vmatmul.mubr.f32.gmra.mrb[0].mxu0 %v1509
      %v2646 = vpop.f32.mrb[0].mxu0
      %v2647 = vadd.f32 0.0, %v2646
      %v2648 = vpop.f32.mrb[0].mxu0
      %2649 = vmatprep.mubr.f32.mxu0 0.0
      %2650 = vmatmul.mubr.f32.gmra.mrb[0].mxu0 %v1511
      %v2651 = vpop.f32.mrb[0].mxu0
      %v2652 = vadd.f32 0.0, %v2651
      %v2653 = vpop.f32.mrb[0].mxu0
      %2654 = vmatprep.mubr.f32.mxu0 0.0
      %2655 = vmatmul.mubr.f32.gmra.mrb[0].mxu0 %v1513
      %v2656 = vpop.f32.mrb[0].mxu0
      %v2657 = vadd.f32 0.0, %v2656
      %v2658 = vpop.f32.mrb[0].mxu0
      %2659 = vmatprep.mubr.f32.mxu0 0.0
      %2660 = vmatmul.mubr.f32.gmra.mrb[0].mxu0 %v1515
      %v2661 = vpop.f32.mrb[0].mxu0
      %v2662 = vadd.f32 0.0, %v2661
      %v2663 = vpop.f32.mrb[0].mxu0
      %2664 = vmatprep.mubr.f32.mxu0 0.0
      %2665 = vmatmul.mubr.f32.gmra.mrb[0].mxu0 %v1517
      %v2666 = vpop.f32.mrb[0].mxu0
      %v2667 = vadd.f32 0.0, %v2666
      %v2668 = vpop.f32.mrb[0].mxu0
      %2669 = vmatprep.mubr.f32.mxu0 0.0
      %2670 = vmatmul.mubr.f32.gmra.mrb[0].mxu0 %v1519
      %v2671 = vpop.f32.mrb[0].mxu0
      %v2672 = vadd.f32 0.0, %v2671
      %v2673 = vpop.f32.mrb[0].mxu0
      %2674 = vmatprep.mubr.f32.mxu0 0.0
      %2675 = vmatmul.mubr.f32.gmra.mrb[0].mxu0 %v1521
      %v2676 = vpop.f32.mrb[0].mxu0
      %v2677 = vadd.f32 0.0, %v2676
      %v2678 = vpop.f32.mrb[0].mxu0
      %2679 = vmatprep.mubr.f32.mxu0 0.0
      %2680 = vmatmul.mubr.f32.gmra.mrb[0].mxu0 %v1523
      %v2681 = vpop.f32.mrb[0].mxu0
      %v2682 = vadd.f32 0.0, %v2681
      %v2683 = vpop.f32.mrb[0].mxu0
      %2684 = vmatprep.mubr.f32.mxu0 0.0
      %2685 = vmatmul.mubr.f32.gmra.mrb[0].mxu0 %v1525
      %v2686 = vpop.f32.mrb[0].mxu0
      %v2687 = vadd.f32 0.0, %v2686
      %v2688 = vpop.f32.mrb[0].mxu0
      %2689 = vmatprep.mubr.f32.mxu0 0.0
      %2690 = vmatmul.mubr.f32.gmra.mrb[0].mxu0 %v2471
      %v2691 = vpop.f32.mrb[0].mxu0
      %v2692 = vadd.f32 0.0, %v2691
      %v2693 = vpop.f32.mrb[0].mxu0
      %2694 = vmatprep.mubr.f32.mxu0 0.0
      %2695 = vmatmul.mubr.f32.gmra.mrb[0].mxu0 %v2473
      %v2696 = vpop.f32.mrb[0].mxu0
      %v2697 = vadd.f32 0.0, %v2696
      %v2698 = vpop.f32.mrb[0].mxu0
      %2699 = vdwg.mxu0
      %v2700 = vadd.f32 %v2439, %v2542
      %v2701 = vadd.f32 %v2440, %v2547
      %v2702 = vadd.f32 %v2441, %v2552
      %v2703 = vadd.f32 %v2442, %v2557
      %v2704 = vadd.f32 %v2443, %v2562
      %v2705 = vadd.f32 %v2444, %v2567
      %v2706 = vadd.f32 %v2445, %v2572
      %v2707 = vadd.f32 %v2446, %v2577
      %v2708 = vadd.f32 %v2447, %v2582
      %v2709 = vadd.f32 %v2448, %v2587
      %v2710 = vadd.f32 %v2449, %v2592
      %v2711 = vadd.f32 %v2450, %v2597
      %v2712 = vadd.f32 %v2451, %v2602
      %v2713 = vadd.f32 %v2452, %v2607
      %v2714 = vadd.f32 %v2453, %v2612
      %v2715 = vadd.f32 %v2454, %v2617
      %v2716 = vadd.f32 %v2455, %v2622
      %v2717 = vadd.f32 %v2456, %v2627
      %v2718 = vadd.f32 %v2457, %v2632
      %v2719 = vadd.f32 %v2458, %v2637
      %v2720 = vadd.f32 %v2459, %v2642
      %v2721 = vadd.f32 %v2460, %v2647
      %v2722 = vadd.f32 %v2461, %v2652
      %v2723 = vadd.f32 %v2462, %v2657
      %v2724 = vadd.f32 %v2463, %v2662
      %v2725 = vadd.f32 %v2464, %v2667
      %v2726 = vadd.f32 %v2465, %v2672
      %v2727 = vadd.f32 %v2466, %v2677
      %v2728 = vadd.f32 %v2467, %v2682
      %v2729 = vadd.f32 %v2468, %v2687
      %v2730 = vadd.f32 %v2469, %v2692
      %v2731 = vadd.f32 %v2470, %v2697
      %v2733 = vrot.slane %v969, 1
      %v2734 = vrot.slane %v970, 1
      %v2735 = vsel %vm1800, %v2733, %v2734
      %v2736 = vrot.slane %v971, 1
      %v2737 = vsel %vm1800, %v2734, %v2736
      %v2738 = vsel %vm1141, %v2735, 0
      %v2740 = vsel %vm1141, %v2737, 0
      %2742 = vmatprep.subr.mxu0 0.0
      %2743 = vmatpush1.msra.mxu0 %v996
      %2744 = vmatprep.subr.mxu0 0.0
      %2745 = vmatpush1.msra.mxu0 %v997
      %2746 = vmatprep.subr.mxu0 0.0
      %2747 = vmatpush1.msra.mxu0 %v998
      %2748 = vmatprep.subr.mxu0 0.0
      %2749 = vmatpush1.msra.mxu0 %v999
      %2750 = vmatprep.subr.mxu0 0.0
      %2751 = vmatpush1.msra.mxu0 0.0
      %2752 = vmatprep.subr.mxu0 0.0
      %2753 = vmatpush1.msra.mxu0 0.0
      %2754 = vmatprep.subr.mxu0 0.0
      %2755 = vmatpush1.msra.mxu0 0.0
      %2756 = vmatprep.subr.mxu0 0.0
      %2757 = vmatpush1.msra.mxu0 0.0
      %2758 = vmatprep.subr.mxu0 0.0
      %2759 = vmatpush1.msra.mxu0 0.0
      %2760 = vmatprep.subr.mxu0 0.0
      %2761 = vmatpush1.msra.mxu0 0.0
      %2762 = vmatprep.subr.mxu0 0.0
      %2763 = vmatpush1.msra.mxu0 0.0
      %2764 = vmatprep.subr.mxu0 0.0
      %2765 = vmatpush1.msra.mxu0 0.0
      %2766 = vmatprep.subr.mxu0 0.0
      %2767 = vmatpush1.msra.mxu0 0.0
      %2768 = vmatprep.subr.mxu0 0.0
      %2769 = vmatpush1.msra.mxu0 0.0
      %2770 = vmatprep.subr.mxu0 0.0
      %2771 = vmatpush1.msra.mxu0 0.0
      %2772 = vmatprep.subr.mxu0 0.0
      %2773 = vmatpush1.msra.mxu0 0.0
      %2774 = vmatprep.subr.mxu0 0.0
      %2775 = vmatpush1.msra.mxu0 0.0
      %2776 = vmatprep.subr.mxu0 0.0
      %2777 = vmatpush1.msra.mxu0 0.0
      %2778 = vmatprep.subr.mxu0 0.0
      %2779 = vmatpush1.msra.mxu0 0.0
      %2780 = vmatprep.subr.mxu0 0.0
      %2781 = vmatpush1.msra.mxu0 0.0
      %2782 = vmatprep.subr.mxu0 0.0
      %2783 = vmatpush1.msra.mxu0 0.0
      %2784 = vmatprep.subr.mxu0 0.0
      %2785 = vmatpush1.msra.mxu0 0.0
      %2786 = vmatprep.subr.mxu0 0.0
      %2787 = vmatpush1.msra.mxu0 0.0
      %2788 = vmatprep.subr.mxu0 0.0
      %2789 = vmatpush1.msra.mxu0 0.0
      %2790 = vmatprep.subr.mxu0 0.0
      %2791 = vmatpush1.msra.mxu0 0.0
      %2792 = vmatprep.subr.mxu0 0.0
      %2793 = vmatpush1.msra.mxu0 0.0
      %2794 = vmatprep.subr.mxu0 0.0
      %2795 = vmatpush1.msra.mxu0 0.0
      %2796 = vmatprep.subr.mxu0 0.0
      %2797 = vmatpush1.msra.mxu0 0.0
      %2798 = vmatprep.subr.mxu0 0.0
      %2799 = vmatpush1.msra.mxu0 0.0
      %2800 = vmatprep.subr.mxu0 0.0
      %2801 = vmatpush1.msra.mxu0 0.0
      %2802 = vmatprep.subr.mxu0 0.0
      %2803 = vmatpush1.msra.mxu0 0.0
      %2804 = vmatprep.subr.mxu0 0.0
      %2805 = vmatpush1.msra.mxu0 0.0
      %2806 = vmatprep.mubr.f32.mxu0 0.0
      %2807 = vmatmul.mubr.f32.gmra.mrb[0].mxu0 %v1885
      %v2808 = vpop.f32.mrb[0].mxu0
      %v2809 = vadd.f32 0.0, %v2808
      %v2810 = vpop.f32.mrb[0].mxu0
      %2811 = vmatprep.mubr.f32.mxu0 0.0
      %2812 = vmatmul.mubr.f32.gmra.mrb[0].mxu0 %v1887
      %v2813 = vpop.f32.mrb[0].mxu0
      %v2814 = vadd.f32 0.0, %v2813
      %v2815 = vpop.f32.mrb[0].mxu0
      %2816 = vmatprep.mubr.f32.mxu0 0.0
      %2817 = vmatmul.mubr.f32.gmra.mrb[0].mxu0 %v1889
      %v2818 = vpop.f32.mrb[0].mxu0
      %v2819 = vadd.f32 0.0, %v2818
      %v2820 = vpop.f32.mrb[0].mxu0
      %2821 = vmatprep.mubr.f32.mxu0 0.0
      %2822 = vmatmul.mubr.f32.gmra.mrb[0].mxu0 %v1891
      %v2823 = vpop.f32.mrb[0].mxu0
      %v2824 = vadd.f32 0.0, %v2823
      %v2825 = vpop.f32.mrb[0].mxu0
      %2826 = vmatprep.mubr.f32.mxu0 0.0
      %2827 = vmatmul.mubr.f32.gmra.mrb[0].mxu0 %v1893
      %v2828 = vpop.f32.mrb[0].mxu0
      %v2829 = vadd.f32 0.0, %v2828
      %v2830 = vpop.f32.mrb[0].mxu0
      %2831 = vmatprep.mubr.f32.mxu0 0.0
      %2832 = vmatmul.mubr.f32.gmra.mrb[0].mxu0 %v1895
      %v2833 = vpop.f32.mrb[0].mxu0
      %v2834 = vadd.f32 0.0, %v2833
      %v2835 = vpop.f32.mrb[0].mxu0
      %2836 = vmatprep.mubr.f32.mxu0 0.0
      %2837 = vmatmul.mubr.f32.gmra.mrb[0].mxu0 %v1897
      %v2838 = vpop.f32.mrb[0].mxu0
      %v2839 = vadd.f32 0.0, %v2838
      %v2840 = vpop.f32.mrb[0].mxu0
      %2841 = vmatprep.mubr.f32.mxu0 0.0
      %2842 = vmatmul.mubr.f32.gmra.mrb[0].mxu0 %v1899
      %v2843 = vpop.f32.mrb[0].mxu0
      %v2844 = vadd.f32 0.0, %v2843
      %v2845 = vpop.f32.mrb[0].mxu0
      %2846 = vmatprep.mubr.f32.mxu0 0.0
      %2847 = vmatmul.mubr.f32.gmra.mrb[0].mxu0 %v1901
      %v2848 = vpop.f32.mrb[0].mxu0
      %v2849 = vadd.f32 0.0, %v2848
      %v2850 = vpop.f32.mrb[0].mxu0
      %2851 = vmatprep.mubr.f32.mxu0 0.0
      %2852 = vmatmul.mubr.f32.gmra.mrb[0].mxu0 %v1903
      %v2853 = vpop.f32.mrb[0].mxu0
      %v2854 = vadd.f32 0.0, %v2853
      %v2855 = vpop.f32.mrb[0].mxu0
      %2856 = vmatprep.mubr.f32.mxu0 0.0
      %2857 = vmatmul.mubr.f32.gmra.mrb[0].mxu0 %v1905
      %v2858 = vpop.f32.mrb[0].mxu0
      %v2859 = vadd.f32 0.0, %v2858
      %v2860 = vpop.f32.mrb[0].mxu0
      %2861 = vmatprep.mubr.f32.mxu0 0.0
      %2862 = vmatmul.mubr.f32.gmra.mrb[0].mxu0 %v1907
      %v2863 = vpop.f32.mrb[0].mxu0
      %v2864 = vadd.f32 0.0, %v2863
      %v2865 = vpop.f32.mrb[0].mxu0
      %2866 = vmatprep.mubr.f32.mxu0 0.0
      %2867 = vmatmul.mubr.f32.gmra.mrb[0].mxu0 %v1909
      %v2868 = vpop.f32.mrb[0].mxu0
      %v2869 = vadd.f32 0.0, %v2868
      %v2870 = vpop.f32.mrb[0].mxu0
      %2871 = vmatprep.mubr.f32.mxu0 0.0
      %2872 = vmatmul.mubr.f32.gmra.mrb[0].mxu0 %v1911
      %v2873 = vpop.f32.mrb[0].mxu0
      %v2874 = vadd.f32 0.0, %v2873
      %v2875 = vpop.f32.mrb[0].mxu0
      %2876 = vmatprep.mubr.f32.mxu0 0.0
      %2877 = vmatmul.mubr.f32.gmra.mrb[0].mxu0 %v1913
      %v2878 = vpop.f32.mrb[0].mxu0
      %v2879 = vadd.f32 0.0, %v2878
      %v2880 = vpop.f32.mrb[0].mxu0
      %2881 = vmatprep.mubr.f32.mxu0 0.0
      %2882 = vmatmul.mubr.f32.gmra.mrb[0].mxu0 %v1915
      %v2883 = vpop.f32.mrb[0].mxu0
      %v2884 = vadd.f32 0.0, %v2883
      %v2885 = vpop.f32.mrb[0].mxu0
      %2886 = vmatprep.mubr.f32.mxu0 0.0
      %2887 = vmatmul.mubr.f32.gmra.mrb[0].mxu0 %v1917
      %v2888 = vpop.f32.mrb[0].mxu0
      %v2889 = vadd.f32 0.0, %v2888
      %v2890 = vpop.f32.mrb[0].mxu0
      %2891 = vmatprep.mubr.f32.mxu0 0.0
      %2892 = vmatmul.mubr.f32.gmra.mrb[0].mxu0 %v1919
      %v2893 = vpop.f32.mrb[0].mxu0
      %v2894 = vadd.f32 0.0, %v2893
      %v2895 = vpop.f32.mrb[0].mxu0
      %2896 = vmatprep.mubr.f32.mxu0 0.0
      %2897 = vmatmul.mubr.f32.gmra.mrb[0].mxu0 %v1921
      %v2898 = vpop.f32.mrb[0].mxu0
      %v2899 = vadd.f32 0.0, %v2898
      %v2900 = vpop.f32.mrb[0].mxu0
      %2901 = vmatprep.mubr.f32.mxu0 0.0
      %2902 = vmatmul.mubr.f32.gmra.mrb[0].mxu0 %v1923
      %v2903 = vpop.f32.mrb[0].mxu0
      %v2904 = vadd.f32 0.0, %v2903
      %v2905 = vpop.f32.mrb[0].mxu0
      %2906 = vmatprep.mubr.f32.mxu0 0.0
      %2907 = vmatmul.mubr.f32.gmra.mrb[0].mxu0 %v1925
      %v2908 = vpop.f32.mrb[0].mxu0
      %v2909 = vadd.f32 0.0, %v2908
      %v2910 = vpop.f32.mrb[0].mxu0
      %2911 = vmatprep.mubr.f32.mxu0 0.0
      %2912 = vmatmul.mubr.f32.gmra.mrb[0].mxu0 %v1927
      %v2913 = vpop.f32.mrb[0].mxu0
      %v2914 = vadd.f32 0.0, %v2913
      %v2915 = vpop.f32.mrb[0].mxu0
      %2916 = vmatprep.mubr.f32.mxu0 0.0
      %2917 = vmatmul.mubr.f32.gmra.mrb[0].mxu0 %v1929
      %v2918 = vpop.f32.mrb[0].mxu0
      %v2919 = vadd.f32 0.0, %v2918
      %v2920 = vpop.f32.mrb[0].mxu0
      %2921 = vmatprep.mubr.f32.mxu0 0.0
      %2922 = vmatmul.mubr.f32.gmra.mrb[0].mxu0 %v1931
      %v2923 = vpop.f32.mrb[0].mxu0
      %v2924 = vadd.f32 0.0, %v2923
      %v2925 = vpop.f32.mrb[0].mxu0
      %2926 = vmatprep.mubr.f32.mxu0 0.0
      %2927 = vmatmul.mubr.f32.gmra.mrb[0].mxu0 %v1933
      %v2928 = vpop.f32.mrb[0].mxu0
      %v2929 = vadd.f32 0.0, %v2928
      %v2930 = vpop.f32.mrb[0].mxu0
      %2931 = vmatprep.mubr.f32.mxu0 0.0
      %2932 = vmatmul.mubr.f32.gmra.mrb[0].mxu0 %v1935
      %v2933 = vpop.f32.mrb[0].mxu0
      %v2934 = vadd.f32 0.0, %v2933
      %v2935 = vpop.f32.mrb[0].mxu0
      %2936 = vmatprep.mubr.f32.mxu0 0.0
      %2937 = vmatmul.mubr.f32.gmra.mrb[0].mxu0 %v1937
      %v2938 = vpop.f32.mrb[0].mxu0
      %v2939 = vadd.f32 0.0, %v2938
      %v2940 = vpop.f32.mrb[0].mxu0
      %2941 = vmatprep.mubr.f32.mxu0 0.0
      %2942 = vmatmul.mubr.f32.gmra.mrb[0].mxu0 %v1939
      %v2943 = vpop.f32.mrb[0].mxu0
      %v2944 = vadd.f32 0.0, %v2943
      %v2945 = vpop.f32.mrb[0].mxu0
      %2946 = vmatprep.mubr.f32.mxu0 0.0
      %2947 = vmatmul.mubr.f32.gmra.mrb[0].mxu0 %v1941
      %v2948 = vpop.f32.mrb[0].mxu0
      %v2949 = vadd.f32 0.0, %v2948
      %v2950 = vpop.f32.mrb[0].mxu0
      %2951 = vmatprep.mubr.f32.mxu0 0.0
      %2952 = vmatmul.mubr.f32.gmra.mrb[0].mxu0 %v1943
      %v2953 = vpop.f32.mrb[0].mxu0
      %v2954 = vadd.f32 0.0, %v2953
      %v2955 = vpop.f32.mrb[0].mxu0
      %2956 = vmatprep.mubr.f32.mxu0 0.0
      %2957 = vmatmul.mubr.f32.gmra.mrb[0].mxu0 %v2738
      %v2958 = vpop.f32.mrb[0].mxu0
      %v2959 = vadd.f32 0.0, %v2958
      %v2960 = vpop.f32.mrb[0].mxu0
      %2961 = vmatprep.mubr.f32.mxu0 0.0
      %2962 = vmatmul.mubr.f32.gmra.mrb[0].mxu0 %v2740
      %v2963 = vpop.f32.mrb[0].mxu0
      %v2964 = vadd.f32 0.0, %v2963
      %v2965 = vpop.f32.mrb[0].mxu0
      %2966 = vdwg.mxu0
      %v2967 = vadd.f32 %v2700, %v2809
      %v2968 = vadd.f32 %v2701, %v2814
      %v2969 = vadd.f32 %v2702, %v2819
      %v2970 = vadd.f32 %v2703, %v2824
      %v2971 = vadd.f32 %v2704, %v2829
      %v2972 = vadd.f32 %v2705, %v2834
      %v2973 = vadd.f32 %v2706, %v2839
      %v2974 = vadd.f32 %v2707, %v2844
      %v2975 = vadd.f32 %v2708, %v2849
      %v2976 = vadd.f32 %v2709, %v2854
      %v2977 = vadd.f32 %v2710, %v2859
      %v2978 = vadd.f32 %v2711, %v2864
      %v2979 = vadd.f32 %v2712, %v2869
      %v2980 = vadd.f32 %v2713, %v2874
      %v2981 = vadd.f32 %v2714, %v2879
      %v2982 = vadd.f32 %v2715, %v2884
      %v2983 = vadd.f32 %v2716, %v2889
      %v2984 = vadd.f32 %v2717, %v2894
      %v2985 = vadd.f32 %v2718, %v2899
      %v2986 = vadd.f32 %v2719, %v2904
      %v2987 = vadd.f32 %v2720, %v2909
      %v2988 = vadd.f32 %v2721, %v2914
      %v2989 = vadd.f32 %v2722, %v2919
      %v2990 = vadd.f32 %v2723, %v2924
      %v2991 = vadd.f32 %v2724, %v2929
      %v2992 = vadd.f32 %v2725, %v2934
      %v2993 = vadd.f32 %v2726, %v2939
      %v2994 = vadd.f32 %v2727, %v2944
      %v2995 = vadd.f32 %v2728, %v2949
      %v2996 = vadd.f32 %v2729, %v2954
      %v2997 = vadd.f32 %v2730, %v2959
      %v2998 = vadd.f32 %v2731, %v2964
      %v3002 = vrot.slane %v972, 7
      %v3003 = vrot.slane %v973, 7
      %v3004 = vsel %vm1060, %v3002, %v3003
      %v3005 = vrot.slane %v974, 7
      %v3006 = vsel %vm1060, %v3003, %v3005
      %v3007 = vsel %vm1141, %v3004, 0
      %v3009 = vsel %vm1141, %v3006, 0
      %3011 = vmatprep.subr.mxu0 0.0
      %3012 = vmatpush1.msra.mxu0 %v1000
      %3013 = vmatprep.subr.mxu0 0.0
      %3014 = vmatpush1.msra.mxu0 %v1001
      %3015 = vmatprep.subr.mxu0 0.0
      %3016 = vmatpush1.msra.mxu0 %v1002
      %3017 = vmatprep.subr.mxu0 0.0
      %3018 = vmatpush1.msra.mxu0 %v1003
      %3019 = vmatprep.subr.mxu0 0.0
      %3020 = vmatpush1.msra.mxu0 0.0
      %3021 = vmatprep.subr.mxu0 0.0
      %3022 = vmatpush1.msra.mxu0 0.0
      %3023 = vmatprep.subr.mxu0 0.0
      %3024 = vmatpush1.msra.mxu0 0.0
      %3025 = vmatprep.subr.mxu0 0.0
      %3026 = vmatpush1.msra.mxu0 0.0
      %3027 = vmatprep.subr.mxu0 0.0
      %3028 = vmatpush1.msra.mxu0 0.0
      %3029 = vmatprep.subr.mxu0 0.0
      %3030 = vmatpush1.msra.mxu0 0.0
      %3031 = vmatprep.subr.mxu0 0.0
      %3032 = vmatpush1.msra.mxu0 0.0
      %3033 = vmatprep.subr.mxu0 0.0
      %3034 = vmatpush1.msra.mxu0 0.0
      %3035 = vmatprep.subr.mxu0 0.0
      %3036 = vmatpush1.msra.mxu0 0.0
      %3037 = vmatprep.subr.mxu0 0.0
      %3038 = vmatpush1.msra.mxu0 0.0
      %3039 = vmatprep.subr.mxu0 0.0
      %3040 = vmatpush1.msra.mxu0 0.0
      %3041 = vmatprep.subr.mxu0 0.0
      %3042 = vmatpush1.msra.mxu0 0.0
      %3043 = vmatprep.subr.mxu0 0.0
      %3044 = vmatpush1.msra.mxu0 0.0
      %3045 = vmatprep.subr.mxu0 0.0
      %3046 = vmatpush1.msra.mxu0 0.0
      %3047 = vmatprep.subr.mxu0 0.0
      %3048 = vmatpush1.msra.mxu0 0.0
      %3049 = vmatprep.subr.mxu0 0.0
      %3050 = vmatpush1.msra.mxu0 0.0
      %3051 = vmatprep.subr.mxu0 0.0
      %3052 = vmatpush1.msra.mxu0 0.0
      %3053 = vmatprep.subr.mxu0 0.0
      %3054 = vmatpush1.msra.mxu0 0.0
      %3055 = vmatprep.subr.mxu0 0.0
      %3056 = vmatpush1.msra.mxu0 0.0
      %3057 = vmatprep.subr.mxu0 0.0
      %3058 = vmatpush1.msra.mxu0 0.0
      %3059 = vmatprep.subr.mxu0 0.0
      %3060 = vmatpush1.msra.mxu0 0.0
      %3061 = vmatprep.subr.mxu0 0.0
      %3062 = vmatpush1.msra.mxu0 0.0
      %3063 = vmatprep.subr.mxu0 0.0
      %3064 = vmatpush1.msra.mxu0 0.0
      %3065 = vmatprep.subr.mxu0 0.0
      %3066 = vmatpush1.msra.mxu0 0.0
      %3067 = vmatprep.subr.mxu0 0.0
      %3068 = vmatpush1.msra.mxu0 0.0
      %3069 = vmatprep.subr.mxu0 0.0
      %3070 = vmatpush1.msra.mxu0 0.0
      %3071 = vmatprep.subr.mxu0 0.0
      %3072 = vmatpush1.msra.mxu0 0.0
      %3073 = vmatprep.subr.mxu0 0.0
      %3074 = vmatpush1.msra.mxu0 0.0
      %3075 = vmatprep.mubr.f32.mxu0 0.0
      %3076 = vmatmul.mubr.f32.gmra.mrb[0].mxu0 %v1150
      %v3077 = vpop.f32.mrb[0].mxu0
      %v3078 = vadd.f32 0.0, %v3077
      %v3079 = vpop.f32.mrb[0].mxu0
      %3080 = vmatprep.mubr.f32.mxu0 0.0
      %3081 = vmatmul.mubr.f32.gmra.mrb[0].mxu0 %v1152
      %v3082 = vpop.f32.mrb[0].mxu0
      %v3083 = vadd.f32 0.0, %v3082
      %v3084 = vpop.f32.mrb[0].mxu0
      %3085 = vmatprep.mubr.f32.mxu0 0.0
      %3086 = vmatmul.mubr.f32.gmra.mrb[0].mxu0 %v1154
      %v3087 = vpop.f32.mrb[0].mxu0
      %v3088 = vadd.f32 0.0, %v3087
      %v3089 = vpop.f32.mrb[0].mxu0
      %3090 = vmatprep.mubr.f32.mxu0 0.0
      %3091 = vmatmul.mubr.f32.gmra.mrb[0].mxu0 %v1156
      %v3092 = vpop.f32.mrb[0].mxu0
      %v3093 = vadd.f32 0.0, %v3092
      %v3094 = vpop.f32.mrb[0].mxu0
      %3095 = vmatprep.mubr.f32.mxu0 0.0
      %3096 = vmatmul.mubr.f32.gmra.mrb[0].mxu0 %v1158
      %v3097 = vpop.f32.mrb[0].mxu0
      %v3098 = vadd.f32 0.0, %v3097
      %v3099 = vpop.f32.mrb[0].mxu0
      %3100 = vmatprep.mubr.f32.mxu0 0.0
      %3101 = vmatmul.mubr.f32.gmra.mrb[0].mxu0 %v1160
      %v3102 = vpop.f32.mrb[0].mxu0
      %v3103 = vadd.f32 0.0, %v3102
      %v3104 = vpop.f32.mrb[0].mxu0
      %3105 = vmatprep.mubr.f32.mxu0 0.0
      %3106 = vmatmul.mubr.f32.gmra.mrb[0].mxu0 %v1162
      %v3107 = vpop.f32.mrb[0].mxu0
      %v3108 = vadd.f32 0.0, %v3107
      %v3109 = vpop.f32.mrb[0].mxu0
      %3110 = vmatprep.mubr.f32.mxu0 0.0
      %3111 = vmatmul.mubr.f32.gmra.mrb[0].mxu0 %v1164
      %v3112 = vpop.f32.mrb[0].mxu0
      %v3113 = vadd.f32 0.0, %v3112
      %v3114 = vpop.f32.mrb[0].mxu0
      %3115 = vmatprep.mubr.f32.mxu0 0.0
      %3116 = vmatmul.mubr.f32.gmra.mrb[0].mxu0 %v1166
      %v3117 = vpop.f32.mrb[0].mxu0
      %v3118 = vadd.f32 0.0, %v3117
      %v3119 = vpop.f32.mrb[0].mxu0
      %3120 = vmatprep.mubr.f32.mxu0 0.0
      %3121 = vmatmul.mubr.f32.gmra.mrb[0].mxu0 %v1168
      %v3122 = vpop.f32.mrb[0].mxu0
      %v3123 = vadd.f32 0.0, %v3122
      %v3124 = vpop.f32.mrb[0].mxu0
      %3125 = vmatprep.mubr.f32.mxu0 0.0
      %3126 = vmatmul.mubr.f32.gmra.mrb[0].mxu0 %v1170
      %v3127 = vpop.f32.mrb[0].mxu0
      %v3128 = vadd.f32 0.0, %v3127
      %v3129 = vpop.f32.mrb[0].mxu0
      %3130 = vmatprep.mubr.f32.mxu0 0.0
      %3131 = vmatmul.mubr.f32.gmra.mrb[0].mxu0 %v1172
      %v3132 = vpop.f32.mrb[0].mxu0
      %v3133 = vadd.f32 0.0, %v3132
      %v3134 = vpop.f32.mrb[0].mxu0
      %3135 = vmatprep.mubr.f32.mxu0 0.0
      %3136 = vmatmul.mubr.f32.gmra.mrb[0].mxu0 %v1174
      %v3137 = vpop.f32.mrb[0].mxu0
      %v3138 = vadd.f32 0.0, %v3137
      %v3139 = vpop.f32.mrb[0].mxu0
      %3140 = vmatprep.mubr.f32.mxu0 0.0
      %3141 = vmatmul.mubr.f32.gmra.mrb[0].mxu0 %v1176
      %v3142 = vpop.f32.mrb[0].mxu0
      %v3143 = vadd.f32 0.0, %v3142
      %v3144 = vpop.f32.mrb[0].mxu0
      %3145 = vmatprep.mubr.f32.mxu0 0.0
      %3146 = vmatmul.mubr.f32.gmra.mrb[0].mxu0 %v1178
      %v3147 = vpop.f32.mrb[0].mxu0
      %v3148 = vadd.f32 0.0, %v3147
      %v3149 = vpop.f32.mrb[0].mxu0
      %3150 = vmatprep.mubr.f32.mxu0 0.0
      %3151 = vmatmul.mubr.f32.gmra.mrb[0].mxu0 %v1180
      %v3152 = vpop.f32.mrb[0].mxu0
      %v3153 = vadd.f32 0.0, %v3152
      %v3154 = vpop.f32.mrb[0].mxu0
      %3155 = vmatprep.mubr.f32.mxu0 0.0
      %3156 = vmatmul.mubr.f32.gmra.mrb[0].mxu0 %v1182
      %v3157 = vpop.f32.mrb[0].mxu0
      %v3158 = vadd.f32 0.0, %v3157
      %v3159 = vpop.f32.mrb[0].mxu0
      %3160 = vmatprep.mubr.f32.mxu0 0.0
      %3161 = vmatmul.mubr.f32.gmra.mrb[0].mxu0 %v1184
      %v3162 = vpop.f32.mrb[0].mxu0
      %v3163 = vadd.f32 0.0, %v3162
      %v3164 = vpop.f32.mrb[0].mxu0
      %3165 = vmatprep.mubr.f32.mxu0 0.0
      %3166 = vmatmul.mubr.f32.gmra.mrb[0].mxu0 %v1186
      %v3167 = vpop.f32.mrb[0].mxu0
      %v3168 = vadd.f32 0.0, %v3167
      %v3169 = vpop.f32.mrb[0].mxu0
      %3170 = vmatprep.mubr.f32.mxu0 0.0
      %3171 = vmatmul.mubr.f32.gmra.mrb[0].mxu0 %v1188
      %v3172 = vpop.f32.mrb[0].mxu0
      %v3173 = vadd.f32 0.0, %v3172
      %v3174 = vpop.f32.mrb[0].mxu0
      %3175 = vmatprep.mubr.f32.mxu0 0.0
      %3176 = vmatmul.mubr.f32.gmra.mrb[0].mxu0 %v1190
      %v3177 = vpop.f32.mrb[0].mxu0
      %v3178 = vadd.f32 0.0, %v3177
      %v3179 = vpop.f32.mrb[0].mxu0
      %3180 = vmatprep.mubr.f32.mxu0 0.0
      %3181 = vmatmul.mubr.f32.gmra.mrb[0].mxu0 %v1192
      %v3182 = vpop.f32.mrb[0].mxu0
      %v3183 = vadd.f32 0.0, %v3182
      %v3184 = vpop.f32.mrb[0].mxu0
      %3185 = vmatprep.mubr.f32.mxu0 0.0
      %3186 = vmatmul.mubr.f32.gmra.mrb[0].mxu0 %v1194
      %v3187 = vpop.f32.mrb[0].mxu0
      %v3188 = vadd.f32 0.0, %v3187
      %v3189 = vpop.f32.mrb[0].mxu0
      %3190 = vmatprep.mubr.f32.mxu0 0.0
      %3191 = vmatmul.mubr.f32.gmra.mrb[0].mxu0 %v1196
      %v3192 = vpop.f32.mrb[0].mxu0
      %v3193 = vadd.f32 0.0, %v3192
      %v3194 = vpop.f32.mrb[0].mxu0
      %3195 = vmatprep.mubr.f32.mxu0 0.0
      %3196 = vmatmul.mubr.f32.gmra.mrb[0].mxu0 %v1198
      %v3197 = vpop.f32.mrb[0].mxu0
      %v3198 = vadd.f32 0.0, %v3197
      %v3199 = vpop.f32.mrb[0].mxu0
      %3200 = vmatprep.mubr.f32.mxu0 0.0
      %3201 = vmatmul.mubr.f32.gmra.mrb[0].mxu0 %v1200
      %v3202 = vpop.f32.mrb[0].mxu0
      %v3203 = vadd.f32 0.0, %v3202
      %v3204 = vpop.f32.mrb[0].mxu0
      %3205 = vmatprep.mubr.f32.mxu0 0.0
      %3206 = vmatmul.mubr.f32.gmra.mrb[0].mxu0 %v1202
      %v3207 = vpop.f32.mrb[0].mxu0
      %v3208 = vadd.f32 0.0, %v3207
      %v3209 = vpop.f32.mrb[0].mxu0
      %3210 = vmatprep.mubr.f32.mxu0 0.0
      %3211 = vmatmul.mubr.f32.gmra.mrb[0].mxu0 %v1204
      %v3212 = vpop.f32.mrb[0].mxu0
      %v3213 = vadd.f32 0.0, %v3212
      %v3214 = vpop.f32.mrb[0].mxu0
      %3215 = vmatprep.mubr.f32.mxu0 0.0
      %3216 = vmatmul.mubr.f32.gmra.mrb[0].mxu0 %v2210
      %v3217 = vpop.f32.mrb[0].mxu0
      %v3218 = vadd.f32 0.0, %v3217
      %v3219 = vpop.f32.mrb[0].mxu0
      %3220 = vmatprep.mubr.f32.mxu0 0.0
      %3221 = vmatmul.mubr.f32.gmra.mrb[0].mxu0 %v2212
      %v3222 = vpop.f32.mrb[0].mxu0
      %v3223 = vadd.f32 0.0, %v3222
      %v3224 = vpop.f32.mrb[0].mxu0
      %3225 = vmatprep.mubr.f32.mxu0 0.0
      %3226 = vmatmul.mubr.f32.gmra.mrb[0].mxu0 %v3007
      %v3227 = vpop.f32.mrb[0].mxu0
      %v3228 = vadd.f32 0.0, %v3227
      %v3229 = vpop.f32.mrb[0].mxu0
      %3230 = vmatprep.mubr.f32.mxu0 0.0
      %3231 = vmatmul.mubr.f32.gmra.mrb[0].mxu0 %v3009
      %v3232 = vpop.f32.mrb[0].mxu0
      %v3233 = vadd.f32 0.0, %v3232
      %v3234 = vpop.f32.mrb[0].mxu0
      %3235 = vdwg.mxu0
      %v3236 = vadd.f32 %v2967, %v3078
      %v3237 = vadd.f32 %v2968, %v3083
      %v3238 = vadd.f32 %v2969, %v3088
      %v3239 = vadd.f32 %v2970, %v3093
      %v3240 = vadd.f32 %v2971, %v3098
      %v3241 = vadd.f32 %v2972, %v3103
      %v3242 = vadd.f32 %v2973, %v3108
      %v3243 = vadd.f32 %v2974, %v3113
      %v3244 = vadd.f32 %v2975, %v3118
      %v3245 = vadd.f32 %v2976, %v3123
      %v3246 = vadd.f32 %v2977, %v3128
      %v3247 = vadd.f32 %v2978, %v3133
      %v3248 = vadd.f32 %v2979, %v3138
      %v3249 = vadd.f32 %v2980, %v3143
      %v3250 = vadd.f32 %v2981, %v3148
      %v3251 = vadd.f32 %v2982, %v3153
      %v3252 = vadd.f32 %v2983, %v3158
      %v3253 = vadd.f32 %v2984, %v3163
      %v3254 = vadd.f32 %v2985, %v3168
      %v3255 = vadd.f32 %v2986, %v3173
      %v3256 = vadd.f32 %v2987, %v3178
      %v3257 = vadd.f32 %v2988, %v3183
      %v3258 = vadd.f32 %v2989, %v3188
      %v3259 = vadd.f32 %v2990, %v3193
      %v3260 = vadd.f32 %v2991, %v3198
      %v3261 = vadd.f32 %v2992, %v3203
      %v3262 = vadd.f32 %v2993, %v3208
      %v3263 = vadd.f32 %v2994, %v3213
      %v3264 = vadd.f32 %v2995, %v3218
      %v3265 = vadd.f32 %v2996, %v3223
      %v3266 = vadd.f32 %v2997, %v3228
      %v3267 = vadd.f32 %v2998, %v3233
      %v3268 = vsel %vm1141, %v973, 0
      %v3270 = vsel %vm1141, %v974, 0
      %3272 = vmatprep.subr.mxu0 0.0
      %3273 = vmatpush1.msra.mxu0 %v1004
      %3274 = vmatprep.subr.mxu0 0.0
      %3275 = vmatpush1.msra.mxu0 %v1005
      %3276 = vmatprep.subr.mxu0 0.0
      %3277 = vmatpush1.msra.mxu0 %v1006
      %3278 = vmatprep.subr.mxu0 0.0
      %3279 = vmatpush1.msra.mxu0 %v1007
      %3280 = vmatprep.subr.mxu0 0.0
      %3281 = vmatpush1.msra.mxu0 0.0
      %3282 = vmatprep.subr.mxu0 0.0
      %3283 = vmatpush1.msra.mxu0 0.0
      %3284 = vmatprep.subr.mxu0 0.0
      %3285 = vmatpush1.msra.mxu0 0.0
      %3286 = vmatprep.subr.mxu0 0.0
      %3287 = vmatpush1.msra.mxu0 0.0
      %3288 = vmatprep.subr.mxu0 0.0
      %3289 = vmatpush1.msra.mxu0 0.0
      %3290 = vmatprep.subr.mxu0 0.0
      %3291 = vmatpush1.msra.mxu0 0.0
      %3292 = vmatprep.subr.mxu0 0.0
      %3293 = vmatpush1.msra.mxu0 0.0
      %3294 = vmatprep.subr.mxu0 0.0
      %3295 = vmatpush1.msra.mxu0 0.0
      %3296 = vmatprep.subr.mxu0 0.0
      %3297 = vmatpush1.msra.mxu0 0.0
      %3298 = vmatprep.subr.mxu0 0.0
      %3299 = vmatpush1.msra.mxu0 0.0
      %3300 = vmatprep.subr.mxu0 0.0
      %3301 = vmatpush1.msra.mxu0 0.0
      %3302 = vmatprep.subr.mxu0 0.0
      %3303 = vmatpush1.msra.mxu0 0.0
      %3304 = vmatprep.subr.mxu0 0.0
      %3305 = vmatpush1.msra.mxu0 0.0
      %3306 = vmatprep.subr.mxu0 0.0
      %3307 = vmatpush1.msra.mxu0 0.0
      %3308 = vmatprep.subr.mxu0 0.0
      %3309 = vmatpush1.msra.mxu0 0.0
      %3310 = vmatprep.subr.mxu0 0.0
      %3311 = vmatpush1.msra.mxu0 0.0
      %3312 = vmatprep.subr.mxu0 0.0
      %3313 = vmatpush1.msra.mxu0 0.0
      %3314 = vmatprep.subr.mxu0 0.0
      %3315 = vmatpush1.msra.mxu0 0.0
      %3316 = vmatprep.subr.mxu0 0.0
      %3317 = vmatpush1.msra.mxu0 0.0
      %3318 = vmatprep.subr.mxu0 0.0
      %3319 = vmatpush1.msra.mxu0 0.0
      %3320 = vmatprep.subr.mxu0 0.0
      %3321 = vmatpush1.msra.mxu0 0.0
      %3322 = vmatprep.subr.mxu0 0.0
      %3323 = vmatpush1.msra.mxu0 0.0
      %3324 = vmatprep.subr.mxu0 0.0
      %3325 = vmatpush1.msra.mxu0 0.0
      %3326 = vmatprep.subr.mxu0 0.0
      %3327 = vmatpush1.msra.mxu0 0.0
      %3328 = vmatprep.subr.mxu0 0.0
      %3329 = vmatpush1.msra.mxu0 0.0
      %3330 = vmatprep.subr.mxu0 0.0
      %3331 = vmatpush1.msra.mxu0 0.0
      %3332 = vmatprep.subr.mxu0 0.0
      %3333 = vmatpush1.msra.mxu0 0.0
      %3334 = vmatprep.subr.mxu0 0.0
      %3335 = vmatpush1.msra.mxu0 0.0
      %3336 = vmatprep.mubr.f32.mxu0 0.0
      %3337 = vmatmul.mubr.f32.gmra.mrb[0].mxu0 %v1471
      %v3338 = vpop.f32.mrb[0].mxu0
      %v3339 = vadd.f32 0.0, %v3338
      %v3340 = vpop.f32.mrb[0].mxu0
      %3341 = vmatprep.mubr.f32.mxu0 0.0
      %3342 = vmatmul.mubr.f32.gmra.mrb[0].mxu0 %v1473
      %v3343 = vpop.f32.mrb[0].mxu0
      %v3344 = vadd.f32 0.0, %v3343
      %v3345 = vpop.f32.mrb[0].mxu0
      %3346 = vmatprep.mubr.f32.mxu0 0.0
      %3347 = vmatmul.mubr.f32.gmra.mrb[0].mxu0 %v1475
      %v3348 = vpop.f32.mrb[0].mxu0
      %v3349 = vadd.f32 0.0, %v3348
      %v3350 = vpop.f32.mrb[0].mxu0
      %3351 = vmatprep.mubr.f32.mxu0 0.0
      %3352 = vmatmul.mubr.f32.gmra.mrb[0].mxu0 %v1477
      %v3353 = vpop.f32.mrb[0].mxu0
      %v3354 = vadd.f32 0.0, %v3353
      %v3355 = vpop.f32.mrb[0].mxu0
      %3356 = vmatprep.mubr.f32.mxu0 0.0
      %3357 = vmatmul.mubr.f32.gmra.mrb[0].mxu0 %v1479
      %v3358 = vpop.f32.mrb[0].mxu0
      %v3359 = vadd.f32 0.0, %v3358
      %v3360 = vpop.f32.mrb[0].mxu0
      %3361 = vmatprep.mubr.f32.mxu0 0.0
      %3362 = vmatmul.mubr.f32.gmra.mrb[0].mxu0 %v1481
      %v3363 = vpop.f32.mrb[0].mxu0
      %v3364 = vadd.f32 0.0, %v3363
      %v3365 = vpop.f32.mrb[0].mxu0
      %3366 = vmatprep.mubr.f32.mxu0 0.0
      %3367 = vmatmul.mubr.f32.gmra.mrb[0].mxu0 %v1483
      %v3368 = vpop.f32.mrb[0].mxu0
      %v3369 = vadd.f32 0.0, %v3368
      %v3370 = vpop.f32.mrb[0].mxu0
      %3371 = vmatprep.mubr.f32.mxu0 0.0
      %3372 = vmatmul.mubr.f32.gmra.mrb[0].mxu0 %v1485
      %v3373 = vpop.f32.mrb[0].mxu0
      %v3374 = vadd.f32 0.0, %v3373
      %v3375 = vpop.f32.mrb[0].mxu0
      %3376 = vmatprep.mubr.f32.mxu0 0.0
      %3377 = vmatmul.mubr.f32.gmra.mrb[0].mxu0 %v1487
      %v3378 = vpop.f32.mrb[0].mxu0
      %v3379 = vadd.f32 0.0, %v3378
      %v3380 = vpop.f32.mrb[0].mxu0
      %3381 = vmatprep.mubr.f32.mxu0 0.0
      %3382 = vmatmul.mubr.f32.gmra.mrb[0].mxu0 %v1489
      %v3383 = vpop.f32.mrb[0].mxu0
      %v3384 = vadd.f32 0.0, %v3383
      %v3385 = vpop.f32.mrb[0].mxu0
      %3386 = vmatprep.mubr.f32.mxu0 0.0
      %3387 = vmatmul.mubr.f32.gmra.mrb[0].mxu0 %v1491
      %v3388 = vpop.f32.mrb[0].mxu0
      %v3389 = vadd.f32 0.0, %v3388
      %v3390 = vpop.f32.mrb[0].mxu0
      %3391 = vmatprep.mubr.f32.mxu0 0.0
      %3392 = vmatmul.mubr.f32.gmra.mrb[0].mxu0 %v1493
      %v3393 = vpop.f32.mrb[0].mxu0
      %v3394 = vadd.f32 0.0, %v3393
      %v3395 = vpop.f32.mrb[0].mxu0
      %3396 = vmatprep.mubr.f32.mxu0 0.0
      %3397 = vmatmul.mubr.f32.gmra.mrb[0].mxu0 %v1495
      %v3398 = vpop.f32.mrb[0].mxu0
      %v3399 = vadd.f32 0.0, %v3398
      %v3400 = vpop.f32.mrb[0].mxu0
      %3401 = vmatprep.mubr.f32.mxu0 0.0
      %3402 = vmatmul.mubr.f32.gmra.mrb[0].mxu0 %v1497
      %v3403 = vpop.f32.mrb[0].mxu0
      %v3404 = vadd.f32 0.0, %v3403
      %v3405 = vpop.f32.mrb[0].mxu0
      %3406 = vmatprep.mubr.f32.mxu0 0.0
      %3407 = vmatmul.mubr.f32.gmra.mrb[0].mxu0 %v1499
      %v3408 = vpop.f32.mrb[0].mxu0
      %v3409 = vadd.f32 0.0, %v3408
      %v3410 = vpop.f32.mrb[0].mxu0
      %3411 = vmatprep.mubr.f32.mxu0 0.0
      %3412 = vmatmul.mubr.f32.gmra.mrb[0].mxu0 %v1501
      %v3413 = vpop.f32.mrb[0].mxu0
      %v3414 = vadd.f32 0.0, %v3413
      %v3415 = vpop.f32.mrb[0].mxu0
      %3416 = vmatprep.mubr.f32.mxu0 0.0
      %3417 = vmatmul.mubr.f32.gmra.mrb[0].mxu0 %v1503
      %v3418 = vpop.f32.mrb[0].mxu0
      %v3419 = vadd.f32 0.0, %v3418
      %v3420 = vpop.f32.mrb[0].mxu0
      %3421 = vmatprep.mubr.f32.mxu0 0.0
      %3422 = vmatmul.mubr.f32.gmra.mrb[0].mxu0 %v1505
      %v3423 = vpop.f32.mrb[0].mxu0
      %v3424 = vadd.f32 0.0, %v3423
      %v3425 = vpop.f32.mrb[0].mxu0
      %3426 = vmatprep.mubr.f32.mxu0 0.0
      %3427 = vmatmul.mubr.f32.gmra.mrb[0].mxu0 %v1507
      %v3428 = vpop.f32.mrb[0].mxu0
      %v3429 = vadd.f32 0.0, %v3428
      %v3430 = vpop.f32.mrb[0].mxu0
      %3431 = vmatprep.mubr.f32.mxu0 0.0
      %3432 = vmatmul.mubr.f32.gmra.mrb[0].mxu0 %v1509
      %v3433 = vpop.f32.mrb[0].mxu0
      %v3434 = vadd.f32 0.0, %v3433
      %v3435 = vpop.f32.mrb[0].mxu0
      %3436 = vmatprep.mubr.f32.mxu0 0.0
      %3437 = vmatmul.mubr.f32.gmra.mrb[0].mxu0 %v1511
      %v3438 = vpop.f32.mrb[0].mxu0
      %v3439 = vadd.f32 0.0, %v3438
      %v3440 = vpop.f32.mrb[0].mxu0
      %3441 = vmatprep.mubr.f32.mxu0 0.0
      %3442 = vmatmul.mubr.f32.gmra.mrb[0].mxu0 %v1513
      %v3443 = vpop.f32.mrb[0].mxu0
      %v3444 = vadd.f32 0.0, %v3443
      %v3445 = vpop.f32.mrb[0].mxu0
      %3446 = vmatprep.mubr.f32.mxu0 0.0
      %3447 = vmatmul.mubr.f32.gmra.mrb[0].mxu0 %v1515
      %v3448 = vpop.f32.mrb[0].mxu0
      %v3449 = vadd.f32 0.0, %v3448
      %v3450 = vpop.f32.mrb[0].mxu0
      %3451 = vmatprep.mubr.f32.mxu0 0.0
      %3452 = vmatmul.mubr.f32.gmra.mrb[0].mxu0 %v1517
      %v3453 = vpop.f32.mrb[0].mxu0
      %v3454 = vadd.f32 0.0, %v3453
      %v3455 = vpop.f32.mrb[0].mxu0
      %3456 = vmatprep.mubr.f32.mxu0 0.0
      %3457 = vmatmul.mubr.f32.gmra.mrb[0].mxu0 %v1519
      %v3458 = vpop.f32.mrb[0].mxu0
      %v3459 = vadd.f32 0.0, %v3458
      %v3460 = vpop.f32.mrb[0].mxu0
      %3461 = vmatprep.mubr.f32.mxu0 0.0
      %3462 = vmatmul.mubr.f32.gmra.mrb[0].mxu0 %v1521
      %v3463 = vpop.f32.mrb[0].mxu0
      %v3464 = vadd.f32 0.0, %v3463
      %v3465 = vpop.f32.mrb[0].mxu0
      %3466 = vmatprep.mubr.f32.mxu0 0.0
      %3467 = vmatmul.mubr.f32.gmra.mrb[0].mxu0 %v1523
      %v3468 = vpop.f32.mrb[0].mxu0
      %v3469 = vadd.f32 0.0, %v3468
      %v3470 = vpop.f32.mrb[0].mxu0
      %3471 = vmatprep.mubr.f32.mxu0 0.0
      %3472 = vmatmul.mubr.f32.gmra.mrb[0].mxu0 %v1525
      %v3473 = vpop.f32.mrb[0].mxu0
      %v3474 = vadd.f32 0.0, %v3473
      %v3475 = vpop.f32.mrb[0].mxu0
      %3476 = vmatprep.mubr.f32.mxu0 0.0
      %3477 = vmatmul.mubr.f32.gmra.mrb[0].mxu0 %v2471
      %v3478 = vpop.f32.mrb[0].mxu0
      %v3479 = vadd.f32 0.0, %v3478
      %v3480 = vpop.f32.mrb[0].mxu0
      %3481 = vmatprep.mubr.f32.mxu0 0.0
      %3482 = vmatmul.mubr.f32.gmra.mrb[0].mxu0 %v2473
      %v3483 = vpop.f32.mrb[0].mxu0
      %v3484 = vadd.f32 0.0, %v3483
      %v3485 = vpop.f32.mrb[0].mxu0
      %3486 = vmatprep.mubr.f32.mxu0 0.0
      %3487 = vmatmul.mubr.f32.gmra.mrb[0].mxu0 %v3268
      %v3488 = vpop.f32.mrb[0].mxu0
      %v3489 = vadd.f32 0.0, %v3488
      %v3490 = vpop.f32.mrb[0].mxu0
      %3491 = vmatprep.mubr.f32.mxu0 0.0
      %3492 = vmatmul.mubr.f32.gmra.mrb[0].mxu0 %v3270
      %v3493 = vpop.f32.mrb[0].mxu0
      %v3494 = vadd.f32 0.0, %v3493
      %v3495 = vpop.f32.mrb[0].mxu0
      %3496 = vdwg.mxu0
      %v3497 = vadd.f32 %v3236, %v3339
      %v3498 = vadd.f32 %v3237, %v3344
      %v3499 = vadd.f32 %v3238, %v3349
      %v3500 = vadd.f32 %v3239, %v3354
      %v3501 = vadd.f32 %v3240, %v3359
      %v3502 = vadd.f32 %v3241, %v3364
      %v3503 = vadd.f32 %v3242, %v3369
      %v3504 = vadd.f32 %v3243, %v3374
      %v3505 = vadd.f32 %v3244, %v3379
      %v3506 = vadd.f32 %v3245, %v3384
      %v3507 = vadd.f32 %v3246, %v3389
      %v3508 = vadd.f32 %v3247, %v3394
      %v3509 = vadd.f32 %v3248, %v3399
      %v3510 = vadd.f32 %v3249, %v3404
      %v3511 = vadd.f32 %v3250, %v3409
      %v3512 = vadd.f32 %v3251, %v3414
      %v3513 = vadd.f32 %v3252, %v3419
      %v3514 = vadd.f32 %v3253, %v3424
      %v3515 = vadd.f32 %v3254, %v3429
      %v3516 = vadd.f32 %v3255, %v3434
      %v3517 = vadd.f32 %v3256, %v3439
      %v3518 = vadd.f32 %v3257, %v3444
      %v3519 = vadd.f32 %v3258, %v3449
      %v3520 = vadd.f32 %v3259, %v3454
      %v3521 = vadd.f32 %v3260, %v3459
      %v3522 = vadd.f32 %v3261, %v3464
      %v3523 = vadd.f32 %v3262, %v3469
      %v3524 = vadd.f32 %v3263, %v3474
      %v3525 = vadd.f32 %v3264, %v3479
      %v3526 = vadd.f32 %v3265, %v3484
      %v3527 = vadd.f32 %v3266, %v3489
      %v3528 = vadd.f32 %v3267, %v3494
      %v3530 = vrot.slane %v973, 1
      %v3531 = vrot.slane %v974, 1
      %v3532 = vsel %vm1800, %v3530, %v3531
      %v3533 = vrot.slane %v975, 1
      %v3534 = vsel %vm1800, %v3531, %v3533
      %v3535 = vsel %vm1141, %v3532, 0
      %v3537 = vsel %vm1141, %v3534, 0
      %3539 = vmatprep.subr.mxu0 0.0
      %3540 = vmatpush1.msra.mxu0 %v1008
      %3541 = vmatprep.subr.mxu0 0.0
      %3542 = vmatpush1.msra.mxu0 %v1009
      %3543 = vmatprep.subr.mxu0 0.0
      %3544 = vmatpush1.msra.mxu0 %v1010
      %3545 = vmatprep.subr.mxu0 0.0
      %3546 = vmatpush1.msra.mxu0 %v1011
      %3547 = vmatprep.subr.mxu0 0.0
      %3548 = vmatpush1.msra.mxu0 0.0
      %3549 = vmatprep.subr.mxu0 0.0
      %3550 = vmatpush1.msra.mxu0 0.0
      %3551 = vmatprep.subr.mxu0 0.0
      %3552 = vmatpush1.msra.mxu0 0.0
      %3553 = vmatprep.subr.mxu0 0.0
      %3554 = vmatpush1.msra.mxu0 0.0
      %3555 = vmatprep.subr.mxu0 0.0
      %3556 = vmatpush1.msra.mxu0 0.0
      %3557 = vmatprep.subr.mxu0 0.0
      %3558 = vmatpush1.msra.mxu0 0.0
      %3559 = vmatprep.subr.mxu0 0.0
      %3560 = vmatpush1.msra.mxu0 0.0
      %3561 = vmatprep.subr.mxu0 0.0
      %3562 = vmatpush1.msra.mxu0 0.0
      %3563 = vmatprep.subr.mxu0 0.0
      %3564 = vmatpush1.msra.mxu0 0.0
      %3565 = vmatprep.subr.mxu0 0.0
      %3566 = vmatpush1.msra.mxu0 0.0
      %3567 = vmatprep.subr.mxu0 0.0
      %3568 = vmatpush1.msra.mxu0 0.0
      %3569 = vmatprep.subr.mxu0 0.0
      %3570 = vmatpush1.msra.mxu0 0.0
      %3571 = vmatprep.subr.mxu0 0.0
      %3572 = vmatpush1.msra.mxu0 0.0
      %3573 = vmatprep.subr.mxu0 0.0
      %3574 = vmatpush1.msra.mxu0 0.0
      %3575 = vmatprep.subr.mxu0 0.0
      %3576 = vmatpush1.msra.mxu0 0.0
      %3577 = vmatprep.subr.mxu0 0.0
      %3578 = vmatpush1.msra.mxu0 0.0
      %3579 = vmatprep.subr.mxu0 0.0
      %3580 = vmatpush1.msra.mxu0 0.0
      %3581 = vmatprep.subr.mxu0 0.0
      %3582 = vmatpush1.msra.mxu0 0.0
      %3583 = vmatprep.subr.mxu0 0.0
      %3584 = vmatpush1.msra.mxu0 0.0
      %3585 = vmatprep.subr.mxu0 0.0
      %3586 = vmatpush1.msra.mxu0 0.0
      %3587 = vmatprep.subr.mxu0 0.0
      %3588 = vmatpush1.msra.mxu0 0.0
      %3589 = vmatprep.subr.mxu0 0.0
      %3590 = vmatpush1.msra.mxu0 0.0
      %3591 = vmatprep.subr.mxu0 0.0
      %3592 = vmatpush1.msra.mxu0 0.0
      %3593 = vmatprep.subr.mxu0 0.0
      %3594 = vmatpush1.msra.mxu0 0.0
      %3595 = vmatprep.subr.mxu0 0.0
      %3596 = vmatpush1.msra.mxu0 0.0
      %3597 = vmatprep.subr.mxu0 0.0
      %3598 = vmatpush1.msra.mxu0 0.0
      %3599 = vmatprep.subr.mxu0 0.0
      %3600 = vmatpush1.msra.mxu0 0.0
      %3601 = vmatprep.subr.mxu0 0.0
      %3602 = vmatpush1.msra.mxu0 0.0
      %3603 = vmatprep.mubr.f32.mxu0 0.0
      %3604 = vmatmul.mubr.f32.gmra.mrb[0].mxu0 %v1889
      %v3605 = vpop.f32.mrb[0].mxu0
      %v3606 = vadd.f32 0.0, %v3605
      %v3607 = vpop.f32.mrb[0].mxu0
      %3608 = vmatprep.mubr.f32.mxu0 0.0
      %3609 = vmatmul.mubr.f32.gmra.mrb[0].mxu0 %v1891
      %v3610 = vpop.f32.mrb[0].mxu0
      %v3611 = vadd.f32 0.0, %v3610
      %v3612 = vpop.f32.mrb[0].mxu0
      %3613 = vmatprep.mubr.f32.mxu0 0.0
      %3614 = vmatmul.mubr.f32.gmra.mrb[0].mxu0 %v1893
      %v3615 = vpop.f32.mrb[0].mxu0
      %v3616 = vadd.f32 0.0, %v3615
      %v3617 = vpop.f32.mrb[0].mxu0
      %3618 = vmatprep.mubr.f32.mxu0 0.0
      %3619 = vmatmul.mubr.f32.gmra.mrb[0].mxu0 %v1895
      %v3620 = vpop.f32.mrb[0].mxu0
      %v3621 = vadd.f32 0.0, %v3620
      %v3622 = vpop.f32.mrb[0].mxu0
      %3623 = vmatprep.mubr.f32.mxu0 0.0
      %3624 = vmatmul.mubr.f32.gmra.mrb[0].mxu0 %v1897
      %v3625 = vpop.f32.mrb[0].mxu0
      %v3626 = vadd.f32 0.0, %v3625
      %v3627 = vpop.f32.mrb[0].mxu0
      %3628 = vmatprep.mubr.f32.mxu0 0.0
      %3629 = vmatmul.mubr.f32.gmra.mrb[0].mxu0 %v1899
      %v3630 = vpop.f32.mrb[0].mxu0
      %v3631 = vadd.f32 0.0, %v3630
      %v3632 = vpop.f32.mrb[0].mxu0
      %3633 = vmatprep.mubr.f32.mxu0 0.0
      %3634 = vmatmul.mubr.f32.gmra.mrb[0].mxu0 %v1901
      %v3635 = vpop.f32.mrb[0].mxu0
      %v3636 = vadd.f32 0.0, %v3635
      %v3637 = vpop.f32.mrb[0].mxu0
      %3638 = vmatprep.mubr.f32.mxu0 0.0
      %3639 = vmatmul.mubr.f32.gmra.mrb[0].mxu0 %v1903
      %v3640 = vpop.f32.mrb[0].mxu0
      %v3641 = vadd.f32 0.0, %v3640
      %v3642 = vpop.f32.mrb[0].mxu0
      %3643 = vmatprep.mubr.f32.mxu0 0.0
      %3644 = vmatmul.mubr.f32.gmra.mrb[0].mxu0 %v1905
      %v3645 = vpop.f32.mrb[0].mxu0
      %v3646 = vadd.f32 0.0, %v3645
      %v3647 = vpop.f32.mrb[0].mxu0
      %3648 = vmatprep.mubr.f32.mxu0 0.0
      %3649 = vmatmul.mubr.f32.gmra.mrb[0].mxu0 %v1907
      %v3650 = vpop.f32.mrb[0].mxu0
      %v3651 = vadd.f32 0.0, %v3650
      %v3652 = vpop.f32.mrb[0].mxu0
      %3653 = vmatprep.mubr.f32.mxu0 0.0
      %3654 = vmatmul.mubr.f32.gmra.mrb[0].mxu0 %v1909
      %v3655 = vpop.f32.mrb[0].mxu0
      %v3656 = vadd.f32 0.0, %v3655
      %v3657 = vpop.f32.mrb[0].mxu0
      %3658 = vmatprep.mubr.f32.mxu0 0.0
      %3659 = vmatmul.mubr.f32.gmra.mrb[0].mxu0 %v1911
      %v3660 = vpop.f32.mrb[0].mxu0
      %v3661 = vadd.f32 0.0, %v3660
      %v3662 = vpop.f32.mrb[0].mxu0
      %3663 = vmatprep.mubr.f32.mxu0 0.0
      %3664 = vmatmul.mubr.f32.gmra.mrb[0].mxu0 %v1913
      %v3665 = vpop.f32.mrb[0].mxu0
      %v3666 = vadd.f32 0.0, %v3665
      %v3667 = vpop.f32.mrb[0].mxu0
      %3668 = vmatprep.mubr.f32.mxu0 0.0
      %3669 = vmatmul.mubr.f32.gmra.mrb[0].mxu0 %v1915
      %v3670 = vpop.f32.mrb[0].mxu0
      %v3671 = vadd.f32 0.0, %v3670
      %v3672 = vpop.f32.mrb[0].mxu0
      %3673 = vmatprep.mubr.f32.mxu0 0.0
      %3674 = vmatmul.mubr.f32.gmra.mrb[0].mxu0 %v1917
      %v3675 = vpop.f32.mrb[0].mxu0
      %v3676 = vadd.f32 0.0, %v3675
      %v3677 = vpop.f32.mrb[0].mxu0
      %3678 = vmatprep.mubr.f32.mxu0 0.0
      %3679 = vmatmul.mubr.f32.gmra.mrb[0].mxu0 %v1919
      %v3680 = vpop.f32.mrb[0].mxu0
      %v3681 = vadd.f32 0.0, %v3680
      %v3682 = vpop.f32.mrb[0].mxu0
      %3683 = vmatprep.mubr.f32.mxu0 0.0
      %3684 = vmatmul.mubr.f32.gmra.mrb[0].mxu0 %v1921
      %v3685 = vpop.f32.mrb[0].mxu0
      %v3686 = vadd.f32 0.0, %v3685
      %v3687 = vpop.f32.mrb[0].mxu0
      %3688 = vmatprep.mubr.f32.mxu0 0.0
      %3689 = vmatmul.mubr.f32.gmra.mrb[0].mxu0 %v1923
      %v3690 = vpop.f32.mrb[0].mxu0
      %v3691 = vadd.f32 0.0, %v3690
      %v3692 = vpop.f32.mrb[0].mxu0
      %3693 = vmatprep.mubr.f32.mxu0 0.0
      %3694 = vmatmul.mubr.f32.gmra.mrb[0].mxu0 %v1925
      %v3695 = vpop.f32.mrb[0].mxu0
      %v3696 = vadd.f32 0.0, %v3695
      %v3697 = vpop.f32.mrb[0].mxu0
      %3698 = vmatprep.mubr.f32.mxu0 0.0
      %3699 = vmatmul.mubr.f32.gmra.mrb[0].mxu0 %v1927
      %v3700 = vpop.f32.mrb[0].mxu0
      %v3701 = vadd.f32 0.0, %v3700
      %v3702 = vpop.f32.mrb[0].mxu0
      %3703 = vmatprep.mubr.f32.mxu0 0.0
      %3704 = vmatmul.mubr.f32.gmra.mrb[0].mxu0 %v1929
      %v3705 = vpop.f32.mrb[0].mxu0
      %v3706 = vadd.f32 0.0, %v3705
      %v3707 = vpop.f32.mrb[0].mxu0
      %3708 = vmatprep.mubr.f32.mxu0 0.0
      %3709 = vmatmul.mubr.f32.gmra.mrb[0].mxu0 %v1931
      %v3710 = vpop.f32.mrb[0].mxu0
      %v3711 = vadd.f32 0.0, %v3710
      %v3712 = vpop.f32.mrb[0].mxu0
      %3713 = vmatprep.mubr.f32.mxu0 0.0
      %3714 = vmatmul.mubr.f32.gmra.mrb[0].mxu0 %v1933
      %v3715 = vpop.f32.mrb[0].mxu0
      %v3716 = vadd.f32 0.0, %v3715
      %v3717 = vpop.f32.mrb[0].mxu0
      %3718 = vmatprep.mubr.f32.mxu0 0.0
      %3719 = vmatmul.mubr.f32.gmra.mrb[0].mxu0 %v1935
      %v3720 = vpop.f32.mrb[0].mxu0
      %v3721 = vadd.f32 0.0, %v3720
      %v3722 = vpop.f32.mrb[0].mxu0
      %3723 = vmatprep.mubr.f32.mxu0 0.0
      %3724 = vmatmul.mubr.f32.gmra.mrb[0].mxu0 %v1937
      %v3725 = vpop.f32.mrb[0].mxu0
      %v3726 = vadd.f32 0.0, %v3725
      %v3727 = vpop.f32.mrb[0].mxu0
      %3728 = vmatprep.mubr.f32.mxu0 0.0
      %3729 = vmatmul.mubr.f32.gmra.mrb[0].mxu0 %v1939
      %v3730 = vpop.f32.mrb[0].mxu0
      %v3731 = vadd.f32 0.0, %v3730
      %v3732 = vpop.f32.mrb[0].mxu0
      %3733 = vmatprep.mubr.f32.mxu0 0.0
      %3734 = vmatmul.mubr.f32.gmra.mrb[0].mxu0 %v1941
      %v3735 = vpop.f32.mrb[0].mxu0
      %v3736 = vadd.f32 0.0, %v3735
      %v3737 = vpop.f32.mrb[0].mxu0
      %3738 = vmatprep.mubr.f32.mxu0 0.0
      %3739 = vmatmul.mubr.f32.gmra.mrb[0].mxu0 %v1943
      %v3740 = vpop.f32.mrb[0].mxu0
      %v3741 = vadd.f32 0.0, %v3740
      %v3742 = vpop.f32.mrb[0].mxu0
      %3743 = vmatprep.mubr.f32.mxu0 0.0
      %3744 = vmatmul.mubr.f32.gmra.mrb[0].mxu0 %v2738
      %v3745 = vpop.f32.mrb[0].mxu0
      %v3746 = vadd.f32 0.0, %v3745
      %v3747 = vpop.f32.mrb[0].mxu0
      %3748 = vmatprep.mubr.f32.mxu0 0.0
      %3749 = vmatmul.mubr.f32.gmra.mrb[0].mxu0 %v2740
      %v3750 = vpop.f32.mrb[0].mxu0
      %v3751 = vadd.f32 0.0, %v3750
      %v3752 = vpop.f32.mrb[0].mxu0
      %3753 = vmatprep.mubr.f32.mxu0 0.0
      %3754 = vmatmul.mubr.f32.gmra.mrb[0].mxu0 %v3535
      %v3755 = vpop.f32.mrb[0].mxu0
      %v3756 = vadd.f32 0.0, %v3755
      %v3757 = vpop.f32.mrb[0].mxu0
      %3758 = vmatprep.mubr.f32.mxu0 0.0
      %3759 = vmatmul.mubr.f32.gmra.mrb[0].mxu0 %v3537
      %v3760 = vpop.f32.mrb[0].mxu0
      %v3761 = vadd.f32 0.0, %v3760
      %v3762 = vpop.f32.mrb[0].mxu0
      %3763 = vdwg.mxu0
      %v3764 = vadd.f32 %v3497, %v3606
      %v3765 = vadd.f32 %v3498, %v3611
      %v3766 = vadd.f32 %v3499, %v3616
      %v3767 = vadd.f32 %v3500, %v3621
      %v3768 = vadd.f32 %v3501, %v3626
      %v3769 = vadd.f32 %v3502, %v3631
      %v3770 = vadd.f32 %v3503, %v3636
      %v3771 = vadd.f32 %v3504, %v3641
      %v3772 = vadd.f32 %v3505, %v3646
      %v3773 = vadd.f32 %v3506, %v3651
      %v3774 = vadd.f32 %v3507, %v3656
      %v3775 = vadd.f32 %v3508, %v3661
      %v3776 = vadd.f32 %v3509, %v3666
      %v3777 = vadd.f32 %v3510, %v3671
      %v3778 = vadd.f32 %v3511, %v3676
      %v3779 = vadd.f32 %v3512, %v3681
      %v3780 = vadd.f32 %v3513, %v3686
      %v3781 = vadd.f32 %v3514, %v3691
      %v3782 = vadd.f32 %v3515, %v3696
      %v3783 = vadd.f32 %v3516, %v3701
      %v3784 = vadd.f32 %v3517, %v3706
      %v3785 = vadd.f32 %v3518, %v3711
      %v3786 = vadd.f32 %v3519, %v3716
      %v3787 = vadd.f32 %v3520, %v3721
      %v3788 = vadd.f32 %v3521, %v3726
      %v3789 = vadd.f32 %v3522, %v3731
      %v3790 = vadd.f32 %v3523, %v3736
      %v3791 = vadd.f32 %v3524, %v3741
      %v3792 = vadd.f32 %v3525, %v3746
      %v3793 = vadd.f32 %v3526, %v3751
      %v3794 = vadd.f32 %v3527, %v3756
      %v3795 = vadd.f32 %v3528, %v3761
      %v3796 = vmul.f32 %v3764, 0.5
      %v3797 = vmul.f32 %v3765, 0.5
      %v3798 = vmul.f32 %v3766, 0.5
      %v3799 = vmul.f32 %v3767, 0.5
      %v3800 = vmul.f32 %v3768, 0.5
      %v3801 = vmul.f32 %v3769, 0.5
      %v3802 = vmul.f32 %v3770, 0.5
      %v3803 = vmul.f32 %v3771, 0.5
      %v3804 = vmul.f32 %v3772, 0.5
      %v3805 = vmul.f32 %v3773, 0.5
      %v3806 = vmul.f32 %v3774, 0.5
      %v3807 = vmul.f32 %v3775, 0.5
      %v3808 = vmul.f32 %v3776, 0.5
      %v3809 = vmul.f32 %v3777, 0.5
      %v3810 = vmul.f32 %v3778, 0.5
      %v3811 = vmul.f32 %v3779, 0.5
      %v3812 = vmul.f32 %v3780, 0.5
      %v3813 = vmul.f32 %v3781, 0.5
      %v3814 = vmul.f32 %v3782, 0.5
      %v3815 = vmul.f32 %v3783, 0.5
      %v3816 = vmul.f32 %v3784, 0.5
      %v3817 = vmul.f32 %v3785, 0.5
      %v3818 = vmul.f32 %v3786, 0.5
      %v3819 = vmul.f32 %v3787, 0.5
      %v3820 = vmul.f32 %v3788, 0.5
      %v3821 = vmul.f32 %v3789, 0.5
      %v3822 = vmul.f32 %v3790, 0.5
      %v3823 = vmul.f32 %v3791, 0.5
      %v3824 = vmul.f32 %v3792, 0.5
      %v3825 = vmul.f32 %v3793, 0.5
      %v3826 = vmul.f32 %v3794, 0.5
      %v3827 = vmul.f32 %v3795, 0.5
      %v3828 = vtanh.pop %v3796
      %v3829 = vtanh.pop %v3797
      %v3830 = vtanh.pop %v3798
      %v3831 = vtanh.pop %v3799
      %v3832 = vtanh.pop %v3800
      %v3833 = vtanh.pop %v3801
      %v3834 = vtanh.pop %v3802
      %v3835 = vtanh.pop %v3803
      %v3836 = vtanh.pop %v3804
      %v3837 = vtanh.pop %v3805
      %v3838 = vtanh.pop %v3806
      %v3839 = vtanh.pop %v3807
      %v3840 = vtanh.pop %v3808
      %v3841 = vtanh.pop %v3809
      %v3842 = vtanh.pop %v3810
      %v3843 = vtanh.pop %v3811
      %v3844 = vtanh.pop %v3812
      %v3845 = vtanh.pop %v3813
      %v3846 = vtanh.pop %v3814
      %v3847 = vtanh.pop %v3815
      %v3848 = vtanh.pop %v3816
      %v3849 = vtanh.pop %v3817
      %v3850 = vtanh.pop %v3818
      %v3851 = vtanh.pop %v3819
      %v3852 = vtanh.pop %v3820
      %v3853 = vtanh.pop %v3821
      %v3854 = vtanh.pop %v3822
      %v3855 = vtanh.pop %v3823
      %v3856 = vtanh.pop %v3824
      %v3857 = vtanh.pop %v3825
      %v3858 = vtanh.pop %v3826
      %v3859 = vtanh.pop %v3827
      %v3860 = vadd.f32 %v3828, 1.0
      %v3861 = vadd.f32 %v3829, 1.0
      %v3862 = vadd.f32 %v3830, 1.0
      %v3863 = vadd.f32 %v3831, 1.0
      %v3864 = vadd.f32 %v3832, 1.0
      %v3865 = vadd.f32 %v3833, 1.0
      %v3866 = vadd.f32 %v3834, 1.0
      %v3867 = vadd.f32 %v3835, 1.0
      %v3868 = vadd.f32 %v3836, 1.0
      %v3869 = vadd.f32 %v3837, 1.0
      %v3870 = vadd.f32 %v3838, 1.0
      %v3871 = vadd.f32 %v3839, 1.0
      %v3872 = vadd.f32 %v3840, 1.0
      %v3873 = vadd.f32 %v3841, 1.0
      %v3874 = vadd.f32 %v3842, 1.0
      %v3875 = vadd.f32 %v3843, 1.0
      %v3876 = vadd.f32 %v3844, 1.0
      %v3877 = vadd.f32 %v3845, 1.0
      %v3878 = vadd.f32 %v3846, 1.0
      %v3879 = vadd.f32 %v3847, 1.0
      %v3880 = vadd.f32 %v3848, 1.0
      %v3881 = vadd.f32 %v3849, 1.0
      %v3882 = vadd.f32 %v3850, 1.0
      %v3883 = vadd.f32 %v3851, 1.0
      %v3884 = vadd.f32 %v3852, 1.0
      %v3885 = vadd.f32 %v3853, 1.0
      %v3886 = vadd.f32 %v3854, 1.0
      %v3887 = vadd.f32 %v3855, 1.0
      %v3888 = vadd.f32 %v3856, 1.0
      %v3889 = vadd.f32 %v3857, 1.0
      %v3890 = vadd.f32 %v3858, 1.0
      %v3891 = vadd.f32 %v3859, 1.0
      %v3892 = vmul.f32 %v3860, 0.5
      %v3893 = vmul.f32 %v3861, 0.5
      %v3894 = vmul.f32 %v3862, 0.5
      %v3895 = vmul.f32 %v3863, 0.5
      %v3896 = vmul.f32 %v3864, 0.5
      %v3897 = vmul.f32 %v3865, 0.5
      %v3898 = vmul.f32 %v3866, 0.5
      %v3899 = vmul.f32 %v3867, 0.5
      %v3900 = vmul.f32 %v3868, 0.5
      %v3901 = vmul.f32 %v3869, 0.5
      %v3902 = vmul.f32 %v3870, 0.5
      %v3903 = vmul.f32 %v3871, 0.5
      %v3904 = vmul.f32 %v3872, 0.5
      %v3905 = vmul.f32 %v3873, 0.5
      %v3906 = vmul.f32 %v3874, 0.5
      %v3907 = vmul.f32 %v3875, 0.5
      %v3908 = vmul.f32 %v3876, 0.5
      %v3909 = vmul.f32 %v3877, 0.5
      %v3910 = vmul.f32 %v3878, 0.5
      %v3911 = vmul.f32 %v3879, 0.5
      %v3912 = vmul.f32 %v3880, 0.5
      %v3913 = vmul.f32 %v3881, 0.5
      %v3914 = vmul.f32 %v3882, 0.5
      %v3915 = vmul.f32 %v3883, 0.5
      %v3916 = vmul.f32 %v3884, 0.5
      %v3917 = vmul.f32 %v3885, 0.5
      %v3918 = vmul.f32 %v3886, 0.5
      %v3919 = vmul.f32 %v3887, 0.5
      %v3920 = vmul.f32 %v3888, 0.5
      %v3921 = vmul.f32 %v3889, 0.5
      %v3922 = vmul.f32 %v3890, 0.5
      %v3923 = vmul.f32 %v3891, 0.5
      %v3924 = vtanh.pop %v3764
      %v3925 = vtanh.pop %v3765
      %v3926 = vtanh.pop %v3766
      %v3927 = vtanh.pop %v3767
      %v3928 = vtanh.pop %v3768
      %v3929 = vtanh.pop %v3769
      %v3930 = vtanh.pop %v3770
      %v3931 = vtanh.pop %v3771
      %v3932 = vtanh.pop %v3772
      %v3933 = vtanh.pop %v3773
      %v3934 = vtanh.pop %v3774
      %v3935 = vtanh.pop %v3775
      %v3936 = vtanh.pop %v3776
      %v3937 = vtanh.pop %v3777
      %v3938 = vtanh.pop %v3778
      %v3939 = vtanh.pop %v3779
      %v3940 = vtanh.pop %v3780
      %v3941 = vtanh.pop %v3781
      %v3942 = vtanh.pop %v3782
      %v3943 = vtanh.pop %v3783
      %v3944 = vtanh.pop %v3784
      %v3945 = vtanh.pop %v3785
      %v3946 = vtanh.pop %v3786
      %v3947 = vtanh.pop %v3787
      %v3948 = vtanh.pop %v3788
      %v3949 = vtanh.pop %v3789
      %v3950 = vtanh.pop %v3790
      %v3951 = vtanh.pop %v3791
      %v3952 = vtanh.pop %v3792
      %v3953 = vtanh.pop %v3793
      %v3954 = vtanh.pop %v3794
      %v3955 = vtanh.pop %v3795
      %v3956 = vld [vmem:[#allocation3] sm:$0xff]
      %v3957 = vld [vmem:[#allocation3 + $0x8] sm:$0xff]
      %v3958 = vld [vmem:[#allocation3 + $0x10] sm:$0xff]
      %v3959 = vld [vmem:[#allocation3 + $0x18] sm:$0xff]
      %v3960 = vld [vmem:[#allocation3 + $0x20] sm:$0xff]
      %v3961 = vld [vmem:[#allocation3 + $0x28] sm:$0xff]
      %v3962 = vld [vmem:[#allocation3 + $0x30] sm:$0xff]
      %v3963 = vld [vmem:[#allocation3 + $0x38] sm:$0xff]
      %v3964 = vld [vmem:[#allocation3 + $0x40] sm:$0xff]
      %v3965 = vld [vmem:[#allocation3 + $0x48] sm:$0xff]
      %v3966 = vld [vmem:[#allocation3 + $0x50] sm:$0xff]
      %v3967 = vld [vmem:[#allocation3 + $0x58] sm:$0xff]
      %v3968 = vld [vmem:[#allocation3 + $0x60] sm:$0xff]
      %v3969 = vld [vmem:[#allocation3 + $0x68] sm:$0xff]
      %v3970 = vld [vmem:[#allocation3 + $0x70] sm:$0xff]
      %v3971 = vld [vmem:[#allocation3 + $0x78] sm:$0xff]
      %v3972 = vld [vmem:[#allocation3 + $0x80] sm:$0xff]
      %v3973 = vld [vmem:[#allocation3 + $0x88] sm:$0xff]
      %v3974 = vld [vmem:[#allocation3 + $0x90] sm:$0xff]
      %v3975 = vld [vmem:[#allocation3 + $0x98] sm:$0xff]
      %v3976 = vld [vmem:[#allocation3 + $0xa0] sm:$0xff]
      %v3977 = vld [vmem:[#allocation3 + $0xa8] sm:$0xff]
      %v3978 = vld [vmem:[#allocation3 + $0xb0] sm:$0xff]
      %v3979 = vld [vmem:[#allocation3 + $0xb8] sm:$0xff]
      %v3980 = vld [vmem:[#allocation3 + $0xc0] sm:$0xff]
      %v3981 = vld [vmem:[#allocation3 + $0xc8] sm:$0xff]
      %v3982 = vld [vmem:[#allocation3 + $0xd0] sm:$0xff]
      %v3983 = vld [vmem:[#allocation3 + $0xd8] sm:$0xff]
      %v3984 = vld [vmem:[#allocation3 + $0xe0] sm:$0xff]
      %v3985 = vld [vmem:[#allocation3 + $0xe8] sm:$0xff]
      %v3986 = vld [vmem:[#allocation3 + $0xf0] sm:$0xff]
      %v3987 = vld [vmem:[#allocation3 + $0xf8] sm:$0xff]
      %4020 = vrot.lane.b32.xlu0 %v3956, 32
      %v4021 = vpop.permute.xlu0 %4020
      %4022 = vrot.lane.b32.xlu0 %v3957, 32
      %v4023 = vpop.permute.xlu0 %4022
      %4024 = vrot.lane.b32.xlu0 %v3958, 32
      %v4025 = vpop.permute.xlu0 %4024
      %4026 = vrot.lane.b32.xlu0 %v3959, 32
      %v4027 = vpop.permute.xlu0 %4026
      %4028 = vrot.lane.b32.xlu0 %v3960, 32
      %v4029 = vpop.permute.xlu0 %4028
      %4030 = vrot.lane.b32.xlu0 %v3961, 32
      %v4031 = vpop.permute.xlu0 %4030
      %4032 = vrot.lane.b32.xlu0 %v3962, 32
      %v4033 = vpop.permute.xlu0 %4032
      %4034 = vrot.lane.b32.xlu0 %v3963, 32
      %v4035 = vpop.permute.xlu0 %4034
      %4036 = vrot.lane.b32.xlu0 %v3964, 32
      %v4037 = vpop.permute.xlu0 %4036
      %4038 = vrot.lane.b32.xlu0 %v3965, 32
      %v4039 = vpop.permute.xlu0 %4038
      %4040 = vrot.lane.b32.xlu0 %v3966, 32
      %v4041 = vpop.permute.xlu0 %4040
      %4042 = vrot.lane.b32.xlu0 %v3967, 32
      %v4043 = vpop.permute.xlu0 %4042
      %4044 = vrot.lane.b32.xlu0 %v3968, 32
      %v4045 = vpop.permute.xlu0 %4044
      %4046 = vrot.lane.b32.xlu0 %v3969, 32
      %v4047 = vpop.permute.xlu0 %4046
      %4048 = vrot.lane.b32.xlu0 %v3970, 32
      %v4049 = vpop.permute.xlu0 %4048
      %4050 = vrot.lane.b32.xlu0 %v3971, 32
      %v4051 = vpop.permute.xlu0 %4050
      %4052 = vrot.lane.b32.xlu0 %v3972, 32
      %v4053 = vpop.permute.xlu0 %4052
      %4054 = vrot.lane.b32.xlu0 %v3973, 32
      %v4055 = vpop.permute.xlu0 %4054
      %4056 = vrot.lane.b32.xlu0 %v3974, 32
      %v4057 = vpop.permute.xlu0 %4056
      %4058 = vrot.lane.b32.xlu0 %v3975, 32
      %v4059 = vpop.permute.xlu0 %4058
      %4060 = vrot.lane.b32.xlu0 %v3976, 32
      %v4061 = vpop.permute.xlu0 %4060
      %4062 = vrot.lane.b32.xlu0 %v3977, 32
      %v4063 = vpop.permute.xlu0 %4062
      %4064 = vrot.lane.b32.xlu0 %v3978, 32
      %v4065 = vpop.permute.xlu0 %4064
      %4066 = vrot.lane.b32.xlu0 %v3979, 32
      %v4067 = vpop.permute.xlu0 %4066
      %4068 = vrot.lane.b32.xlu0 %v3980, 32
      %v4069 = vpop.permute.xlu0 %4068
      %4070 = vrot.lane.b32.xlu0 %v3981, 32
      %v4071 = vpop.permute.xlu0 %4070
      %4072 = vrot.lane.b32.xlu0 %v3982, 32
      %v4073 = vpop.permute.xlu0 %4072
      %4074 = vrot.lane.b32.xlu0 %v3983, 32
      %v4075 = vpop.permute.xlu0 %4074
      %4076 = vrot.lane.b32.xlu0 %v3984, 32
      %v4077 = vpop.permute.xlu0 %4076
      %4078 = vrot.lane.b32.xlu0 %v3985, 32
      %v4079 = vpop.permute.xlu0 %4078
      %4080 = vrot.lane.b32.xlu0 %v3986, 32
      %v4081 = vpop.permute.xlu0 %4080
      %4082 = vrot.lane.b32.xlu0 %v3987, 32
      %v4083 = vpop.permute.xlu0 %4082
      %v4116 = vmul.f32 %v3892, %v4021
      %v4117 = vmul.f32 %v3893, %v4023
      %v4118 = vmul.f32 %v3894, %v4025
      %v4119 = vmul.f32 %v3895, %v4027
      %v4120 = vmul.f32 %v3896, %v4029
      %v4121 = vmul.f32 %v3897, %v4031
      %v4122 = vmul.f32 %v3898, %v4033
      %v4123 = vmul.f32 %v3899, %v4035
      %v4124 = vmul.f32 %v3900, %v4037
      %v4125 = vmul.f32 %v3901, %v4039
      %v4126 = vmul.f32 %v3902, %v4041
      %v4127 = vmul.f32 %v3903, %v4043
      %v4128 = vmul.f32 %v3904, %v4045
      %v4129 = vmul.f32 %v3905, %v4047
      %v4130 = vmul.f32 %v3906, %v4049
      %v4131 = vmul.f32 %v3907, %v4051
      %v4132 = vmul.f32 %v3908, %v4053
      %v4133 = vmul.f32 %v3909, %v4055
      %v4134 = vmul.f32 %v3910, %v4057
      %v4135 = vmul.f32 %v3911, %v4059
      %v4136 = vmul.f32 %v3912, %v4061
      %v4137 = vmul.f32 %v3913, %v4063
      %v4138 = vmul.f32 %v3914, %v4065
      %v4139 = vmul.f32 %v3915, %v4067
      %v4140 = vmul.f32 %v3916, %v4069
      %v4141 = vmul.f32 %v3917, %v4071
      %v4142 = vmul.f32 %v3918, %v4073
      %v4143 = vmul.f32 %v3919, %v4075
      %v4144 = vmul.f32 %v3920, %v4077
      %v4145 = vmul.f32 %v3921, %v4079
      %v4146 = vmul.f32 %v3922, %v4081
      %v4147 = vmul.f32 %v3923, %v4083
      %4180 = vrot.lane.b32.xlu0 %v3924, 32
      %v4181 = vpop.permute.xlu0 %4180
      %4182 = vrot.lane.b32.xlu0 %v3925, 32
      %v4183 = vpop.permute.xlu0 %4182
      %4184 = vrot.lane.b32.xlu0 %v3926, 32
      %v4185 = vpop.permute.xlu0 %4184
      %4186 = vrot.lane.b32.xlu0 %v3927, 32
      %v4187 = vpop.permute.xlu0 %4186
      %4188 = vrot.lane.b32.xlu0 %v3928, 32
      %v4189 = vpop.permute.xlu0 %4188
      %4190 = vrot.lane.b32.xlu0 %v3929, 32
      %v4191 = vpop.permute.xlu0 %4190
      %4192 = vrot.lane.b32.xlu0 %v3930, 32
      %v4193 = vpop.permute.xlu0 %4192
      %4194 = vrot.lane.b32.xlu0 %v3931, 32
      %v4195 = vpop.permute.xlu0 %4194
      %4196 = vrot.lane.b32.xlu0 %v3932, 32
      %v4197 = vpop.permute.xlu0 %4196
      %4198 = vrot.lane.b32.xlu0 %v3933, 32
      %v4199 = vpop.permute.xlu0 %4198
      %4200 = vrot.lane.b32.xlu0 %v3934, 32
      %v4201 = vpop.permute.xlu0 %4200
      %4202 = vrot.lane.b32.xlu0 %v3935, 32
      %v4203 = vpop.permute.xlu0 %4202
      %4204 = vrot.lane.b32.xlu0 %v3936, 32
      %v4205 = vpop.permute.xlu0 %4204
      %4206 = vrot.lane.b32.xlu0 %v3937, 32
      %v4207 = vpop.permute.xlu0 %4206
      %4208 = vrot.lane.b32.xlu0 %v3938, 32
      %v4209 = vpop.permute.xlu0 %4208
      %4210 = vrot.lane.b32.xlu0 %v3939, 32
      %v4211 = vpop.permute.xlu0 %4210
      %4212 = vrot.lane.b32.xlu0 %v3940, 32
      %v4213 = vpop.permute.xlu0 %4212
      %4214 = vrot.lane.b32.xlu0 %v3941, 32
      %v4215 = vpop.permute.xlu0 %4214
      %4216 = vrot.lane.b32.xlu0 %v3942, 32
      %v4217 = vpop.permute.xlu0 %4216
      %4218 = vrot.lane.b32.xlu0 %v3943, 32
      %v4219 = vpop.permute.xlu0 %4218
      %4220 = vrot.lane.b32.xlu0 %v3944, 32
      %v4221 = vpop.permute.xlu0 %4220
      %4222 = vrot.lane.b32.xlu0 %v3945, 32
      %v4223 = vpop.permute.xlu0 %4222
      %4224 = vrot.lane.b32.xlu0 %v3946, 32
      %v4225 = vpop.permute.xlu0 %4224
      %4226 = vrot.lane.b32.xlu0 %v3947, 32
      %v4227 = vpop.permute.xlu0 %4226
      %4228 = vrot.lane.b32.xlu0 %v3948, 32
      %v4229 = vpop.permute.xlu0 %4228
      %4230 = vrot.lane.b32.xlu0 %v3949, 32
      %v4231 = vpop.permute.xlu0 %4230
      %4232 = vrot.lane.b32.xlu0 %v3950, 32
      %v4233 = vpop.permute.xlu0 %4232
      %4234 = vrot.lane.b32.xlu0 %v3951, 32
      %v4235 = vpop.permute.xlu0 %4234
      %4236 = vrot.lane.b32.xlu0 %v3952, 32
      %v4237 = vpop.permute.xlu0 %4236
      %4238 = vrot.lane.b32.xlu0 %v3953, 32
      %v4239 = vpop.permute.xlu0 %4238
      %4240 = vrot.lane.b32.xlu0 %v3954, 32
      %v4241 = vpop.permute.xlu0 %4240
      %4242 = vrot.lane.b32.xlu0 %v3955, 32
      %v4243 = vpop.permute.xlu0 %4242
      %v4276 = vmul.f32 %v3892, %v4181
      %v4277 = vmul.f32 %v3893, %v4183
      %v4278 = vmul.f32 %v3894, %v4185
      %v4279 = vmul.f32 %v3895, %v4187
      %v4280 = vmul.f32 %v3896, %v4189
      %v4281 = vmul.f32 %v3897, %v4191
      %v4282 = vmul.f32 %v3898, %v4193
      %v4283 = vmul.f32 %v3899, %v4195
      %v4284 = vmul.f32 %v3900, %v4197
      %v4285 = vmul.f32 %v3901, %v4199
      %v4286 = vmul.f32 %v3902, %v4201
      %v4287 = vmul.f32 %v3903, %v4203
      %v4288 = vmul.f32 %v3904, %v4205
      %v4289 = vmul.f32 %v3905, %v4207
      %v4290 = vmul.f32 %v3906, %v4209
      %v4291 = vmul.f32 %v3907, %v4211
      %v4292 = vmul.f32 %v3908, %v4213
      %v4293 = vmul.f32 %v3909, %v4215
      %v4294 = vmul.f32 %v3910, %v4217
      %v4295 = vmul.f32 %v3911, %v4219
      %v4296 = vmul.f32 %v3912, %v4221
      %v4297 = vmul.f32 %v3913, %v4223
      %v4298 = vmul.f32 %v3914, %v4225
      %v4299 = vmul.f32 %v3915, %v4227
      %v4300 = vmul.f32 %v3916, %v4229
      %v4301 = vmul.f32 %v3917, %v4231
      %v4302 = vmul.f32 %v3918, %v4233
      %v4303 = vmul.f32 %v3919, %v4235
      %v4304 = vmul.f32 %v3920, %v4237
      %v4305 = vmul.f32 %v3921, %v4239
      %v4306 = vmul.f32 %v3922, %v4241
      %v4307 = vmul.f32 %v3923, %v4243
      %4340 = vrot.lane.b32.xlu0 %v4276, 32
      %v4341 = vpop.permute.xlu0 %4340
      %4342 = vrot.lane.b32.xlu0 %v4277, 32
      %v4343 = vpop.permute.xlu0 %4342
      %4344 = vrot.lane.b32.xlu0 %v4278, 32
      %v4345 = vpop.permute.xlu0 %4344
      %4346 = vrot.lane.b32.xlu0 %v4279, 32
      %v4347 = vpop.permute.xlu0 %4346
      %4348 = vrot.lane.b32.xlu0 %v4280, 32
      %v4349 = vpop.permute.xlu0 %4348
      %4350 = vrot.lane.b32.xlu0 %v4281, 32
      %v4351 = vpop.permute.xlu0 %4350
      %4352 = vrot.lane.b32.xlu0 %v4282, 32
      %v4353 = vpop.permute.xlu0 %4352
      %4354 = vrot.lane.b32.xlu0 %v4283, 32
      %v4355 = vpop.permute.xlu0 %4354
      %4356 = vrot.lane.b32.xlu0 %v4284, 32
      %v4357 = vpop.permute.xlu0 %4356
      %4358 = vrot.lane.b32.xlu0 %v4285, 32
      %v4359 = vpop.permute.xlu0 %4358
      %4360 = vrot.lane.b32.xlu0 %v4286, 32
      %v4361 = vpop.permute.xlu0 %4360
      %4362 = vrot.lane.b32.xlu0 %v4287, 32
      %v4363 = vpop.permute.xlu0 %4362
      %4364 = vrot.lane.b32.xlu0 %v4288, 32
      %v4365 = vpop.permute.xlu0 %4364
      %4366 = vrot.lane.b32.xlu0 %v4289, 32
      %v4367 = vpop.permute.xlu0 %4366
      %4368 = vrot.lane.b32.xlu0 %v4290, 32
      %v4369 = vpop.permute.xlu0 %4368
      %4370 = vrot.lane.b32.xlu0 %v4291, 32
      %v4371 = vpop.permute.xlu0 %4370
      %4372 = vrot.lane.b32.xlu0 %v4292, 32
      %v4373 = vpop.permute.xlu0 %4372
      %4374 = vrot.lane.b32.xlu0 %v4293, 32
      %v4375 = vpop.permute.xlu0 %4374
      %4376 = vrot.lane.b32.xlu0 %v4294, 32
      %v4377 = vpop.permute.xlu0 %4376
      %4378 = vrot.lane.b32.xlu0 %v4295, 32
      %v4379 = vpop.permute.xlu0 %4378
      %4380 = vrot.lane.b32.xlu0 %v4296, 32
      %v4381 = vpop.permute.xlu0 %4380
      %4382 = vrot.lane.b32.xlu0 %v4297, 32
      %v4383 = vpop.permute.xlu0 %4382
      %4384 = vrot.lane.b32.xlu0 %v4298, 32
      %v4385 = vpop.permute.xlu0 %4384
      %4386 = vrot.lane.b32.xlu0 %v4299, 32
      %v4387 = vpop.permute.xlu0 %4386
      %4388 = vrot.lane.b32.xlu0 %v4300, 32
      %v4389 = vpop.permute.xlu0 %4388
      %4390 = vrot.lane.b32.xlu0 %v4301, 32
      %v4391 = vpop.permute.xlu0 %4390
      %4392 = vrot.lane.b32.xlu0 %v4302, 32
      %v4393 = vpop.permute.xlu0 %4392
      %4394 = vrot.lane.b32.xlu0 %v4303, 32
      %v4395 = vpop.permute.xlu0 %4394
      %4396 = vrot.lane.b32.xlu0 %v4304, 32
      %v4397 = vpop.permute.xlu0 %4396
      %4398 = vrot.lane.b32.xlu0 %v4305, 32
      %v4399 = vpop.permute.xlu0 %4398
      %4400 = vrot.lane.b32.xlu0 %v4306, 32
      %v4401 = vpop.permute.xlu0 %4400
      %4402 = vrot.lane.b32.xlu0 %v4307, 32
      %v4403 = vpop.permute.xlu0 %4402
      %v4436 = vadd.f32 %v4116, %v4341
      %v4437 = vadd.f32 %v4117, %v4343
      %v4438 = vadd.f32 %v4118, %v4345
      %v4439 = vadd.f32 %v4119, %v4347
      %v4440 = vadd.f32 %v4120, %v4349
      %v4441 = vadd.f32 %v4121, %v4351
      %v4442 = vadd.f32 %v4122, %v4353
      %v4443 = vadd.f32 %v4123, %v4355
      %v4444 = vadd.f32 %v4124, %v4357
      %v4445 = vadd.f32 %v4125, %v4359
      %v4446 = vadd.f32 %v4126, %v4361
      %v4447 = vadd.f32 %v4127, %v4363
      %v4448 = vadd.f32 %v4128, %v4365
      %v4449 = vadd.f32 %v4129, %v4367
      %v4450 = vadd.f32 %v4130, %v4369
      %v4451 = vadd.f32 %v4131, %v4371
      %v4452 = vadd.f32 %v4132, %v4373
      %v4453 = vadd.f32 %v4133, %v4375
      %v4454 = vadd.f32 %v4134, %v4377
      %v4455 = vadd.f32 %v4135, %v4379
      %v4456 = vadd.f32 %v4136, %v4381
      %v4457 = vadd.f32 %v4137, %v4383
      %v4458 = vadd.f32 %v4138, %v4385
      %v4459 = vadd.f32 %v4139, %v4387
      %v4460 = vadd.f32 %v4140, %v4389
      %v4461 = vadd.f32 %v4141, %v4391
      %v4462 = vadd.f32 %v4142, %v4393
      %v4463 = vadd.f32 %v4143, %v4395
      %v4464 = vadd.f32 %v4144, %v4397
      %v4465 = vadd.f32 %v4145, %v4399
      %v4466 = vadd.f32 %v4146, %v4401
      %v4467 = vadd.f32 %v4147, %v4403
      %v4468 = vtanh.pop %v4436
      %v4469 = vtanh.pop %v4437
      %v4470 = vtanh.pop %v4438
      %v4471 = vtanh.pop %v4439
      %v4472 = vtanh.pop %v4440
      %v4473 = vtanh.pop %v4441
      %v4474 = vtanh.pop %v4442
      %v4475 = vtanh.pop %v4443
      %v4476 = vtanh.pop %v4444
      %v4477 = vtanh.pop %v4445
      %v4478 = vtanh.pop %v4446
      %v4479 = vtanh.pop %v4447
      %v4480 = vtanh.pop %v4448
      %v4481 = vtanh.pop %v4449
      %v4482 = vtanh.pop %v4450
      %v4483 = vtanh.pop %v4451
      %v4484 = vtanh.pop %v4452
      %v4485 = vtanh.pop %v4453
      %v4486 = vtanh.pop %v4454
      %v4487 = vtanh.pop %v4455
      %v4488 = vtanh.pop %v4456
      %v4489 = vtanh.pop %v4457
      %v4490 = vtanh.pop %v4458
      %v4491 = vtanh.pop %v4459
      %v4492 = vtanh.pop %v4460
      %v4493 = vtanh.pop %v4461
      %v4494 = vtanh.pop %v4462
      %v4495 = vtanh.pop %v4463
      %v4496 = vtanh.pop %v4464
      %v4497 = vtanh.pop %v4465
      %v4498 = vtanh.pop %v4466
      %v4499 = vtanh.pop %v4467
      %4532 = vrot.lane.b32.xlu0 %v4468, 32
      %v4533 = vpop.permute.xlu0 %4532
      %4534 = vrot.lane.b32.xlu0 %v4469, 32
      %v4535 = vpop.permute.xlu0 %4534
      %4536 = vrot.lane.b32.xlu0 %v4470, 32
      %v4537 = vpop.permute.xlu0 %4536
      %4538 = vrot.lane.b32.xlu0 %v4471, 32
      %v4539 = vpop.permute.xlu0 %4538
      %4540 = vrot.lane.b32.xlu0 %v4472, 32
      %v4541 = vpop.permute.xlu0 %4540
      %4542 = vrot.lane.b32.xlu0 %v4473, 32
      %v4543 = vpop.permute.xlu0 %4542
      %4544 = vrot.lane.b32.xlu0 %v4474, 32
      %v4545 = vpop.permute.xlu0 %4544
      %4546 = vrot.lane.b32.xlu0 %v4475, 32
      %v4547 = vpop.permute.xlu0 %4546
      %4548 = vrot.lane.b32.xlu0 %v4476, 32
      %v4549 = vpop.permute.xlu0 %4548
      %4550 = vrot.lane.b32.xlu0 %v4477, 32
      %v4551 = vpop.permute.xlu0 %4550
      %4552 = vrot.lane.b32.xlu0 %v4478, 32
      %v4553 = vpop.permute.xlu0 %4552
      %4554 = vrot.lane.b32.xlu0 %v4479, 32
      %v4555 = vpop.permute.xlu0 %4554
      %4556 = vrot.lane.b32.xlu0 %v4480, 32
      %v4557 = vpop.permute.xlu0 %4556
      %4558 = vrot.lane.b32.xlu0 %v4481, 32
      %v4559 = vpop.permute.xlu0 %4558
      %4560 = vrot.lane.b32.xlu0 %v4482, 32
      %v4561 = vpop.permute.xlu0 %4560
      %4562 = vrot.lane.b32.xlu0 %v4483, 32
      %v4563 = vpop.permute.xlu0 %4562
      %4564 = vrot.lane.b32.xlu0 %v4484, 32
      %v4565 = vpop.permute.xlu0 %4564
      %4566 = vrot.lane.b32.xlu0 %v4485, 32
      %v4567 = vpop.permute.xlu0 %4566
      %4568 = vrot.lane.b32.xlu0 %v4486, 32
      %v4569 = vpop.permute.xlu0 %4568
      %4570 = vrot.lane.b32.xlu0 %v4487, 32
      %v4571 = vpop.permute.xlu0 %4570
      %4572 = vrot.lane.b32.xlu0 %v4488, 32
      %v4573 = vpop.permute.xlu0 %4572
      %4574 = vrot.lane.b32.xlu0 %v4489, 32
      %v4575 = vpop.permute.xlu0 %4574
      %4576 = vrot.lane.b32.xlu0 %v4490, 32
      %v4577 = vpop.permute.xlu0 %4576
      %4578 = vrot.lane.b32.xlu0 %v4491, 32
      %v4579 = vpop.permute.xlu0 %4578
      %4580 = vrot.lane.b32.xlu0 %v4492, 32
      %v4581 = vpop.permute.xlu0 %4580
      %4582 = vrot.lane.b32.xlu0 %v4493, 32
      %v4583 = vpop.permute.xlu0 %4582
      %4584 = vrot.lane.b32.xlu0 %v4494, 32
      %v4585 = vpop.permute.xlu0 %4584
      %4586 = vrot.lane.b32.xlu0 %v4495, 32
      %v4587 = vpop.permute.xlu0 %4586
      %4588 = vrot.lane.b32.xlu0 %v4496, 32
      %v4589 = vpop.permute.xlu0 %4588
      %4590 = vrot.lane.b32.xlu0 %v4497, 32
      %v4591 = vpop.permute.xlu0 %4590
      %4592 = vrot.lane.b32.xlu0 %v4498, 32
      %v4593 = vpop.permute.xlu0 %4592
      %4594 = vrot.lane.b32.xlu0 %v4499, 32
      %v4595 = vpop.permute.xlu0 %4594
      %v4628 = vmul.f32 %v3892, %v4533
      %v4629 = vmul.f32 %v3893, %v4535
      %v4630 = vmul.f32 %v3894, %v4537
      %v4631 = vmul.f32 %v3895, %v4539
      %v4632 = vmul.f32 %v3896, %v4541
      %v4633 = vmul.f32 %v3897, %v4543
      %v4634 = vmul.f32 %v3898, %v4545
      %v4635 = vmul.f32 %v3899, %v4547
      %v4636 = vmul.f32 %v3900, %v4549
      %v4637 = vmul.f32 %v3901, %v4551
      %v4638 = vmul.f32 %v3902, %v4553
      %v4639 = vmul.f32 %v3903, %v4555
      %v4640 = vmul.f32 %v3904, %v4557
      %v4641 = vmul.f32 %v3905, %v4559
      %v4642 = vmul.f32 %v3906, %v4561
      %v4643 = vmul.f32 %v3907, %v4563
      %v4644 = vmul.f32 %v3908, %v4565
      %v4645 = vmul.f32 %v3909, %v4567
      %v4646 = vmul.f32 %v3910, %v4569
      %v4647 = vmul.f32 %v3911, %v4571
      %v4648 = vmul.f32 %v3912, %v4573
      %v4649 = vmul.f32 %v3913, %v4575
      %v4650 = vmul.f32 %v3914, %v4577
      %v4651 = vmul.f32 %v3915, %v4579
      %v4652 = vmul.f32 %v3916, %v4581
      %v4653 = vmul.f32 %v3917, %v4583
      %v4654 = vmul.f32 %v3918, %v4585
      %v4655 = vmul.f32 %v3919, %v4587
      %v4656 = vmul.f32 %v3920, %v4589
      %v4657 = vmul.f32 %v3921, %v4591
      %v4658 = vmul.f32 %v3922, %v4593
      %v4659 = vmul.f32 %v3923, %v4595
      %4692 = vrot.lane.b32.xlu0 %v4436, 96
      %v4693 = vpop.permute.xlu0 %4692
      %4694 = vrot.lane.b32.xlu0 %v4437, 96
      %v4695 = vpop.permute.xlu0 %4694
      %4696 = vrot.lane.b32.xlu0 %v4438, 96
      %v4697 = vpop.permute.xlu0 %4696
      %4698 = vrot.lane.b32.xlu0 %v4439, 96
      %v4699 = vpop.permute.xlu0 %4698
      %4700 = vrot.lane.b32.xlu0 %v4440, 96
      %v4701 = vpop.permute.xlu0 %4700
      %4702 = vrot.lane.b32.xlu0 %v4441, 96
      %v4703 = vpop.permute.xlu0 %4702
      %4704 = vrot.lane.b32.xlu0 %v4442, 96
      %v4705 = vpop.permute.xlu0 %4704
      %4706 = vrot.lane.b32.xlu0 %v4443, 96
      %v4707 = vpop.permute.xlu0 %4706
      %4708 = vrot.lane.b32.xlu0 %v4444, 96
      %v4709 = vpop.permute.xlu0 %4708
      %4710 = vrot.lane.b32.xlu0 %v4445, 96
      %v4711 = vpop.permute.xlu0 %4710
      %4712 = vrot.lane.b32.xlu0 %v4446, 96
      %v4713 = vpop.permute.xlu0 %4712
      %4714 = vrot.lane.b32.xlu0 %v4447, 96
      %v4715 = vpop.permute.xlu0 %4714
      %4716 = vrot.lane.b32.xlu0 %v4448, 96
      %v4717 = vpop.permute.xlu0 %4716
      %4718 = vrot.lane.b32.xlu0 %v4449, 96
      %v4719 = vpop.permute.xlu0 %4718
      %4720 = vrot.lane.b32.xlu0 %v4450, 96
      %v4721 = vpop.permute.xlu0 %4720
      %4722 = vrot.lane.b32.xlu0 %v4451, 96
      %v4723 = vpop.permute.xlu0 %4722
      %4724 = vrot.lane.b32.xlu0 %v4452, 96
      %v4725 = vpop.permute.xlu0 %4724
      %4726 = vrot.lane.b32.xlu0 %v4453, 96
      %v4727 = vpop.permute.xlu0 %4726
      %4728 = vrot.lane.b32.xlu0 %v4454, 96
      %v4729 = vpop.permute.xlu0 %4728
      %4730 = vrot.lane.b32.xlu0 %v4455, 96
      %v4731 = vpop.permute.xlu0 %4730
      %4732 = vrot.lane.b32.xlu0 %v4456, 96
      %v4733 = vpop.permute.xlu0 %4732
      %4734 = vrot.lane.b32.xlu0 %v4457, 96
      %v4735 = vpop.permute.xlu0 %4734
      %4736 = vrot.lane.b32.xlu0 %v4458, 96
      %v4737 = vpop.permute.xlu0 %4736
      %4738 = vrot.lane.b32.xlu0 %v4459, 96
      %v4739 = vpop.permute.xlu0 %4738
      %4740 = vrot.lane.b32.xlu0 %v4460, 96
      %v4741 = vpop.permute.xlu0 %4740
      %4742 = vrot.lane.b32.xlu0 %v4461, 96
      %v4743 = vpop.permute.xlu0 %4742
      %4744 = vrot.lane.b32.xlu0 %v4462, 96
      %v4745 = vpop.permute.xlu0 %4744
      %4746 = vrot.lane.b32.xlu0 %v4463, 96
      %v4747 = vpop.permute.xlu0 %4746
      %4748 = vrot.lane.b32.xlu0 %v4464, 96
      %v4749 = vpop.permute.xlu0 %4748
      %4750 = vrot.lane.b32.xlu0 %v4465, 96
      %v4751 = vpop.permute.xlu0 %4750
      %4752 = vrot.lane.b32.xlu0 %v4466, 96
      %v4753 = vpop.permute.xlu0 %4752
      %4754 = vrot.lane.b32.xlu0 %v4467, 96
      %v4755 = vpop.permute.xlu0 %4754
      %4788 = vst.msk [vmem:[#allocation3] sm:$0xff] %vm1141, %v4693
      %4789 = vst.msk [vmem:[#allocation3 + $0x8] sm:$0xff] %vm1141, %v4695
      %4790 = vst.msk [vmem:[#allocation3 + $0x10] sm:$0xff] %vm1141, %v4697
      %4791 = vst.msk [vmem:[#allocation3 + $0x18] sm:$0xff] %vm1141, %v4699
      %4792 = vst.msk [vmem:[#allocation3 + $0x20] sm:$0xff] %vm1141, %v4701
      %4793 = vst.msk [vmem:[#allocation3 + $0x28] sm:$0xff] %vm1141, %v4703
      %4794 = vst.msk [vmem:[#allocation3 + $0x30] sm:$0xff] %vm1141, %v4705
      %4795 = vst.msk [vmem:[#allocation3 + $0x38] sm:$0xff] %vm1141, %v4707
      %4796 = vst.msk [vmem:[#allocation3 + $0x40] sm:$0xff] %vm1141, %v4709
      %4797 = vst.msk [vmem:[#allocation3 + $0x48] sm:$0xff] %vm1141, %v4711
      %4798 = vst.msk [vmem:[#allocation3 + $0x50] sm:$0xff] %vm1141, %v4713
      %4799 = vst.msk [vmem:[#allocation3 + $0x58] sm:$0xff] %vm1141, %v4715
      %4800 = vst.msk [vmem:[#allocation3 + $0x60] sm:$0xff] %vm1141, %v4717
      %4801 = vst.msk [vmem:[#allocation3 + $0x68] sm:$0xff] %vm1141, %v4719
      %4802 = vst.msk [vmem:[#allocation3 + $0x70] sm:$0xff] %vm1141, %v4721
      %4803 = vst.msk [vmem:[#allocation3 + $0x78] sm:$0xff] %vm1141, %v4723
      %4804 = vst.msk [vmem:[#allocation3 + $0x80] sm:$0xff] %vm1141, %v4725
      %4805 = vst.msk [vmem:[#allocation3 + $0x88] sm:$0xff] %vm1141, %v4727
      %4806 = vst.msk [vmem:[#allocation3 + $0x90] sm:$0xff] %vm1141, %v4729
      %4807 = vst.msk [vmem:[#allocation3 + $0x98] sm:$0xff] %vm1141, %v4731
      %4808 = vst.msk [vmem:[#allocation3 + $0xa0] sm:$0xff] %vm1141, %v4733
      %4809 = vst.msk [vmem:[#allocation3 + $0xa8] sm:$0xff] %vm1141, %v4735
      %4810 = vst.msk [vmem:[#allocation3 + $0xb0] sm:$0xff] %vm1141, %v4737
      %4811 = vst.msk [vmem:[#allocation3 + $0xb8] sm:$0xff] %vm1141, %v4739
      %4812 = vst.msk [vmem:[#allocation3 + $0xc0] sm:$0xff] %vm1141, %v4741
      %4813 = vst.msk [vmem:[#allocation3 + $0xc8] sm:$0xff] %vm1141, %v4743
      %4814 = vst.msk [vmem:[#allocation3 + $0xd0] sm:$0xff] %vm1141, %v4745
      %4815 = vst.msk [vmem:[#allocation3 + $0xd8] sm:$0xff] %vm1141, %v4747
      %4816 = vst.msk [vmem:[#allocation3 + $0xe0] sm:$0xff] %vm1141, %v4749
      %4817 = vst.msk [vmem:[#allocation3 + $0xe8] sm:$0xff] %vm1141, %v4751
      %4818 = vst.msk [vmem:[#allocation3 + $0xf0] sm:$0xff] %vm1141, %v4753
      %4819 = vst.msk [vmem:[#allocation3 + $0xf8] sm:$0xff] %vm1141, %v4755
      %4852 = vrot.lane.b32.xlu0 %v4628, 64
      %v4853 = vpop.permute.xlu0 %4852
      %4854 = vrot.lane.b32.xlu0 %v4629, 64
      %v4855 = vpop.permute.xlu0 %4854
      %4856 = vrot.lane.b32.xlu0 %v4630, 64
      %v4857 = vpop.permute.xlu0 %4856
      %4858 = vrot.lane.b32.xlu0 %v4631, 64
      %v4859 = vpop.permute.xlu0 %4858
      %4860 = vrot.lane.b32.xlu0 %v4632, 64
      %v4861 = vpop.permute.xlu0 %4860
      %4862 = vrot.lane.b32.xlu0 %v4633, 64
      %v4863 = vpop.permute.xlu0 %4862
      %4864 = vrot.lane.b32.xlu0 %v4634, 64
      %v4865 = vpop.permute.xlu0 %4864
      %4866 = vrot.lane.b32.xlu0 %v4635, 64
      %v4867 = vpop.permute.xlu0 %4866
      %4868 = vrot.lane.b32.xlu0 %v4636, 64
      %v4869 = vpop.permute.xlu0 %4868
      %4870 = vrot.lane.b32.xlu0 %v4637, 64
      %v4871 = vpop.permute.xlu0 %4870
      %4872 = vrot.lane.b32.xlu0 %v4638, 64
      %v4873 = vpop.permute.xlu0 %4872
      %4874 = vrot.lane.b32.xlu0 %v4639, 64
      %v4875 = vpop.permute.xlu0 %4874
      %4876 = vrot.lane.b32.xlu0 %v4640, 64
      %v4877 = vpop.permute.xlu0 %4876
      %4878 = vrot.lane.b32.xlu0 %v4641, 64
      %v4879 = vpop.permute.xlu0 %4878
      %4880 = vrot.lane.b32.xlu0 %v4642, 64
      %v4881 = vpop.permute.xlu0 %4880
      %4882 = vrot.lane.b32.xlu0 %v4643, 64
      %v4883 = vpop.permute.xlu0 %4882
      %4884 = vrot.lane.b32.xlu0 %v4644, 64
      %v4885 = vpop.permute.xlu0 %4884
      %4886 = vrot.lane.b32.xlu0 %v4645, 64
      %v4887 = vpop.permute.xlu0 %4886
      %4888 = vrot.lane.b32.xlu0 %v4646, 64
      %v4889 = vpop.permute.xlu0 %4888
      %4890 = vrot.lane.b32.xlu0 %v4647, 64
      %v4891 = vpop.permute.xlu0 %4890
      %4892 = vrot.lane.b32.xlu0 %v4648, 64
      %v4893 = vpop.permute.xlu0 %4892
      %4894 = vrot.lane.b32.xlu0 %v4649, 64
      %v4895 = vpop.permute.xlu0 %4894
      %4896 = vrot.lane.b32.xlu0 %v4650, 64
      %v4897 = vpop.permute.xlu0 %4896
      %4898 = vrot.lane.b32.xlu0 %v4651, 64
      %v4899 = vpop.permute.xlu0 %4898
      %4900 = vrot.lane.b32.xlu0 %v4652, 64
      %v4901 = vpop.permute.xlu0 %4900
      %4902 = vrot.lane.b32.xlu0 %v4653, 64
      %v4903 = vpop.permute.xlu0 %4902
      %4904 = vrot.lane.b32.xlu0 %v4654, 64
      %v4905 = vpop.permute.xlu0 %4904
      %4906 = vrot.lane.b32.xlu0 %v4655, 64
      %v4907 = vpop.permute.xlu0 %4906
      %4908 = vrot.lane.b32.xlu0 %v4656, 64
      %v4909 = vpop.permute.xlu0 %4908
      %4910 = vrot.lane.b32.xlu0 %v4657, 64
      %v4911 = vpop.permute.xlu0 %4910
      %4912 = vrot.lane.b32.xlu0 %v4658, 64
      %v4913 = vpop.permute.xlu0 %4912
      %4914 = vrot.lane.b32.xlu0 %v4659, 64
      %v4915 = vpop.permute.xlu0 %4914
      %s4948 = scalar_lea.vmem [#allocation2], 32
      %4949 = vst.msk [vmem:[%s4948 + $0x8] sm:$0xff] %vm1141, %v4853
      %4950 = vst.msk [vmem:[%s4948 + $0x10] sm:$0xff] %vm1141, %v4855
      %4951 = vst.msk [vmem:[%s4948 + $0x28] sm:$0xff] %vm1141, %v4857
      %4952 = vst.msk [vmem:[%s4948 + $0x30] sm:$0xff] %vm1141, %v4859
      %4953 = vst.msk [vmem:[%s4948 + $0x48] sm:$0xff] %vm1141, %v4861
      %4954 = vst.msk [vmem:[%s4948 + $0x50] sm:$0xff] %vm1141, %v4863
      %4955 = vst.msk [vmem:[%s4948 + $0x68] sm:$0xff] %vm1141, %v4865
      %4956 = vst.msk [vmem:[%s4948 + $0x70] sm:$0xff] %vm1141, %v4867
      %4957 = vst.msk [vmem:[%s4948 + $0x88] sm:$0xff] %vm1141, %v4869
      %4958 = vst.msk [vmem:[%s4948 + $0x90] sm:$0xff] %vm1141, %v4871
      %4959 = vst.msk [vmem:[%s4948 + $0xa8] sm:$0xff] %vm1141, %v4873
      %4960 = vst.msk [vmem:[%s4948 + $0xb0] sm:$0xff] %vm1141, %v4875
      %4961 = vst.msk [vmem:[%s4948 + $0xc8] sm:$0xff] %vm1141, %v4877
      %4962 = vst.msk [vmem:[%s4948 + $0xd0] sm:$0xff] %vm1141, %v4879
      %4963 = vst.msk [vmem:[%s4948 + $0xe8] sm:$0xff] %vm1141, %v4881
      %4964 = vst.msk [vmem:[%s4948 + $0xf0] sm:$0xff] %vm1141, %v4883
      %4965 = vst.msk [vmem:[%s4948 + $0x108] sm:$0xff] %vm1141, %v4885
      %4966 = vst.msk [vmem:[%s4948 + $0x110] sm:$0xff] %vm1141, %v4887
      %4967 = vst.msk [vmem:[%s4948 + $0x128] sm:$0xff] %vm1141, %v4889
      %4968 = vst.msk [vmem:[%s4948 + $0x130] sm:$0xff] %vm1141, %v4891
      %4969 = vst.msk [vmem:[%s4948 + $0x148] sm:$0xff] %vm1141, %v4893
      %4970 = vst.msk [vmem:[%s4948 + $0x150] sm:$0xff] %vm1141, %v4895
      %4971 = vst.msk [vmem:[%s4948 + $0x168] sm:$0xff] %vm1141, %v4897
      %4972 = vst.msk [vmem:[%s4948 + $0x170] sm:$0xff] %vm1141, %v4899
      %4973 = vst.msk [vmem:[%s4948 + $0x188] sm:$0xff] %vm1141, %v4901
      %4974 = vst.msk [vmem:[%s4948 + $0x190] sm:$0xff] %vm1141, %v4903
      %4975 = vst.msk [vmem:[%s4948 + $0x1a8] sm:$0xff] %vm1141, %v4905
      %4976 = vst.msk [vmem:[%s4948 + $0x1b0] sm:$0xff] %vm1141, %v4907
      %4977 = vst.msk [vmem:[%s4948 + $0x1c8] sm:$0xff] %vm1141, %v4909
      %4978 = vst.msk [vmem:[%s4948 + $0x1d0] sm:$0xff] %vm1141, %v4911
      %4979 = vst.msk [vmem:[%s4948 + $0x1e8] sm:$0xff] %vm1141, %v4913
      %4980 = vst.msk [vmem:[%s4948 + $0x1f0] sm:$0xff] %vm1141, %v4915
      %v4981 = vrot.slane %v4630, 7
      %vm4982 = vcmask 1041409
      %v4983 = vsel %vm4982, %v4981, %v4628
      %v4984 = vrot.slane %v4632, 6
      %vm4985 = vcmask 1042434
      %v4986 = vsel %vm4985, %v4984, %v4983
      %v4987 = vrot.slane %v4634, 5
      %vm4988 = vcmask 1043459
      %v4989 = vsel %vm4988, %v4987, %v4986
      %v4990 = vrot.slane %v4636, 4
      %vm4991 = vcmask 1044484
      %v4992 = vsel %vm4991, %v4990, %v4989
      %v4993 = vrot.slane %v4638, 3
      %vm4994 = vcmask 1045509
      %v4995 = vsel %vm4994, %v4993, %v4992
      %v4996 = vrot.slane %v4640, 2
      %vm4997 = vcmask 1046534
      %v4998 = vsel %vm4997, %v4996, %v4995
      %v4999 = vrot.slane %v4642, 1
      %vm5000 = vcmask 1047559
      %v5001 = vsel %vm5000, %v4999, %v4998
      %v5002 = vrot.slane %v4646, 7
      %v5003 = vsel %vm4982, %v5002, %v4644
      %v5004 = vrot.slane %v4648, 6
      %v5005 = vsel %vm4985, %v5004, %v5003
      %v5006 = vrot.slane %v4650, 5
      %v5007 = vsel %vm4988, %v5006, %v5005
      %v5008 = vrot.slane %v4652, 4
      %v5009 = vsel %vm4991, %v5008, %v5007
      %v5010 = vrot.slane %v4654, 3
      %v5011 = vsel %vm4994, %v5010, %v5009
      %v5012 = vrot.slane %v4656, 2
      %v5013 = vsel %vm4997, %v5012, %v5011
      %v5014 = vrot.slane %v4658, 1
      %v5015 = vsel %vm5000, %v5014, %v5013
      %5016 = vrot.lane.b32.xlu0 %v5001, 64
      %v5017 = vpop.permute.xlu0 %5016
      %5018 = vrot.lane.b32.xlu0 %v5015, 64
      %v5019 = vpop.permute.xlu0 %5018
      %v5022 = vrot.slane %v4628, 1
      %v5023 = vsel %vm4982, %v4630, %v5022
      %v5024 = vrot.slane %v4632, 7
      %v5025 = vsel %vm4985, %v5024, %v5023
      %v5026 = vrot.slane %v4634, 6
      %v5027 = vsel %vm4988, %v5026, %v5025
      %v5028 = vrot.slane %v4636, 5
      %v5029 = vsel %vm4991, %v5028, %v5027
      %v5030 = vrot.slane %v4638, 4
      %v5031 = vsel %vm4994, %v5030, %v5029
      %v5032 = vrot.slane %v4640, 3
      %v5033 = vsel %vm4997, %v5032, %v5031
      %v5034 = vrot.slane %v4642, 2
      %v5035 = vsel %vm5000, %v5034, %v5033
      %v5036 = vrot.slane %v4644, 1
      %v5037 = vsel %vm4982, %v4646, %v5036
      %v5038 = vrot.slane %v4648, 7
      %v5039 = vsel %vm4985, %v5038, %v5037
      %v5040 = vrot.slane %v4650, 6
      %v5041 = vsel %vm4988, %v5040, %v5039
      %v5042 = vrot.slane %v4652, 5
      %v5043 = vsel %vm4991, %v5042, %v5041
      %v5044 = vrot.slane %v4654, 4
      %v5045 = vsel %vm4994, %v5044, %v5043
      %v5046 = vrot.slane %v4656, 3
      %v5047 = vsel %vm4997, %v5046, %v5045
      %v5048 = vrot.slane %v4658, 2
      %v5049 = vsel %vm5000, %v5048, %v5047
      %5050 = vrot.lane.b32.xlu0 %v5035, 96
      %v5051 = vpop.permute.xlu0 %5050
      %5052 = vrot.lane.b32.xlu0 %v5049, 96
      %v5053 = vpop.permute.xlu0 %5052
      %v5056 = vrot.slane %v4628, 2
      %v5057 = vrot.slane %v4630, 1
      %v5058 = vsel %vm4982, %v5057, %v5056
      %v5059 = vsel %vm4985, %v4632, %v5058
      %v5060 = vrot.slane %v4634, 7
      %v5061 = vsel %vm4988, %v5060, %v5059
      %v5062 = vrot.slane %v4636, 6
      %v5063 = vsel %vm4991, %v5062, %v5061
      %v5064 = vrot.slane %v4638, 5
      %v5065 = vsel %vm4994, %v5064, %v5063
      %v5066 = vrot.slane %v4640, 4
      %v5067 = vsel %vm4997, %v5066, %v5065
      %v5068 = vrot.slane %v4642, 3
      %v5069 = vsel %vm5000, %v5068, %v5067
      %v5070 = vrot.slane %v4644, 2
      %v5071 = vrot.slane %v4646, 1
      %v5072 = vsel %vm4982, %v5071, %v5070
      %v5073 = vsel %vm4985, %v4648, %v5072
      %v5074 = vrot.slane %v4650, 7
      %v5075 = vsel %vm4988, %v5074, %v5073
      %v5076 = vrot.slane %v4652, 6
      %v5077 = vsel %vm4991, %v5076, %v5075
      %v5078 = vrot.slane %v4654, 5
      %v5079 = vsel %vm4994, %v5078, %v5077
      %v5080 = vrot.slane %v4656, 4
      %v5081 = vsel %vm4997, %v5080, %v5079
      %v5082 = vrot.slane %v4658, 3
      %v5083 = vsel %vm5000, %v5082, %v5081
      %v5086 = vrot.slane %v4628, 3
      %v5087 = vrot.slane %v4630, 2
      %v5088 = vsel %vm4982, %v5087, %v5086
      %v5089 = vrot.slane %v4632, 1
      %v5090 = vsel %vm4985, %v5089, %v5088
      %v5091 = vsel %vm4988, %v4634, %v5090
      %v5092 = vrot.slane %v4636, 7
      %v5093 = vsel %vm4991, %v5092, %v5091
      %v5094 = vrot.slane %v4638, 6
      %v5095 = vsel %vm4994, %v5094, %v5093
      %v5096 = vrot.slane %v4640, 5
      %v5097 = vsel %vm4997, %v5096, %v5095
      %v5098 = vrot.slane %v4642, 4
      %v5099 = vsel %vm5000, %v5098, %v5097
      %v5100 = vrot.slane %v4644, 3
      %v5101 = vrot.slane %v4646, 2
      %v5102 = vsel %vm4982, %v5101, %v5100
      %v5103 = vrot.slane %v4648, 1
      %v5104 = vsel %vm4985, %v5103, %v5102
      %v5105 = vsel %vm4988, %v4650, %v5104
      %v5106 = vrot.slane %v4652, 7
      %v5107 = vsel %vm4991, %v5106, %v5105
      %v5108 = vrot.slane %v4654, 6
      %v5109 = vsel %vm4994, %v5108, %v5107
      %v5110 = vrot.slane %v4656, 5
      %v5111 = vsel %vm4997, %v5110, %v5109
      %v5112 = vrot.slane %v4658, 4
      %v5113 = vsel %vm5000, %v5112, %v5111
      %5114 = vrot.lane.b32.xlu0 %v5099, 32
      %v5115 = vpop.permute.xlu0 %5114
      %5116 = vrot.lane.b32.xlu0 %v5113, 32
      %v5117 = vpop.permute.xlu0 %5116
      %v5120 = vrot.slane %v4628, 4
      %v5121 = vrot.slane %v4630, 3
      %v5122 = vsel %vm4982, %v5121, %v5120
      %v5123 = vrot.slane %v4632, 2
      %v5124 = vsel %vm4985, %v5123, %v5122
      %v5125 = vrot.slane %v4634, 1
      %v5126 = vsel %vm4988, %v5125, %v5124
      %v5127 = vsel %vm4991, %v4636, %v5126
      %v5128 = vrot.slane %v4638, 7
      %v5129 = vsel %vm4994, %v5128, %v5127
      %v5130 = vrot.slane %v4640, 6
      %v5131 = vsel %vm4997, %v5130, %v5129
      %v5132 = vrot.slane %v4642, 5
      %v5133 = vsel %vm5000, %v5132, %v5131
      %v5134 = vrot.slane %v4644, 4
      %v5135 = vrot.slane %v4646, 3
      %v5136 = vsel %vm4982, %v5135, %v5134
      %v5137 = vrot.slane %v4648, 2
      %v5138 = vsel %vm4985, %v5137, %v5136
      %v5139 = vrot.slane %v4650, 1
      %v5140 = vsel %vm4988, %v5139, %v5138
      %v5141 = vsel %vm4991, %v4652, %v5140
      %v5142 = vrot.slane %v4654, 7
      %v5143 = vsel %vm4994, %v5142, %v5141
      %v5144 = vrot.slane %v4656, 6
      %v5145 = vsel %vm4997, %v5144, %v5143
      %v5146 = vrot.slane %v4658, 5
      %v5147 = vsel %vm5000, %v5146, %v5145
      %5148 = vrot.lane.b32.xlu0 %v5133, 64
      %v5149 = vpop.permute.xlu0 %5148
      %5150 = vrot.lane.b32.xlu0 %v5147, 64
      %v5151 = vpop.permute.xlu0 %5150
      %v5154 = vrot.slane %v4628, 5
      %v5155 = vrot.slane %v4630, 4
      %v5156 = vsel %vm4982, %v5155, %v5154
      %v5157 = vrot.slane %v4632, 3
      %v5158 = vsel %vm4985, %v5157, %v5156
      %v5159 = vrot.slane %v4634, 2
      %v5160 = vsel %vm4988, %v5159, %v5158
      %v5161 = vrot.slane %v4636, 1
      %v5162 = vsel %vm4991, %v5161, %v5160
      %v5163 = vsel %vm4994, %v4638, %v5162
      %v5164 = vrot.slane %v4640, 7
      %v5165 = vsel %vm4997, %v5164, %v5163
      %v5166 = vrot.slane %v4642, 6
      %v5167 = vsel %vm5000, %v5166, %v5165
      %v5168 = vrot.slane %v4644, 5
      %v5169 = vrot.slane %v4646, 4
      %v5170 = vsel %vm4982, %v5169, %v5168
      %v5171 = vrot.slane %v4648, 3
      %v5172 = vsel %vm4985, %v5171, %v5170
      %v5173 = vrot.slane %v4650, 2
      %v5174 = vsel %vm4988, %v5173, %v5172
      %v5175 = vrot.slane %v4652, 1
      %v5176 = vsel %vm4991, %v5175, %v5174
      %v5177 = vsel %vm4994, %v4654, %v5176
      %v5178 = vrot.slane %v4656, 7
      %v5179 = vsel %vm4997, %v5178, %v5177
      %v5180 = vrot.slane %v4658, 6
      %v5181 = vsel %vm5000, %v5180, %v5179
      %5182 = vrot.lane.b32.xlu0 %v5167, 96
      %v5183 = vpop.permute.xlu0 %5182
      %5184 = vrot.lane.b32.xlu0 %v5181, 96
      %v5185 = vpop.permute.xlu0 %5184
      %v5188 = vrot.slane %v4628, 6
      %v5189 = vrot.slane %v4630, 5
      %v5190 = vsel %vm4982, %v5189, %v5188
      %v5191 = vrot.slane %v4632, 4
      %v5192 = vsel %vm4985, %v5191, %v5190
      %v5193 = vrot.slane %v4634, 3
      %v5194 = vsel %vm4988, %v5193, %v5192
      %v5195 = vrot.slane %v4636, 2
      %v5196 = vsel %vm4991, %v5195, %v5194
      %v5197 = vrot.slane %v4638, 1
      %v5198 = vsel %vm4994, %v5197, %v5196
      %v5199 = vsel %vm4997, %v4640, %v5198
      %v5200 = vrot.slane %v4642, 7
      %v5201 = vsel %vm5000, %v5200, %v5199
      %v5202 = vrot.slane %v4644, 6
      %v5203 = vrot.slane %v4646, 5
      %v5204 = vsel %vm4982, %v5203, %v5202
      %v5205 = vrot.slane %v4648, 4
      %v5206 = vsel %vm4985, %v5205, %v5204
      %v5207 = vrot.slane %v4650, 3
      %v5208 = vsel %vm4988, %v5207, %v5206
      %v5209 = vrot.slane %v4652, 2
      %v5210 = vsel %vm4991, %v5209, %v5208
      %v5211 = vrot.slane %v4654, 1
      %v5212 = vsel %vm4994, %v5211, %v5210
      %v5213 = vsel %vm4997, %v4656, %v5212
      %v5214 = vrot.slane %v4658, 7
      %v5215 = vsel %vm5000, %v5214, %v5213
      %v5218 = vrot.slane %v4628, 7
      %v5219 = vrot.slane %v4630, 6
      %v5220 = vsel %vm4982, %v5219, %v5218
      %v5221 = vrot.slane %v4632, 5
      %v5222 = vsel %vm4985, %v5221, %v5220
      %v5223 = vrot.slane %v4634, 4
      %v5224 = vsel %vm4988, %v5223, %v5222
      %v5225 = vrot.slane %v4636, 3
      %v5226 = vsel %vm4991, %v5225, %v5224
      %v5227 = vrot.slane %v4638, 2
      %v5228 = vsel %vm4994, %v5227, %v5226
      %v5229 = vrot.slane %v4640, 1
      %v5230 = vsel %vm4997, %v5229, %v5228
      %v5231 = vsel %vm5000, %v4642, %v5230
      %v5232 = vrot.slane %v4644, 7
      %v5233 = vrot.slane %v4646, 6
      %v5234 = vsel %vm4982, %v5233, %v5232
      %v5235 = vrot.slane %v4648, 5
      %v5236 = vsel %vm4985, %v5235, %v5234
      %v5237 = vrot.slane %v4650, 4
      %v5238 = vsel %vm4988, %v5237, %v5236
      %v5239 = vrot.slane %v4652, 3
      %v5240 = vsel %vm4991, %v5239, %v5238
      %v5241 = vrot.slane %v4654, 2
      %v5242 = vsel %vm4994, %v5241, %v5240
      %v5243 = vrot.slane %v4656, 1
      %v5244 = vsel %vm4997, %v5243, %v5242
      %v5245 = vsel %vm5000, %v4658, %v5244
      %5246 = vrot.lane.b32.xlu0 %v5231, 32
      %v5247 = vpop.permute.xlu0 %5246
      %5248 = vrot.lane.b32.xlu0 %v5245, 32
      %v5249 = vpop.permute.xlu0 %5248
      %v5252 = vrot.slane %v4631, 7
      %v5253 = vsel %vm4982, %v5252, %v4629
      %v5254 = vrot.slane %v4633, 6
      %v5255 = vsel %vm4985, %v5254, %v5253
      %v5256 = vrot.slane %v4635, 5
      %v5257 = vsel %vm4988, %v5256, %v5255
      %v5258 = vrot.slane %v4637, 4
      %v5259 = vsel %vm4991, %v5258, %v5257
      %v5260 = vrot.slane %v4639, 3
      %v5261 = vsel %vm4994, %v5260, %v5259
      %v5262 = vrot.slane %v4641, 2
      %v5263 = vsel %vm4997, %v5262, %v5261
      %v5264 = vrot.slane %v4643, 1
      %v5265 = vsel %vm5000, %v5264, %v5263
      %v5266 = vrot.slane %v4647, 7
      %v5267 = vsel %vm4982, %v5266, %v4645
      %v5268 = vrot.slane %v4649, 6
      %v5269 = vsel %vm4985, %v5268, %v5267
      %v5270 = vrot.slane %v4651, 5
      %v5271 = vsel %vm4988, %v5270, %v5269
      %v5272 = vrot.slane %v4653, 4
      %v5273 = vsel %vm4991, %v5272, %v5271
      %v5274 = vrot.slane %v4655, 3
      %v5275 = vsel %vm4994, %v5274, %v5273
      %v5276 = vrot.slane %v4657, 2
      %v5277 = vsel %vm4997, %v5276, %v5275
      %v5278 = vrot.slane %v4659, 1
      %v5279 = vsel %vm5000, %v5278, %v5277
      %5280 = vrot.lane.b32.xlu0 %v5265, 64
      %v5281 = vpop.permute.xlu0 %5280
      %5282 = vrot.lane.b32.xlu0 %v5279, 64
      %v5283 = vpop.permute.xlu0 %5282
      %v5286 = vrot.slane %v4629, 1
      %v5287 = vsel %vm4982, %v4631, %v5286
      %v5288 = vrot.slane %v4633, 7
      %v5289 = vsel %vm4985, %v5288, %v5287
      %v5290 = vrot.slane %v4635, 6
      %v5291 = vsel %vm4988, %v5290, %v5289
      %v5292 = vrot.slane %v4637, 5
      %v5293 = vsel %vm4991, %v5292, %v5291
      %v5294 = vrot.slane %v4639, 4
      %v5295 = vsel %vm4994, %v5294, %v5293
      %v5296 = vrot.slane %v4641, 3
      %v5297 = vsel %vm4997, %v5296, %v5295
      %v5298 = vrot.slane %v4643, 2
      %v5299 = vsel %vm5000, %v5298, %v5297
      %v5300 = vrot.slane %v4645, 1
      %v5301 = vsel %vm4982, %v4647, %v5300
      %v5302 = vrot.slane %v4649, 7
      %v5303 = vsel %vm4985, %v5302, %v5301
      %v5304 = vrot.slane %v4651, 6
      %v5305 = vsel %vm4988, %v5304, %v5303
      %v5306 = vrot.slane %v4653, 5
      %v5307 = vsel %vm4991, %v5306, %v5305
      %v5308 = vrot.slane %v4655, 4
      %v5309 = vsel %vm4994, %v5308, %v5307
      %v5310 = vrot.slane %v4657, 3
      %v5311 = vsel %vm4997, %v5310, %v5309
      %v5312 = vrot.slane %v4659, 2
      %v5313 = vsel %vm5000, %v5312, %v5311
      %5314 = vrot.lane.b32.xlu0 %v5299, 96
      %v5315 = vpop.permute.xlu0 %5314
      %5316 = vrot.lane.b32.xlu0 %v5313, 96
      %v5317 = vpop.permute.xlu0 %5316
      %v5320 = vrot.slane %v4629, 2
      %v5321 = vrot.slane %v4631, 1
      %v5322 = vsel %vm4982, %v5321, %v5320
      %v5323 = vsel %vm4985, %v4633, %v5322
      %v5324 = vrot.slane %v4635, 7
      %v5325 = vsel %vm4988, %v5324, %v5323
      %v5326 = vrot.slane %v4637, 6
      %v5327 = vsel %vm4991, %v5326, %v5325
      %v5328 = vrot.slane %v4639, 5
      %v5329 = vsel %vm4994, %v5328, %v5327
      %v5330 = vrot.slane %v4641, 4
      %v5331 = vsel %vm4997, %v5330, %v5329
      %v5332 = vrot.slane %v4643, 3
      %v5333 = vsel %vm5000, %v5332, %v5331
      %v5334 = vrot.slane %v4645, 2
      %v5335 = vrot.slane %v4647, 1
      %v5336 = vsel %vm4982, %v5335, %v5334
      %v5337 = vsel %vm4985, %v4649, %v5336
      %v5338 = vrot.slane %v4651, 7
      %v5339 = vsel %vm4988, %v5338, %v5337
      %v5340 = vrot.slane %v4653, 6
      %v5341 = vsel %vm4991, %v5340, %v5339
      %v5342 = vrot.slane %v4655, 5
      %v5343 = vsel %vm4994, %v5342, %v5341
      %v5344 = vrot.slane %v4657, 4
      %v5345 = vsel %vm4997, %v5344, %v5343
      %v5346 = vrot.slane %v4659, 3
      %v5347 = vsel %vm5000, %v5346, %v5345
      %v5350 = vrot.slane %v4629, 3
      %v5351 = vrot.slane %v4631, 2
      %v5352 = vsel %vm4982, %v5351, %v5350
      %v5353 = vrot.slane %v4633, 1
      %v5354 = vsel %vm4985, %v5353, %v5352
      %v5355 = vsel %vm4988, %v4635, %v5354
      %v5356 = vrot.slane %v4637, 7
      %v5357 = vsel %vm4991, %v5356, %v5355
      %v5358 = vrot.slane %v4639, 6
      %v5359 = vsel %vm4994, %v5358, %v5357
      %v5360 = vrot.slane %v4641, 5
      %v5361 = vsel %vm4997, %v5360, %v5359
      %v5362 = vrot.slane %v4643, 4
      %v5363 = vsel %vm5000, %v5362, %v5361
      %v5364 = vrot.slane %v4645, 3
      %v5365 = vrot.slane %v4647, 2
      %v5366 = vsel %vm4982, %v5365, %v5364
      %v5367 = vrot.slane %v4649, 1
      %v5368 = vsel %vm4985, %v5367, %v5366
      %v5369 = vsel %vm4988, %v4651, %v5368
      %v5370 = vrot.slane %v4653, 7
      %v5371 = vsel %vm4991, %v5370, %v5369
      %v5372 = vrot.slane %v4655, 6
      %v5373 = vsel %vm4994, %v5372, %v5371
      %v5374 = vrot.slane %v4657, 5
      %v5375 = vsel %vm4997, %v5374, %v5373
      %v5376 = vrot.slane %v4659, 4
      %v5377 = vsel %vm5000, %v5376, %v5375
      %5378 = vrot.lane.b32.xlu0 %v5363, 32
      %v5379 = vpop.permute.xlu0 %5378
      %5380 = vrot.lane.b32.xlu0 %v5377, 32
      %v5381 = vpop.permute.xlu0 %5380
      %v5384 = vrot.slane %v4629, 4
      %v5385 = vrot.slane %v4631, 3
      %v5386 = vsel %vm4982, %v5385, %v5384
      %v5387 = vrot.slane %v4633, 2
      %v5388 = vsel %vm4985, %v5387, %v5386
      %v5389 = vrot.slane %v4635, 1
      %v5390 = vsel %vm4988, %v5389, %v5388
      %v5391 = vsel %vm4991, %v4637, %v5390
      %v5392 = vrot.slane %v4639, 7
      %v5393 = vsel %vm4994, %v5392, %v5391
      %v5394 = vrot.slane %v4641, 6
      %v5395 = vsel %vm4997, %v5394, %v5393
      %v5396 = vrot.slane %v4643, 5
      %v5397 = vsel %vm5000, %v5396, %v5395
      %v5398 = vrot.slane %v4645, 4
      %v5399 = vrot.slane %v4647, 3
      %v5400 = vsel %vm4982, %v5399, %v5398
      %v5401 = vrot.slane %v4649, 2
      %v5402 = vsel %vm4985, %v5401, %v5400
      %v5403 = vrot.slane %v4651, 1
      %v5404 = vsel %vm4988, %v5403, %v5402
      %v5405 = vsel %vm4991, %v4653, %v5404
      %v5406 = vrot.slane %v4655, 7
      %v5407 = vsel %vm4994, %v5406, %v5405
      %v5408 = vrot.slane %v4657, 6
      %v5409 = vsel %vm4997, %v5408, %v5407
      %v5410 = vrot.slane %v4659, 5
      %v5411 = vsel %vm5000, %v5410, %v5409
      %5412 = vrot.lane.b32.xlu0 %v5397, 64
      %v5413 = vpop.permute.xlu0 %5412
      %5414 = vrot.lane.b32.xlu0 %v5411, 64
      %v5415 = vpop.permute.xlu0 %5414
      %v5418 = vrot.slane %v4629, 5
      %v5419 = vrot.slane %v4631, 4
      %v5420 = vsel %vm4982, %v5419, %v5418
      %v5421 = vrot.slane %v4633, 3
      %v5422 = vsel %vm4985, %v5421, %v5420
      %v5423 = vrot.slane %v4635, 2
      %v5424 = vsel %vm4988, %v5423, %v5422
      %v5425 = vrot.slane %v4637, 1
      %v5426 = vsel %vm4991, %v5425, %v5424
      %v5427 = vsel %vm4994, %v4639, %v5426
      %v5428 = vrot.slane %v4641, 7
      %v5429 = vsel %vm4997, %v5428, %v5427
      %v5430 = vrot.slane %v4643, 6
      %v5431 = vsel %vm5000, %v5430, %v5429
      %v5432 = vrot.slane %v4645, 5
      %v5433 = vrot.slane %v4647, 4
      %v5434 = vsel %vm4982, %v5433, %v5432
      %v5435 = vrot.slane %v4649, 3
      %v5436 = vsel %vm4985, %v5435, %v5434
      %v5437 = vrot.slane %v4651, 2
      %v5438 = vsel %vm4988, %v5437, %v5436
      %v5439 = vrot.slane %v4653, 1
      %v5440 = vsel %vm4991, %v5439, %v5438
      %v5441 = vsel %vm4994, %v4655, %v5440
      %v5442 = vrot.slane %v4657, 7
      %v5443 = vsel %vm4997, %v5442, %v5441
      %v5444 = vrot.slane %v4659, 6
      %v5445 = vsel %vm5000, %v5444, %v5443
      %5446 = vrot.lane.b32.xlu0 %v5431, 96
      %v5447 = vpop.permute.xlu0 %5446
      %5448 = vrot.lane.b32.xlu0 %v5445, 96
      %v5449 = vpop.permute.xlu0 %5448
      %v5452 = vrot.slane %v4629, 6
      %v5453 = vrot.slane %v4631, 5
      %v5454 = vsel %vm4982, %v5453, %v5452
      %v5455 = vrot.slane %v4633, 4
      %v5456 = vsel %vm4985, %v5455, %v5454
      %v5457 = vrot.slane %v4635, 3
      %v5458 = vsel %vm4988, %v5457, %v5456
      %v5459 = vrot.slane %v4637, 2
      %v5460 = vsel %vm4991, %v5459, %v5458
      %v5461 = vrot.slane %v4639, 1
      %v5462 = vsel %vm4994, %v5461, %v5460
      %v5463 = vsel %vm4997, %v4641, %v5462
      %v5464 = vrot.slane %v4643, 7
      %v5465 = vsel %vm5000, %v5464, %v5463
      %v5466 = vrot.slane %v4645, 6
      %v5467 = vrot.slane %v4647, 5
      %v5468 = vsel %vm4982, %v5467, %v5466
      %v5469 = vrot.slane %v4649, 4
      %v5470 = vsel %vm4985, %v5469, %v5468
      %v5471 = vrot.slane %v4651, 3
      %v5472 = vsel %vm4988, %v5471, %v5470
      %v5473 = vrot.slane %v4653, 2
      %v5474 = vsel %vm4991, %v5473, %v5472
      %v5475 = vrot.slane %v4655, 1
      %v5476 = vsel %vm4994, %v5475, %v5474
      %v5477 = vsel %vm4997, %v4657, %v5476
      %v5478 = vrot.slane %v4659, 7
      %v5479 = vsel %vm5000, %v5478, %v5477
      %v5482 = vrot.slane %v4629, 7
      %v5483 = vrot.slane %v4631, 6
      %v5484 = vsel %vm4982, %v5483, %v5482
      %v5485 = vrot.slane %v4633, 5
      %v5486 = vsel %vm4985, %v5485, %v5484
      %v5487 = vrot.slane %v4635, 4
      %v5488 = vsel %vm4988, %v5487, %v5486
      %v5489 = vrot.slane %v4637, 3
      %v5490 = vsel %vm4991, %v5489, %v5488
      %v5491 = vrot.slane %v4639, 2
      %v5492 = vsel %vm4994, %v5491, %v5490
      %v5493 = vrot.slane %v4641, 1
      %v5494 = vsel %vm4997, %v5493, %v5492
      %v5495 = vsel %vm5000, %v4643, %v5494
      %v5496 = vrot.slane %v4645, 7
      %v5497 = vrot.slane %v4647, 6
      %v5498 = vsel %vm4982, %v5497, %v5496
      %v5499 = vrot.slane %v4649, 5
      %v5500 = vsel %vm4985, %v5499, %v5498
      %v5501 = vrot.slane %v4651, 4
      %v5502 = vsel %vm4988, %v5501, %v5500
      %v5503 = vrot.slane %v4653, 3
      %v5504 = vsel %vm4991, %v5503, %v5502
      %v5505 = vrot.slane %v4655, 2
      %v5506 = vsel %vm4994, %v5505, %v5504
      %v5507 = vrot.slane %v4657, 1
      %v5508 = vsel %vm4997, %v5507, %v5506
      %v5509 = vsel %vm5000, %v4659, %v5508
      %5510 = vrot.lane.b32.xlu0 %v5495, 32
      %v5511 = vpop.permute.xlu0 %5510
      %5512 = vrot.lane.b32.xlu0 %v5509, 32
      %v5513 = vpop.permute.xlu0 %5512
      %v5516 = vsel %vm1141, %v5017, %v5051
      %v5517 = vsel %vm1141, %v5019, %v5053
      %vm5518 = vcmask 523264
      %v5519 = vsel %vm5518, %v5516, %v5069
      %v5520 = vsel %vm5518, %v5517, %v5083
      %vm5521 = vcmask 785408
      %v5522 = vsel %vm5521, %v5519, %v5115
      %v5523 = vsel %vm5521, %v5520, %v5117
      %v5524 = vsel %vm1141, %v5149, %v5183
      %v5525 = vsel %vm1141, %v5151, %v5185
      %v5526 = vsel %vm5518, %v5524, %v5201
      %v5527 = vsel %vm5518, %v5525, %v5215
      %v5528 = vsel %vm5521, %v5526, %v5247
      %v5529 = vsel %vm5521, %v5527, %v5249
      %v5530 = vsel %vm1141, %v5281, %v5315
      %v5531 = vsel %vm1141, %v5283, %v5317
      %v5532 = vsel %vm5518, %v5530, %v5333
      %v5533 = vsel %vm5518, %v5531, %v5347
      %v5534 = vsel %vm5521, %v5532, %v5379
      %v5535 = vsel %vm5521, %v5533, %v5381
      %v5536 = vsel %vm1141, %v5413, %v5447
      %v5537 = vsel %vm1141, %v5415, %v5449
      %v5538 = vsel %vm5518, %v5536, %v5465
      %v5539 = vsel %vm5518, %v5537, %v5479
      %v5540 = vsel %vm5521, %v5538, %v5511
      %v5541 = vsel %vm5521, %v5539, %v5513
      %5542 = vst [vmem:[%s327] sm:$0xff] %v5522
      %5543 = vst [vmem:[%s327 + $0x8] sm:$0xff] %v5528
      %5544 = vst [vmem:[%s327 + $0x10] sm:$0xff] %v5534
      %5545 = vst [vmem:[%s327 + $0x18] sm:$0xff] %v5540
      %5546 = vst [vmem:[%s327 + $0x20] sm:$0xff] %v5523
      %5547 = vst [vmem:[%s327 + $0x28] sm:$0xff] %v5529
      %5548 = vst [vmem:[%s327 + $0x30] sm:$0xff] %v5535
      %5549 = vst [vmem:[%s327 + $0x38] sm:$0xff] %v5541
      %p5550 = scmp.lt.s32.totalorder %s22, 7
      %s5551 = scalar_select %p5550, %s22, 7
      %p5552 = scmp.lt.s32.totalorder %s21, 1
      %s5553 = scalar_select %p5552, %s21, 1
      %s5554 = smul.addr %s5553, 8
      %s5555 = smul.addr %s5551, 16
      %s5556 = sadd.s32 %s5554, %s5555
      %s5557 = smul.addr %s5556, 8
      %s5558 = scalar_lea.vmem %s6, %s5557
      // Predicated region
      $region49: #{conv_lstm_forward.1} parent=43 // pred_check
        %p5559 = pneg %p192
      $region50: #{conv_lstm_forward.1} parent=43 // pred_check_branch
        %5561 = sbr.rel (%p5559) target = $region52
      $region51: #{conv_lstm_forward.1} parent=43 // pred_region
        _
      $region52: #{conv_lstm_forward.1} parent=43 // pred_fallthru
        _
    $region44: #{conv_lstm_forward.1} parent=5 // pred_fallthru
      _
    %p5562 = scmp.le.s32.totalorder 2, %s12
    // Predicated region
    $region53: #{conv_lstm_forward.1} parent=5 // pred_check
      %p5563 = pneg %p5562
    $region54: #{conv_lstm_forward.1} parent=5 // pred_check_branch
      %5565 = sbr.rel (%p5563) target = $region56
    $region55: #{conv_lstm_forward.1} parent=5 // pred_region
      %s5566 = ssub.s32 %s12, 2
      // Predicated region
      $region57: #{conv_lstm_forward.1} parent=55 // pred_check
        %p5567 = pneg %p198
      $region58: #{conv_lstm_forward.1} parent=55 // pred_check_branch
        %5569 = sbr.rel (%p5567) target = $region60
      $region59: #{conv_lstm_forward.1} parent=55 // pred_region
        %p5570 = scmp.lt.s32.totalorder %s24, 7
        %s5571 = scalar_select %p5570, %s24, 7
        %p5572 = scmp.lt.s32.totalorder %s23, 1
        %s5573 = scalar_select %p5572, %s23, 1
        %s5574 = smul.addr %s5573, 8
        %s5575 = smul.addr %s5571, 16
        %s5576 = sadd.s32 %s5574, %s5575
        %s5577 = smul.addr %s5576, 8
        %s5578 = scalar_lea.vmem %s6, %s5577
      $region60: #{conv_lstm_forward.1} parent=55 // pred_fallthru
        _
    $region56: #{conv_lstm_forward.1} parent=5 // pred_fallthru
      _
  $region6: #{conv_lstm_forward.1} parent=0 // loop_footer
    %s16 = sadd.s32 1, %s12
  $region7: #{conv_lstm_forward.1} parent=0 // loop_footer_branch
    %11 = sbr.rel target = $region3
  $region8: #{conv_lstm_forward.1} parent=0 // loop_exit
    _

</llo_original>
